<compile_context>
chip_gen: v5e
topology: v5e:2x2
jax: 0.10.0
libtpu: 0.0.40
codegen_flags: <defaults>
</compile_context>

<pallas_src>
import jax
import jax.numpy as jnp
from jax.experimental import pallas as pl
from jax.experimental.pallas import tpu as pltpu

# Layer widths: input -> 32 -> 64 -> 128 -> 256 -> 128 -> 64 -> 32 -> 1
LAYER_SIZES = [32, 64, 128, 256, 128, 64, 32, 1]
TILE_B = 512          # batch tile (multiple of 8; fills MXU M, amortizes overhead)
LANE = 128            # lane width for padding


def _round_up(n, m):
    return ((n + m - 1) // m) * m


def mlp_kernel(x_ref, w1_ref, wmid_ref, w4_ref, w5_ref, w8_ref,
               b128_ref, b4_ref, b8_ref, o_ref):
    """One batch tile of the 8-layer MLP.

    x_ref   : [TILE_B, feat]   f32   (real feature width, no padding)
    w1_ref  : [feat, 128]      bf16  fc1 weight (out padded 32->128)
    wmid_ref: [4, 128, 128]    bf16  fc2, fc3, fc6, fc7 weights (padded)
    w4_ref  : [128, 256]       bf16  fc4 weight
    w5_ref  : [256, 128]       bf16  fc5 weight (out padded)
    w8_ref  : [1, 128]         f32   fc8 weight column, transposed + padded
    b128_ref: [6, 1, 128]      f32   biases of fc1, fc2, fc3, fc5, fc6, fc7
    b4_ref  : [1, 256]         f32   fc4 bias
    b8_ref  : [1, 1]           f32   fc8 bias
    o_ref   : [TILE_B, 1]      f32
    """
    f32 = jnp.float32
    bf16 = jnp.bfloat16

    h = x_ref[...]                                                    # f32

    # fc1: (feat -> 128-padded)
    h = jnp.dot(h.astype(bf16), w1_ref[...],
                preferred_element_type=f32) + b128_ref[0]
    h = jnp.maximum(h, 0.0)
    # fc2
    h = jnp.dot(h.astype(bf16), wmid_ref[0],
                preferred_element_type=f32) + b128_ref[1]
    h = jnp.maximum(h, 0.0)
    # fc3
    h = jnp.dot(h.astype(bf16), wmid_ref[1],
                preferred_element_type=f32) + b128_ref[2]
    h = jnp.maximum(h, 0.0)
    # fc4: 128 -> 256
    h = jnp.dot(h.astype(bf16), w4_ref[...],
                preferred_element_type=f32) + b4_ref[...]
    h = jnp.maximum(h, 0.0)
    # fc5: 256 -> 128
    h = jnp.dot(h.astype(bf16), w5_ref[...],
                preferred_element_type=f32) + b128_ref[3]
    h = jnp.maximum(h, 0.0)
    # fc6
    h = jnp.dot(h.astype(bf16), wmid_ref[2],
                preferred_element_type=f32) + b128_ref[4]
    h = jnp.maximum(h, 0.0)
    # fc7
    h = jnp.dot(h.astype(bf16), wmid_ref[3],
                preferred_element_type=f32) + b128_ref[5]
    h = jnp.maximum(h, 0.0)
    # fc8 (real width 1): VPU multiply + cross-lane reduce in f32.
    y = jnp.sum(h * w8_ref[...], axis=-1, keepdims=True) + b8_ref[...]
    o_ref[...] = y                                                    # (TILE_B, 1)


def init_params(key, input_size):
    """Deterministic init mirroring nn.Linear. Weights [in, out]; biases [out]."""
    params = []
    fan_in = input_size
    for fan_out in LAYER_SIZES:
        kw, kb, key = jax.random.split(key, 3)
        scale = 1.0 / jnp.sqrt(jnp.float32(fan_in))
        w = jax.random.uniform(kw, (fan_in, fan_out), jnp.float32,
                               minval=-scale, maxval=scale)
        b = jax.random.uniform(kb, (fan_out,), jnp.float32,
                               minval=-scale, maxval=scale)
        params.append((w, b))
        fan_in = fan_out
    return params


def pack_params(params):
    """Tightly pack layers into per-shape slabs (bf16 weights, f32 biases)."""
    (w1, b1), (w2, b2), (w3, b3), (w4, b4), \
        (w5, b5), (w6, b6), (w7, b7), (w8, b8) = params
    feat = w1.shape[0]

    def pad_w(w, rows, cols):
        out = jnp.zeros((rows, cols), jnp.bfloat16)
        return out.at[:w.shape[0], :w.shape[1]].set(w.astype(jnp.bfloat16))

    def pad_b(b, cols):
        return jnp.zeros((1, cols), jnp.float32).at[0, :b.shape[0]].set(b)

    packed = dict(
        w1=pad_w(w1, feat, LANE),                                   # (feat, 128)
        wmid=jnp.stack([pad_w(w2, LANE, LANE), pad_w(w3, LANE, LANE),
                        pad_w(w6, LANE, LANE), pad_w(w7, LANE, LANE)]),  # (4,128,128)
        w4=pad_w(w4, LANE, 2 * LANE),                               # (128, 256)
        w5=pad_w(w5, 2 * LANE, LANE),                               # (256, 128)
        # fc8 weight column, transposed to a lane row, kept in f32.
        w8=jnp.zeros((1, LANE), jnp.float32).at[0, :w8.shape[0]].set(w8[:, 0]),
        b128=jnp.stack([pad_b(b1, LANE), pad_b(b2, LANE), pad_b(b3, LANE),
                        pad_b(b5, LANE), pad_b(b6, LANE), pad_b(b7, LANE)]),  # (6,1,128)
        b4=pad_b(b4, 2 * LANE),                                     # (1, 256)
        b8=jnp.reshape(b8, (1, 1)).astype(jnp.float32),             # (1, 1)
    )
    return packed


@jax.jit
def mlp_forward(x, packed):
    batch, feat = x.shape
    pb = _round_up(batch, TILE_B)
    # Pad batch rows only (features stay at real width); padded rows are
    # computed but sliced away below.
    x_p = x if pb == batch else jnp.zeros((pb, feat), x.dtype).at[:batch].set(x)

    out = pl.pallas_call(
        mlp_kernel,
        out_shape=jax.ShapeDtypeStruct((pb, 1), jnp.float32),
        grid=(pb // TILE_B,),
        in_specs=[
            pl.BlockSpec((TILE_B, feat), lambda i: (i, 0)),
            # Parameters: same block every step -> VMEM-resident.
            pl.BlockSpec((feat, LANE), lambda i: (0, 0)),
            pl.BlockSpec((4, LANE, LANE), lambda i: (0, 0, 0)),
            pl.BlockSpec((LANE, 2 * LANE), lambda i: (0, 0)),
            pl.BlockSpec((2 * LANE, LANE), lambda i: (0, 0)),
            pl.BlockSpec((1, LANE), lambda i: (0, 0)),
            pl.BlockSpec((6, 1, LANE), lambda i: (0, 0, 0)),
            pl.BlockSpec((1, 2 * LANE), lambda i: (0, 0)),
            pl.BlockSpec((1, 1), lambda i: (0, 0)),
        ],
        out_specs=pl.BlockSpec((TILE_B, 1), lambda i: (i, 0)),
        compiler_params=pltpu.CompilerParams(
            dimension_semantics=("parallel",)),
    )(x_p, packed["w1"], packed["wmid"], packed["w4"], packed["w5"],
      packed["w8"], packed["b128"], packed["b4"], packed["b8"])

    return out[:batch]


def mlp_reference(x, params):
    h = x
    for i, (w, b) in enumerate(params):
        h = h @ w + b
        if i < len(params) - 1:
            h = jnp.maximum(h, 0.0)
    return h


if __name__ == "__main__":
    key = jax.random.PRNGKey(0)
    kx, kp = jax.random.split(key)

    batch = 1000         # pads to 1024 -> 2 grid steps (even, feeds both v7x TCs)
    input_size = 16      # X_train.shape[1] stand-in

    x = jax.random.normal(kx, (batch, input_size), jnp.float32)
    params = init_params(kp, input_size)
    packed = pack_params(params)

    out = mlp_forward(x, packed)
    out = jax.block_until_ready(out)

    ref = mlp_reference(x, params)   # pure-f32 reference (PyTorch semantics)
    assert out.shape == (batch, 1), out.shape
    max_diff = float(jnp.max(jnp.abs(out - ref)))
    # bf16 MXU operands with f32 accumulation -> loosened tolerance.
    assert jnp.allclose(out, ref, atol=2e-2, rtol=2e-2), (
        f"max abs diff {max_diff}")

    print("KERNEL_OK")
</pallas_src>

<mosaic_0001>
module attributes {stable_mosaic.version = 11 : i64} {
  func.func @mlp_kernel(%arg0: i32, %arg1: memref<512x16xf32, #tpu.memory_space<vmem>>, %arg2: memref<16x128xbf16, #tpu.memory_space<vmem>>, %arg3: memref<4x128x128xbf16, #tpu.memory_space<vmem>>, %arg4: memref<128x256xbf16, #tpu.memory_space<vmem>>, %arg5: memref<256x128xbf16, #tpu.memory_space<vmem>>, %arg6: memref<1x128xf32, #tpu.memory_space<vmem>>, %arg7: memref<6x1x128xf32, #tpu.memory_space<vmem>>, %arg8: memref<1x256xf32, #tpu.memory_space<vmem>>, %arg9: memref<1x1xf32, #tpu.memory_space<vmem>>, %arg10: memref<512x1xf32, #tpu.memory_space<vmem>>) attributes {dimension_semantics = [#tpu.dimension_semantics<parallel>], iteration_bounds = array<i64: 2>, scalar_prefetch = 0 : i64, scratch_operands = 0 : i64, tpu.core_type = #tpu.core_type<tc>, window_params = [{transform_indices = @transform_0, window_bounds = array<i64: 512, 16>}, {pipeline_mode = #tpu.pipeline_mode<synchronous>, transform_indices = @transform_1, window_bounds = array<i64: 16, 128>}, {pipeline_mode = #tpu.pipeline_mode<synchronous>, transform_indices = @transform_2, window_bounds = array<i64: 4, 128, 128>}, {pipeline_mode = #tpu.pipeline_mode<synchronous>, transform_indices = @transform_3, window_bounds = array<i64: 128, 256>}, {pipeline_mode = #tpu.pipeline_mode<synchronous>, transform_indices = @transform_4, window_bounds = array<i64: 256, 128>}, {pipeline_mode = #tpu.pipeline_mode<synchronous>, transform_indices = @transform_5, window_bounds = array<i64: 1, 128>}, {pipeline_mode = #tpu.pipeline_mode<synchronous>, transform_indices = @transform_6, window_bounds = array<i64: 6, 1, 128>}, {pipeline_mode = #tpu.pipeline_mode<synchronous>, transform_indices = @transform_7, window_bounds = array<i64: 1, 256>}, {pipeline_mode = #tpu.pipeline_mode<synchronous>, transform_indices = @transform_8, window_bounds = array<i64: 1, 1>}, {transform_indices = @transform_9, window_bounds = array<i64: 512, 1>}]} {
    %c0 = arith.constant 0 : index
    %c0_0 = arith.constant 0 : index
    %0 = vector.load %arg1[%c0, %c0_0] : memref<512x16xf32, #tpu.memory_space<vmem>>, vector<512x16xf32>
    %1 = arith.truncf %0 : vector<512x16xf32> to vector<512x16xbf16>
    %c0_1 = arith.constant 0 : index
    %c0_2 = arith.constant 0 : index
    %2 = vector.load %arg2[%c0_1, %c0_2] : memref<16x128xbf16, #tpu.memory_space<vmem>>, vector<16x128xbf16>
    %cst = arith.constant dense<0.000000e+00> : vector<512x128xf32>
    %3 = tpu.matmul %1, %2, %cst {dimension_numbers = #tpu.dot_dimension_numbers<[1], [0], [0], [1], [0, 0, 1, 1], [], []>} : vector<512x16xbf16>, vector<16x128xbf16>, vector<512x128xf32> -> vector<512x128xf32>
    %c0_3 = arith.constant 0 : index
    %c0_4 = arith.constant 0 : index
    %c0_5 = arith.constant 0 : index
    %4 = vector.load %arg7[%c0_3, %c0_4, %c0_5] : memref<6x1x128xf32, #tpu.memory_space<vmem>>, vector<1x1x128xf32>
    %5 = vector.shape_cast %4 : vector<1x1x128xf32> to vector<1x128xf32>
    %6 = vector.broadcast %5 : vector<1x128xf32> to vector<512x128xf32>
    %7 = arith.addf %3, %6 : vector<512x128xf32>
    %cst_6 = arith.constant 0.000000e+00 : f32
    %8 = vector.broadcast %cst_6 : f32 to vector<512x128xf32>
    %9 = arith.maximumf %7, %8 : vector<512x128xf32>
    %10 = arith.truncf %9 : vector<512x128xf32> to vector<512x128xbf16>
    %c0_7 = arith.constant 0 : index
    %c0_8 = arith.constant 0 : index
    %c0_9 = arith.constant 0 : index
    %11 = vector.load %arg3[%c0_7, %c0_8, %c0_9] : memref<4x128x128xbf16, #tpu.memory_space<vmem>>, vector<1x128x128xbf16>
    %12 = vector.shape_cast %11 : vector<1x128x128xbf16> to vector<128x128xbf16>
    %cst_10 = arith.constant dense<0.000000e+00> : vector<512x128xf32>
    %13 = tpu.matmul %10, %12, %cst_10 {dimension_numbers = #tpu.dot_dimension_numbers<[1], [0], [0], [1], [0, 0, 1, 1], [], []>} : vector<512x128xbf16>, vector<128x128xbf16>, vector<512x128xf32> -> vector<512x128xf32>
    %c1 = arith.constant 1 : index
    %c0_11 = arith.constant 0 : index
    %c0_12 = arith.constant 0 : index
    %14 = vector.load %arg7[%c1, %c0_11, %c0_12] : memref<6x1x128xf32, #tpu.memory_space<vmem>>, vector<1x1x128xf32>
    %15 = vector.shape_cast %14 : vector<1x1x128xf32> to vector<1x128xf32>
    %16 = vector.broadcast %15 : vector<1x128xf32> to vector<512x128xf32>
    %17 = arith.addf %13, %16 : vector<512x128xf32>
    %cst_13 = arith.constant 0.000000e+00 : f32
    %18 = vector.broadcast %cst_13 : f32 to vector<512x128xf32>
    %19 = arith.maximumf %17, %18 : vector<512x128xf32>
    %20 = arith.truncf %19 : vector<512x128xf32> to vector<512x128xbf16>
    %c1_14 = arith.constant 1 : index
    %c0_15 = arith.constant 0 : index
    %c0_16 = arith.constant 0 : index
    %21 = vector.load %arg3[%c1_14, %c0_15, %c0_16] : memref<4x128x128xbf16, #tpu.memory_space<vmem>>, vector<1x128x128xbf16>
    %22 = vector.shape_cast %21 : vector<1x128x128xbf16> to vector<128x128xbf16>
    %cst_17 = arith.constant dense<0.000000e+00> : vector<512x128xf32>
    %23 = tpu.matmul %20, %22, %cst_17 {dimension_numbers = #tpu.dot_dimension_numbers<[1], [0], [0], [1], [0, 0, 1, 1], [], []>} : vector<512x128xbf16>, vector<128x128xbf16>, vector<512x128xf32> -> vector<512x128xf32>
    %c2 = arith.constant 2 : index
    %c0_18 = arith.constant 0 : index
    %c0_19 = arith.constant 0 : index
    %24 = vector.load %arg7[%c2, %c0_18, %c0_19] : memref<6x1x128xf32, #tpu.memory_space<vmem>>, vector<1x1x128xf32>
    %25 = vector.shape_cast %24 : vector<1x1x128xf32> to vector<1x128xf32>
    %26 = vector.broadcast %25 : vector<1x128xf32> to vector<512x128xf32>
    %27 = arith.addf %23, %26 : vector<512x128xf32>
    %cst_20 = arith.constant 0.000000e+00 : f32
    %28 = vector.broadcast %cst_20 : f32 to vector<512x128xf32>
    %29 = arith.maximumf %27, %28 : vector<512x128xf32>
    %30 = arith.truncf %29 : vector<512x128xf32> to vector<512x128xbf16>
    %c0_21 = arith.constant 0 : index
    %c0_22 = arith.constant 0 : index
    %31 = vector.load %arg4[%c0_21, %c0_22] : memref<128x256xbf16, #tpu.memory_space<vmem>>, vector<128x256xbf16>
    %cst_23 = arith.constant dense<0.000000e+00> : vector<512x256xf32>
    %32 = tpu.matmul %30, %31, %cst_23 {dimension_numbers = #tpu.dot_dimension_numbers<[1], [0], [0], [1], [0, 0, 1, 1], [], []>} : vector<512x128xbf16>, vector<128x256xbf16>, vector<512x256xf32> -> vector<512x256xf32>
    %c0_24 = arith.constant 0 : index
    %c0_25 = arith.constant 0 : index
    %33 = vector.load %arg8[%c0_24, %c0_25] : memref<1x256xf32, #tpu.memory_space<vmem>>, vector<1x256xf32>
    %34 = vector.broadcast %33 : vector<1x256xf32> to vector<512x256xf32>
    %35 = arith.addf %32, %34 : vector<512x256xf32>
    %cst_26 = arith.constant 0.000000e+00 : f32
    %36 = vector.broadcast %cst_26 : f32 to vector<512x256xf32>
    %37 = arith.maximumf %35, %36 : vector<512x256xf32>
    %38 = arith.truncf %37 : vector<512x256xf32> to vector<512x256xbf16>
    %c0_27 = arith.constant 0 : index
    %c0_28 = arith.constant 0 : index
    %39 = vector.load %arg5[%c0_27, %c0_28] : memref<256x128xbf16, #tpu.memory_space<vmem>>, vector<256x128xbf16>
    %cst_29 = arith.constant dense<0.000000e+00> : vector<512x128xf32>
    %40 = tpu.matmul %38, %39, %cst_29 {dimension_numbers = #tpu.dot_dimension_numbers<[1], [0], [0], [1], [0, 0, 1, 1], [], []>} : vector<512x256xbf16>, vector<256x128xbf16>, vector<512x128xf32> -> vector<512x128xf32>
    %c3 = arith.constant 3 : index
    %c0_30 = arith.constant 0 : index
    %c0_31 = arith.constant 0 : index
    %41 = vector.load %arg7[%c3, %c0_30, %c0_31] : memref<6x1x128xf32, #tpu.memory_space<vmem>>, vector<1x1x128xf32>
    %42 = vector.shape_cast %41 : vector<1x1x128xf32> to vector<1x128xf32>
    %43 = vector.broadcast %42 : vector<1x128xf32> to vector<512x128xf32>
    %44 = arith.addf %40, %43 : vector<512x128xf32>
    %cst_32 = arith.constant 0.000000e+00 : f32
    %45 = vector.broadcast %cst_32 : f32 to vector<512x128xf32>
    %46 = arith.maximumf %44, %45 : vector<512x128xf32>
    %47 = arith.truncf %46 : vector<512x128xf32> to vector<512x128xbf16>
    %c2_33 = arith.constant 2 : index
    %c0_34 = arith.constant 0 : index
    %c0_35 = arith.constant 0 : index
    %48 = vector.load %arg3[%c2_33, %c0_34, %c0_35] : memref<4x128x128xbf16, #tpu.memory_space<vmem>>, vector<1x128x128xbf16>
    %49 = vector.shape_cast %48 : vector<1x128x128xbf16> to vector<128x128xbf16>
    %cst_36 = arith.constant dense<0.000000e+00> : vector<512x128xf32>
    %50 = tpu.matmul %47, %49, %cst_36 {dimension_numbers = #tpu.dot_dimension_numbers<[1], [0], [0], [1], [0, 0, 1, 1], [], []>} : vector<512x128xbf16>, vector<128x128xbf16>, vector<512x128xf32> -> vector<512x128xf32>
    %c4 = arith.constant 4 : index
    %c0_37 = arith.constant 0 : index
    %c0_38 = arith.constant 0 : index
    %51 = vector.load %arg7[%c4, %c0_37, %c0_38] : memref<6x1x128xf32, #tpu.memory_space<vmem>>, vector<1x1x128xf32>
    %52 = vector.shape_cast %51 : vector<1x1x128xf32> to vector<1x128xf32>
    %53 = vector.broadcast %52 : vector<1x128xf32> to vector<512x128xf32>
    %54 = arith.addf %50, %53 : vector<512x128xf32>
    %cst_39 = arith.constant 0.000000e+00 : f32
    %55 = vector.broadcast %cst_39 : f32 to vector<512x128xf32>
    %56 = arith.maximumf %54, %55 : vector<512x128xf32>
    %57 = arith.truncf %56 : vector<512x128xf32> to vector<512x128xbf16>
    %c3_40 = arith.constant 3 : index
    %c0_41 = arith.constant 0 : index
    %c0_42 = arith.constant 0 : index
    %58 = vector.load %arg3[%c3_40, %c0_41, %c0_42] : memref<4x128x128xbf16, #tpu.memory_space<vmem>>, vector<1x128x128xbf16>
    %59 = vector.shape_cast %58 : vector<1x128x128xbf16> to vector<128x128xbf16>
    %cst_43 = arith.constant dense<0.000000e+00> : vector<512x128xf32>
    %60 = tpu.matmul %57, %59, %cst_43 {dimension_numbers = #tpu.dot_dimension_numbers<[1], [0], [0], [1], [0, 0, 1, 1], [], []>} : vector<512x128xbf16>, vector<128x128xbf16>, vector<512x128xf32> -> vector<512x128xf32>
    %c5 = arith.constant 5 : index
    %c0_44 = arith.constant 0 : index
    %c0_45 = arith.constant 0 : index
    %61 = vector.load %arg7[%c5, %c0_44, %c0_45] : memref<6x1x128xf32, #tpu.memory_space<vmem>>, vector<1x1x128xf32>
    %62 = vector.shape_cast %61 : vector<1x1x128xf32> to vector<1x128xf32>
    %63 = vector.broadcast %62 : vector<1x128xf32> to vector<512x128xf32>
    %64 = arith.addf %60, %63 : vector<512x128xf32>
    %cst_46 = arith.constant 0.000000e+00 : f32
    %65 = vector.broadcast %cst_46 : f32 to vector<512x128xf32>
    %66 = arith.maximumf %64, %65 : vector<512x128xf32>
    %c0_47 = arith.constant 0 : index
    %c0_48 = arith.constant 0 : index
    %67 = vector.load %arg6[%c0_47, %c0_48] : memref<1x128xf32, #tpu.memory_space<vmem>>, vector<1x128xf32>
    %68 = vector.broadcast %67 : vector<1x128xf32> to vector<512x128xf32>
    %69 = arith.mulf %66, %68 : vector<512x128xf32>
    %cst_49 = arith.constant dense<0.000000e+00> : vector<512xf32>
    %70 = vector.multi_reduction <add>, %69, %cst_49 [1] : vector<512x128xf32> to vector<512xf32>
    %71 = vector.shape_cast %70 : vector<512xf32> to vector<512x1xf32>
    %c0_50 = arith.constant 0 : index
    %c0_51 = arith.constant 0 : index
    %72 = vector.load %arg9[%c0_50, %c0_51] : memref<1x1xf32, #tpu.memory_space<vmem>>, vector<1x1xf32>
    %73 = vector.broadcast %72 : vector<1x1xf32> to vector<512x1xf32>
    %74 = arith.addf %71, %73 : vector<512x1xf32>
    %c0_52 = arith.constant 0 : index
    %c0_53 = arith.constant 0 : index
    %75 = vector.load %arg10[%c0_52, %c0_53] : memref<512x1xf32, #tpu.memory_space<vmem>>, vector<512x1xf32>
    tpu.vector_store %arg10[%c0_52, %c0_53], %74 {strides = array<i32>} : memref<512x1xf32, #tpu.memory_space<vmem>>, vector<512x1xf32>,
    return
  }
  func.func @transform_0(%arg0: i32) -> (i32, i32) {
    %c0_i32 = arith.constant 0 : i32
    %c0_i32_0 = arith.constant 0 : i32
    return %arg0, %c0_i32 : i32, i32
  }
  func.func @transform_1(%arg0: i32) -> (i32, i32) {
    %c0_i32 = arith.constant 0 : i32
    %c0_i32_0 = arith.constant 0 : i32
    %c0_i32_1 = arith.constant 0 : i32
    return %c0_i32, %c0_i32_0 : i32, i32
  }
  func.func @transform_2(%arg0: i32) -> (i32, i32, i32) {
    %c0_i32 = arith.constant 0 : i32
    %c0_i32_0 = arith.constant 0 : i32
    %c0_i32_1 = arith.constant 0 : i32
    %c0_i32_2 = arith.constant 0 : i32
    return %c0_i32, %c0_i32_0, %c0_i32_1 : i32, i32, i32
  }
  func.func @transform_3(%arg0: i32) -> (i32, i32) {
    %c0_i32 = arith.constant 0 : i32
    %c0_i32_0 = arith.constant 0 : i32
    %c0_i32_1 = arith.constant 0 : i32
    return %c0_i32, %c0_i32_0 : i32, i32
  }
  func.func @transform_4(%arg0: i32) -> (i32, i32) {
    %c0_i32 = arith.constant 0 : i32
    %c0_i32_0 = arith.constant 0 : i32
    %c0_i32_1 = arith.constant 0 : i32
    return %c0_i32, %c0_i32_0 : i32, i32
  }
  func.func @transform_5(%arg0: i32) -> (i32, i32) {
    %c0_i32 = arith.constant 0 : i32
    %c0_i32_0 = arith.constant 0 : i32
    %c0_i32_1 = arith.constant 0 : i32
    return %c0_i32, %c0_i32_0 : i32, i32
  }
  func.func @transform_6(%arg0: i32) -> (i32, i32, i32) {
    %c0_i32 = arith.constant 0 : i32
    %c0_i32_0 = arith.constant 0 : i32
    %c0_i32_1 = arith.constant 0 : i32
    %c0_i32_2 = arith.constant 0 : i32
    return %c0_i32, %c0_i32_0, %c0_i32_1 : i32, i32, i32
  }
  func.func @transform_7(%arg0: i32) -> (i32, i32) {
    %c0_i32 = arith.constant 0 : i32
    %c0_i32_0 = arith.constant 0 : i32
    %c0_i32_1 = arith.constant 0 : i32
    return %c0_i32, %c0_i32_0 : i32, i32
  }
  func.func @transform_8(%arg0: i32) -> (i32, i32) {
    %c0_i32 = arith.constant 0 : i32
    %c0_i32_0 = arith.constant 0 : i32
    %c0_i32_1 = arith.constant 0 : i32
    return %c0_i32, %c0_i32_0 : i32, i32
  }
  func.func @transform_9(%arg0: i32) -> (i32, i32) {
    %c0_i32 = arith.constant 0 : i32
    %c0_i32_0 = arith.constant 0 : i32
    return %arg0, %c0_i32 : i32, i32
  }
}

</mosaic_0001>

<llo_original>
// kernel: mlp_forward.1
$region0: #{mlp_forward.1}
  #allocation0 [shape = 'u32[]', space=smem, size = 0x4, offset = 0x4, fixed_abs, tag = 'smem constant byte address 0x4 - core index']
  #allocation1 [shape = 'u32[72,128]{1,0:T(1,128)}', space=vmem, size = 0x9000, scoped, tag = 'internal scratch']
  #allocation2 [shape = 'f32[1,1]{1,0:T(1,128)S(1)}', space=vmem, size = 0x200, scoped, tag = 'scoped memory for mlp_forward.1']
  %s0 = inlined_call_operand.vmem [shape: f32[1024,16], index: 0, kind: input, shape index: {}]
  %s1 = inlined_call_operand.vmem [shape: bf16[16,128], index: 1, kind: input, shape index: {}]
  %s2 = inlined_call_operand.vmem [shape: bf16[4,128,128], index: 2, kind: input, shape index: {}]
  %s3 = inlined_call_operand.vmem [shape: bf16[128,256], index: 3, kind: input, shape index: {}]
  %s4 = inlined_call_operand.vmem [shape: bf16[256,128], index: 4, kind: input, shape index: {}]
  %s5 = inlined_call_operand.vmem [shape: f32[1,128], index: 5, kind: input, shape index: {}]
  %s6 = inlined_call_operand.vmem [shape: f32[6,1,128], index: 6, kind: input, shape index: {}]
  %s7 = inlined_call_operand.vmem [shape: f32[1,256], index: 7, kind: input, shape index: {}]
  %s8 = inlined_call_operand.<no memory space> [shape: f32[1,1], index: 8, kind: input, shape index: {}]
  %s9 = inlined_call_operand.vmem [shape: f32[1024,1], index: 9, kind: output, shape index: {}]
  %s10 = sld [smem:[#allocation0]]
  $region69: #{mlp_forward.1} parent=0
    _
  %s12 = ssub.s32 1, %s10
  %s13 = scalar_select 0, %s12, %s10
  %v14 = vstv %s8
  %15 = vst [vmem:[#allocation2] sm:$0x1] %v14
  loop: start=0, step=1, limit=4
  $region2: #{mlp_forward.1} parent=0 // loop_pre_header
    _
  $region3: #{mlp_forward.1} parent=0 // loop_header
    %s17 = sphi 0, %s21
    %p18 = scmp.ge.s32.totalorder %s17, 4
    %s27 = sphi 0, %s29
    %s30 = sphi 0, %s27
    %s31 = sphi 0, %s30
    %s47 = sphi 0, %s31
    %s51 = sphi 0, %s51
    %s53 = sphi 0, %s51
    %s54 = sphi 0, %s53
    %s68 = sphi 0, %s54
    %s72 = sphi 0, %s72
    %s74 = sphi 0, %s72
    %s75 = sphi 0, %s74
    %s89 = sphi 0, %s75
    %s93 = sphi 0, %s93
    %s95 = sphi 0, %s93
    %s96 = sphi 0, %s95
    %s110 = sphi 0, %s96
    %s114 = sphi 0, %s114
    %s116 = sphi 0, %s114
    %s117 = sphi 0, %s116
    %s131 = sphi 0, %s117
    %s135 = sphi 0, %s135
    %s137 = sphi 0, %s135
    %s138 = sphi 0, %s137
    %s152 = sphi 0, %s138
    %s156 = sphi 0, %s156
    %s158 = sphi 0, %s156
    %s159 = sphi 0, %s158
    %s173 = sphi 0, %s159
    %s177 = sphi 0, %s177
    %s179 = sphi 0, %s177
    %s180 = sphi 0, %s179
    %s194 = sphi 0, %s180
    %s198 = sphi 0, %s198
    %s200 = sphi 0, %s198
    %s201 = sphi 0, %s200
    %s215 = sphi 0, %s201
    %s221 = sphi 0, %s223
    %s224 = sphi 0, %s221
    %s225 = sphi 0, %s224
    %s241 = sphi 0, %s225
  $region4: #{mlp_forward.1} parent=0 // loop_header_branch
    %20 = sbr.rel (%p18) target = $region8
  $region5: #{mlp_forward.1} parent=0 // loop_body
    %s22 = ssub.s32 %s17, 1
    %s23 = ssub.s32 %s17, 2
    %s24 = sadd.s32 %s17, 1
    %s25 = ssub.s32 %s17, %s24
    %p26 = scmp.eq.s32.totalorder %s25, 0
    %s28 = sadd.s32 %s27, 1
    %s29 = scalar_select %p26, %s27, %s28
    %p32 = pneg %p26
    %p33 = scmp.eq.s32.totalorder %s17, 1
    %p34 = por %p32, %p33
    %p35 = scmp.ne.s32.totalorder %s27, %s30
    %p36 = scmp.eq.s32.totalorder %s17, 0
    %p37 = por %p35, %p36
    %p38 = scmp.ne.s32.totalorder %s27, %s30
    %p39 = scmp.eq.s32.totalorder %s22, 1
    %p40 = por %p38, %p39
    %p41 = scmp.ne.s32.totalorder %s30, %s31
    %p42 = scmp.eq.s32.totalorder %s22, 0
    %p43 = por %p41, %p42
    %p44 = scmp.ne.s32.totalorder %s30, %s31
    %p45 = scmp.eq.s32.totalorder %s23, 1
    %p46 = por %p44, %p45
    %p48 = scmp.ne.s32.totalorder %s31, %s47
    %p49 = scmp.eq.s32.totalorder %s23, 0
    %p50 = por %p48, %p49
    %s52 = sadd.s32 %s51, 1
    %p55 = scmp.eq.s32.totalorder %s17, 1
    %p56 = scmp.ne.s32.totalorder %s51, %s53
    %p57 = scmp.eq.s32.totalorder %s17, 0
    %p58 = por %p56, %p57
    %p59 = scmp.ne.s32.totalorder %s51, %s53
    %p60 = scmp.eq.s32.totalorder %s22, 1
    %p61 = por %p59, %p60
    %p62 = scmp.ne.s32.totalorder %s53, %s54
    %p63 = scmp.eq.s32.totalorder %s22, 0
    %p64 = por %p62, %p63
    %p65 = scmp.ne.s32.totalorder %s53, %s54
    %p66 = scmp.eq.s32.totalorder %s23, 1
    %p67 = por %p65, %p66
    %p69 = scmp.ne.s32.totalorder %s54, %s68
    %p70 = scmp.eq.s32.totalorder %s23, 0
    %p71 = por %p69, %p70
    %s73 = sadd.s32 %s72, 1
    %p76 = scmp.eq.s32.totalorder %s17, 1
    %p77 = scmp.ne.s32.totalorder %s72, %s74
    %p78 = scmp.eq.s32.totalorder %s17, 0
    %p79 = por %p77, %p78
    %p80 = scmp.ne.s32.totalorder %s72, %s74
    %p81 = scmp.eq.s32.totalorder %s22, 1
    %p82 = por %p80, %p81
    %p83 = scmp.ne.s32.totalorder %s74, %s75
    %p84 = scmp.eq.s32.totalorder %s22, 0
    %p85 = por %p83, %p84
    %p86 = scmp.ne.s32.totalorder %s74, %s75
    %p87 = scmp.eq.s32.totalorder %s23, 1
    %p88 = por %p86, %p87
    %p90 = scmp.ne.s32.totalorder %s75, %s89
    %p91 = scmp.eq.s32.totalorder %s23, 0
    %p92 = por %p90, %p91
    %s94 = sadd.s32 %s93, 1
    %p97 = scmp.eq.s32.totalorder %s17, 1
    %p98 = scmp.ne.s32.totalorder %s93, %s95
    %p99 = scmp.eq.s32.totalorder %s17, 0
    %p100 = por %p98, %p99
    %p101 = scmp.ne.s32.totalorder %s93, %s95
    %p102 = scmp.eq.s32.totalorder %s22, 1
    %p103 = por %p101, %p102
    %p104 = scmp.ne.s32.totalorder %s95, %s96
    %p105 = scmp.eq.s32.totalorder %s22, 0
    %p106 = por %p104, %p105
    %p107 = scmp.ne.s32.totalorder %s95, %s96
    %p108 = scmp.eq.s32.totalorder %s23, 1
    %p109 = por %p107, %p108
    %p111 = scmp.ne.s32.totalorder %s96, %s110
    %p112 = scmp.eq.s32.totalorder %s23, 0
    %p113 = por %p111, %p112
    %s115 = sadd.s32 %s114, 1
    %p118 = scmp.eq.s32.totalorder %s17, 1
    %p119 = scmp.ne.s32.totalorder %s114, %s116
    %p120 = scmp.eq.s32.totalorder %s17, 0
    %p121 = por %p119, %p120
    %p122 = scmp.ne.s32.totalorder %s114, %s116
    %p123 = scmp.eq.s32.totalorder %s22, 1
    %p124 = por %p122, %p123
    %p125 = scmp.ne.s32.totalorder %s116, %s117
    %p126 = scmp.eq.s32.totalorder %s22, 0
    %p127 = por %p125, %p126
    %p128 = scmp.ne.s32.totalorder %s116, %s117
    %p129 = scmp.eq.s32.totalorder %s23, 1
    %p130 = por %p128, %p129
    %p132 = scmp.ne.s32.totalorder %s117, %s131
    %p133 = scmp.eq.s32.totalorder %s23, 0
    %p134 = por %p132, %p133
    %s136 = sadd.s32 %s135, 1
    %p139 = scmp.eq.s32.totalorder %s17, 1
    %p140 = scmp.ne.s32.totalorder %s135, %s137
    %p141 = scmp.eq.s32.totalorder %s17, 0
    %p142 = por %p140, %p141
    %p143 = scmp.ne.s32.totalorder %s135, %s137
    %p144 = scmp.eq.s32.totalorder %s22, 1
    %p145 = por %p143, %p144
    %p146 = scmp.ne.s32.totalorder %s137, %s138
    %p147 = scmp.eq.s32.totalorder %s22, 0
    %p148 = por %p146, %p147
    %p149 = scmp.ne.s32.totalorder %s137, %s138
    %p150 = scmp.eq.s32.totalorder %s23, 1
    %p151 = por %p149, %p150
    %p153 = scmp.ne.s32.totalorder %s138, %s152
    %p154 = scmp.eq.s32.totalorder %s23, 0
    %p155 = por %p153, %p154
    %s157 = sadd.s32 %s156, 1
    %p160 = scmp.eq.s32.totalorder %s17, 1
    %p161 = scmp.ne.s32.totalorder %s156, %s158
    %p162 = scmp.eq.s32.totalorder %s17, 0
    %p163 = por %p161, %p162
    %p164 = scmp.ne.s32.totalorder %s156, %s158
    %p165 = scmp.eq.s32.totalorder %s22, 1
    %p166 = por %p164, %p165
    %p167 = scmp.ne.s32.totalorder %s158, %s159
    %p168 = scmp.eq.s32.totalorder %s22, 0
    %p169 = por %p167, %p168
    %p170 = scmp.ne.s32.totalorder %s158, %s159
    %p171 = scmp.eq.s32.totalorder %s23, 1
    %p172 = por %p170, %p171
    %p174 = scmp.ne.s32.totalorder %s159, %s173
    %p175 = scmp.eq.s32.totalorder %s23, 0
    %p176 = por %p174, %p175
    %s178 = sadd.s32 %s177, 1
    %p181 = scmp.eq.s32.totalorder %s17, 1
    %p182 = scmp.ne.s32.totalorder %s177, %s179
    %p183 = scmp.eq.s32.totalorder %s17, 0
    %p184 = por %p182, %p183
    %p185 = scmp.ne.s32.totalorder %s177, %s179
    %p186 = scmp.eq.s32.totalorder %s22, 1
    %p187 = por %p185, %p186
    %p188 = scmp.ne.s32.totalorder %s179, %s180
    %p189 = scmp.eq.s32.totalorder %s22, 0
    %p190 = por %p188, %p189
    %p191 = scmp.ne.s32.totalorder %s179, %s180
    %p192 = scmp.eq.s32.totalorder %s23, 1
    %p193 = por %p191, %p192
    %p195 = scmp.ne.s32.totalorder %s180, %s194
    %p196 = scmp.eq.s32.totalorder %s23, 0
    %p197 = por %p195, %p196
    %s199 = sadd.s32 %s198, 1
    %p202 = scmp.eq.s32.totalorder %s17, 1
    %p203 = scmp.ne.s32.totalorder %s198, %s200
    %p204 = scmp.eq.s32.totalorder %s17, 0
    %p205 = por %p203, %p204
    %p206 = scmp.ne.s32.totalorder %s198, %s200
    %p207 = scmp.eq.s32.totalorder %s22, 1
    %p208 = por %p206, %p207
    %p209 = scmp.ne.s32.totalorder %s200, %s201
    %p210 = scmp.eq.s32.totalorder %s22, 0
    %p211 = por %p209, %p210
    %p212 = scmp.ne.s32.totalorder %s200, %s201
    %p213 = scmp.eq.s32.totalorder %s23, 1
    %p214 = por %p212, %p213
    %p216 = scmp.ne.s32.totalorder %s201, %s215
    %p217 = scmp.eq.s32.totalorder %s23, 0
    %p218 = por %p216, %p217
    %s219 = ssub.s32 %s17, %s24
    %p220 = scmp.eq.s32.totalorder %s219, 0
    %s222 = sadd.s32 %s221, 1
    %s223 = scalar_select %p220, %s221, %s222
    %p226 = pneg %p220
    %p227 = scmp.eq.s32.totalorder %s17, 1
    %p228 = por %p226, %p227
    %p229 = scmp.ne.s32.totalorder %s221, %s224
    %p230 = scmp.eq.s32.totalorder %s17, 0
    %p231 = por %p229, %p230
    %p232 = scmp.ne.s32.totalorder %s221, %s224
    %p233 = scmp.eq.s32.totalorder %s22, 1
    %p234 = por %p232, %p233
    %p235 = scmp.ne.s32.totalorder %s224, %s225
    %p236 = scmp.eq.s32.totalorder %s22, 0
    %p237 = por %p235, %p236
    %p238 = scmp.ne.s32.totalorder %s224, %s225
    %p239 = scmp.eq.s32.totalorder %s23, 1
    %p240 = por %p238, %p239
    %p242 = scmp.ne.s32.totalorder %s225, %s241
    %p243 = scmp.eq.s32.totalorder %s23, 0
    %p244 = por %p242, %p243
    %p245 = scmp.le.s32.totalorder 1, %s17
    %p246 = scmp.lt.s32.totalorder %s17, 3
    %p247 = pnand %p245, %p246
    %p248 = pneg %p247
    // Predicated region
    $region9: #{mlp_forward.1} parent=5 // pred_check
      _
    $region10: #{mlp_forward.1} parent=5 // pred_check_branch
      %250 = sbr.rel (%p247) target = $region12
    $region11: #{mlp_forward.1} parent=5 // pred_region
      %s251 = ssub.s32 %s17, 1
      // Predicated region
      $region13: #{mlp_forward.1} parent=11 // pred_check
        %p252 = pneg %p64
      $region14: #{mlp_forward.1} parent=11 // pred_check_branch
        %254 = sbr.rel (%p252) target = $region16
      $region15: #{mlp_forward.1} parent=11 // pred_region
        _
      $region16: #{mlp_forward.1} parent=11 // pred_fallthru
        _
      // Predicated region
      $region17: #{mlp_forward.1} parent=11 // pred_check
        %p255 = pneg %p85
      $region18: #{mlp_forward.1} parent=11 // pred_check_branch
        %257 = sbr.rel (%p255) target = $region20
      $region19: #{mlp_forward.1} parent=11 // pred_region
        _
      $region20: #{mlp_forward.1} parent=11 // pred_fallthru
        _
      // Predicated region
      $region21: #{mlp_forward.1} parent=11 // pred_check
        %p258 = pneg %p106
      $region22: #{mlp_forward.1} parent=11 // pred_check_branch
        %260 = sbr.rel (%p258) target = $region24
      $region23: #{mlp_forward.1} parent=11 // pred_region
        _
      $region24: #{mlp_forward.1} parent=11 // pred_fallthru
        _
      // Predicated region
      $region25: #{mlp_forward.1} parent=11 // pred_check
        %p261 = pneg %p127
      $region26: #{mlp_forward.1} parent=11 // pred_check_branch
        %263 = sbr.rel (%p261) target = $region28
      $region27: #{mlp_forward.1} parent=11 // pred_region
        _
      $region28: #{mlp_forward.1} parent=11 // pred_fallthru
        _
      // Predicated region
      $region29: #{mlp_forward.1} parent=11 // pred_check
        %p264 = pneg %p148
      $region30: #{mlp_forward.1} parent=11 // pred_check_branch
        %266 = sbr.rel (%p264) target = $region32
      $region31: #{mlp_forward.1} parent=11 // pred_region
        _
      $region32: #{mlp_forward.1} parent=11 // pred_fallthru
        _
      // Predicated region
      $region33: #{mlp_forward.1} parent=11 // pred_check
        %p267 = pneg %p169
      $region34: #{mlp_forward.1} parent=11 // pred_check_branch
        %269 = sbr.rel (%p267) target = $region36
      $region35: #{mlp_forward.1} parent=11 // pred_region
        _
      $region36: #{mlp_forward.1} parent=11 // pred_fallthru
        _
      // Predicated region
      $region37: #{mlp_forward.1} parent=11 // pred_check
        %p270 = pneg %p190
      $region38: #{mlp_forward.1} parent=11 // pred_check_branch
        %272 = sbr.rel (%p270) target = $region40
      $region39: #{mlp_forward.1} parent=11 // pred_region
        _
      $region40: #{mlp_forward.1} parent=11 // pred_fallthru
        _
      // Predicated region
      $region41: #{mlp_forward.1} parent=11 // pred_check
        %p273 = pneg %p211
      $region42: #{mlp_forward.1} parent=11 // pred_check_branch
        %275 = sbr.rel (%p273) target = $region44
      $region43: #{mlp_forward.1} parent=11 // pred_region
        _
      $region44: #{mlp_forward.1} parent=11 // pred_fallthru
        _
    $region12: #{mlp_forward.1} parent=5 // pred_fallthru
      _
    %p276 = scmp.lt.s32.totalorder %s17, 2
    // Predicated region
    $region45: #{mlp_forward.1} parent=5 // pred_check
      %p277 = pneg %p276
    $region46: #{mlp_forward.1} parent=5 // pred_check_branch
      %279 = sbr.rel (%p277) target = $region48
    $region47: #{mlp_forward.1} parent=5 // pred_region
      // Predicated region
      $region49: #{mlp_forward.1} parent=47 // pred_check
        %p280 = pneg %p37
      $region50: #{mlp_forward.1} parent=47 // pred_check_branch
        %282 = sbr.rel (%p280) target = $region52
      $region51: #{mlp_forward.1} parent=47 // pred_region
        %s283 = smul.u32 64, %s17
        %p284 = scmp.lt.s32.totalorder %s283, 127
        %s285 = scalar_select %p284, %s283, 127
        %s286 = smul.addr %s285, 8
        %s287 = scalar_lea.vmem %s0, %s286
        %s288 = smul.u32 64, %s17
      $region52: #{mlp_forward.1} parent=47 // pred_fallthru
        _
    $region48: #{mlp_forward.1} parent=5 // pred_fallthru
      _
    %p289 = scmp.le.s32.totalorder 1, %s17
    %p290 = scmp.lt.s32.totalorder %s17, 3
    %p291 = pnand %p289, %p290
    %p292 = pneg %p291
    // Predicated region
    $region53: #{mlp_forward.1} parent=5 // pred_check
      _
    $region54: #{mlp_forward.1} parent=5 // pred_check_branch
      %294 = sbr.rel (%p291) target = $region56
    $region55: #{mlp_forward.1} parent=5 // pred_region
      %s295 = ssub.s32 %s17, 1
      %s296 = smul.u32 64, %s22
      %p297 = scmp.lt.s32.totalorder %s296, 127
      %s298 = scalar_select %p297, %s296, 127
      %s299 = smul.addr %s298, 8
      %s300 = scalar_lea.vmem %s0, %s299
      %p301 = pneg %p43
      %p302 = pneg %p40
      %p303 = pneg %p64
      %p304 = pneg %p61
      %p305 = pneg %p85
      %p306 = pneg %p82
      %p307 = pneg %p106
      %p308 = pneg %p103
      %p309 = pneg %p127
      %p310 = pneg %p124
      %p311 = pneg %p148
      %p312 = pneg %p145
      %p313 = pneg %p169
      %p314 = pneg %p166
      %p315 = pneg %p190
      %p316 = pneg %p187
      %p317 = pneg %p211
      %p318 = pneg %p208
      %p319 = pneg %p237
      %p320 = pneg %p234
      %s321 = smul.u32 64, %s22
      %p322 = scmp.lt.s32.totalorder %s321, 127
      %s323 = scalar_select %p322, %s321, 127
      %s324 = smul.addr %s323, 8
      %s325 = scalar_lea.vmem %s9, %s324
      %s326 = smul.u32 64, %s22
      %p327 = scmp.lt.s32.totalorder %s326, 127
      %s328 = scalar_select %p327, %s326, 127
      %s329 = smul.addr %s328, 8
      %s330 = scalar_lea.vmem %s0, %s329
      %s331 = smul.u32 64, %s22
      %s332 = smul.u32 64, %s22
      %p333 = scmp.lt.s32.totalorder %s332, 127
      %s334 = scalar_select %p333, %s332, 127
      %s335 = smul.addr %s334, 8
      %s336 = scalar_lea.vmem %s9, %s335
      %s337 = smul.u32 64, %s22
      %v339 = vld [vmem:[%s330] sm:$0xff]
      %v340 = vld [vmem:[%s330 + $0x8] sm:$0xff]
      %v341 = vld [vmem:[%s330 + $0x10] sm:$0xff]
      %v342 = vld [vmem:[%s330 + $0x18] sm:$0xff]
      %v343 = vld [vmem:[%s330 + $0x20] sm:$0xff]
      %v344 = vld [vmem:[%s330 + $0x28] sm:$0xff]
      %v345 = vld [vmem:[%s330 + $0x30] sm:$0xff]
      %v346 = vld [vmem:[%s330 + $0x38] sm:$0xff]
      %v347 = vld [vmem:[%s330 + $0x40] sm:$0xff]
      %v348 = vld [vmem:[%s330 + $0x48] sm:$0xff]
      %v349 = vld [vmem:[%s330 + $0x50] sm:$0xff]
      %v350 = vld [vmem:[%s330 + $0x58] sm:$0xff]
      %v351 = vld [vmem:[%s330 + $0x60] sm:$0xff]
      %v352 = vld [vmem:[%s330 + $0x68] sm:$0xff]
      %v353 = vld [vmem:[%s330 + $0x70] sm:$0xff]
      %v354 = vld [vmem:[%s330 + $0x78] sm:$0xff]
      %v355 = vld [vmem:[%s330 + $0x80] sm:$0xff]
      %v356 = vld [vmem:[%s330 + $0x88] sm:$0xff]
      %v357 = vld [vmem:[%s330 + $0x90] sm:$0xff]
      %v358 = vld [vmem:[%s330 + $0x98] sm:$0xff]
      %v359 = vld [vmem:[%s330 + $0xa0] sm:$0xff]
      %v360 = vld [vmem:[%s330 + $0xa8] sm:$0xff]
      %v361 = vld [vmem:[%s330 + $0xb0] sm:$0xff]
      %v362 = vld [vmem:[%s330 + $0xb8] sm:$0xff]
      %v363 = vld [vmem:[%s330 + $0xc0] sm:$0xff]
      %v364 = vld [vmem:[%s330 + $0xc8] sm:$0xff]
      %v365 = vld [vmem:[%s330 + $0xd0] sm:$0xff]
      %v366 = vld [vmem:[%s330 + $0xd8] sm:$0xff]
      %v367 = vld [vmem:[%s330 + $0xe0] sm:$0xff]
      %v368 = vld [vmem:[%s330 + $0xe8] sm:$0xff]
      %v369 = vld [vmem:[%s330 + $0xf0] sm:$0xff]
      %v370 = vld [vmem:[%s330 + $0xf8] sm:$0xff]
      %v371 = vld [vmem:[%s330 + $0x100] sm:$0xff]
      %v372 = vld [vmem:[%s330 + $0x108] sm:$0xff]
      %v373 = vld [vmem:[%s330 + $0x110] sm:$0xff]
      %v374 = vld [vmem:[%s330 + $0x118] sm:$0xff]
      %v375 = vld [vmem:[%s330 + $0x120] sm:$0xff]
      %v376 = vld [vmem:[%s330 + $0x128] sm:$0xff]
      %v377 = vld [vmem:[%s330 + $0x130] sm:$0xff]
      %v378 = vld [vmem:[%s330 + $0x138] sm:$0xff]
      %v379 = vld [vmem:[%s330 + $0x140] sm:$0xff]
      %v380 = vld [vmem:[%s330 + $0x148] sm:$0xff]
      %v381 = vld [vmem:[%s330 + $0x150] sm:$0xff]
      %v382 = vld [vmem:[%s330 + $0x158] sm:$0xff]
      %v383 = vld [vmem:[%s330 + $0x160] sm:$0xff]
      %v384 = vld [vmem:[%s330 + $0x168] sm:$0xff]
      %v385 = vld [vmem:[%s330 + $0x170] sm:$0xff]
      %v386 = vld [vmem:[%s330 + $0x178] sm:$0xff]
      %v387 = vld [vmem:[%s330 + $0x180] sm:$0xff]
      %v388 = vld [vmem:[%s330 + $0x188] sm:$0xff]
      %v389 = vld [vmem:[%s330 + $0x190] sm:$0xff]
      %v390 = vld [vmem:[%s330 + $0x198] sm:$0xff]
      %v391 = vld [vmem:[%s330 + $0x1a0] sm:$0xff]
      %v392 = vld [vmem:[%s330 + $0x1a8] sm:$0xff]
      %v393 = vld [vmem:[%s330 + $0x1b0] sm:$0xff]
      %v394 = vld [vmem:[%s330 + $0x1b8] sm:$0xff]
      %v395 = vld [vmem:[%s330 + $0x1c0] sm:$0xff]
      %v396 = vld [vmem:[%s330 + $0x1c8] sm:$0xff]
      %v397 = vld [vmem:[%s330 + $0x1d0] sm:$0xff]
      %v398 = vld [vmem:[%s330 + $0x1d8] sm:$0xff]
      %v399 = vld [vmem:[%s330 + $0x1e0] sm:$0xff]
      %v400 = vld [vmem:[%s330 + $0x1e8] sm:$0xff]
      %v401 = vld [vmem:[%s330 + $0x1f0] sm:$0xff]
      %v402 = vld [vmem:[%s330 + $0x1f8] sm:$0xff]
      %v403 = vpack.c.bf16 %v340, %v339
      %v404 = vpack.c.bf16 %v342, %v341
      %v405 = vpack.c.bf16 %v344, %v343
      %v406 = vpack.c.bf16 %v346, %v345
      %v407 = vpack.c.bf16 %v348, %v347
      %v408 = vpack.c.bf16 %v350, %v349
      %v409 = vpack.c.bf16 %v352, %v351
      %v410 = vpack.c.bf16 %v354, %v353
      %v411 = vpack.c.bf16 %v356, %v355
      %v412 = vpack.c.bf16 %v358, %v357
      %v413 = vpack.c.bf16 %v360, %v359
      %v414 = vpack.c.bf16 %v362, %v361
      %v415 = vpack.c.bf16 %v364, %v363
      %v416 = vpack.c.bf16 %v366, %v365
      %v417 = vpack.c.bf16 %v368, %v367
      %v418 = vpack.c.bf16 %v370, %v369
      %v419 = vpack.c.bf16 %v372, %v371
      %v420 = vpack.c.bf16 %v374, %v373
      %v421 = vpack.c.bf16 %v376, %v375
      %v422 = vpack.c.bf16 %v378, %v377
      %v423 = vpack.c.bf16 %v380, %v379
      %v424 = vpack.c.bf16 %v382, %v381
      %v425 = vpack.c.bf16 %v384, %v383
      %v426 = vpack.c.bf16 %v386, %v385
      %v427 = vpack.c.bf16 %v388, %v387
      %v428 = vpack.c.bf16 %v390, %v389
      %v429 = vpack.c.bf16 %v392, %v391
      %v430 = vpack.c.bf16 %v394, %v393
      %v431 = vpack.c.bf16 %v396, %v395
      %v432 = vpack.c.bf16 %v398, %v397
      %v433 = vpack.c.bf16 %v400, %v399
      %v434 = vpack.c.bf16 %v402, %v401
      %v435 = vld [vmem:[%s1] sm:$0xf]
      %v436 = vld [vmem:[%s1 + $0x4] sm:$0xf]
      %v437 = vld [vmem:[%s6] sm:$0x1]
      %v439 = vperm.slane %v437, 0
      %v443 = vunpack.c.l.b16 %v435
      %v444 = vunpack.c.l.b16 %v436
      %v445 = vpack.c.b16 %v444, %v443
      %vm447 = vcmask 130048
      %v449 = vsel %vm447, %v403, 0
      %v452 = vsel %vm447, %v404, 0
      %v455 = vsel %vm447, %v405, 0
      %v458 = vsel %vm447, %v406, 0
      %v461 = vsel %vm447, %v407, 0
      %v464 = vsel %vm447, %v408, 0
      %v467 = vsel %vm447, %v409, 0
      %v470 = vsel %vm447, %v410, 0
      %v473 = vsel %vm447, %v411, 0
      %v476 = vsel %vm447, %v412, 0
      %v479 = vsel %vm447, %v413, 0
      %v482 = vsel %vm447, %v414, 0
      %v485 = vsel %vm447, %v415, 0
      %v488 = vsel %vm447, %v416, 0
      %v491 = vsel %vm447, %v417, 0
      %v494 = vsel %vm447, %v418, 0
      %v497 = vsel %vm447, %v419, 0
      %v500 = vsel %vm447, %v420, 0
      %v503 = vsel %vm447, %v421, 0
      %v506 = vsel %vm447, %v422, 0
      %v509 = vsel %vm447, %v423, 0
      %v512 = vsel %vm447, %v424, 0
      %v515 = vsel %vm447, %v425, 0
      %v518 = vsel %vm447, %v426, 0
      %v521 = vsel %vm447, %v427, 0
      %v524 = vsel %vm447, %v428, 0
      %v527 = vsel %vm447, %v429, 0
      %v530 = vsel %vm447, %v430, 0
      %v533 = vsel %vm447, %v431, 0
      %v536 = vsel %vm447, %v432, 0
      %v539 = vsel %vm447, %v433, 0
      %v542 = vsel %vm447, %v434, 0
      %544 = vmatpush.bf16.msra.mxu0 0
      %545 = vmatpush.bf16.msra.mxu0 0
      %546 = vmatpush.bf16.msra.mxu0 0
      %547 = vmatpush.bf16.msra.mxu0 0
      %548 = vmatpush.bf16.msra.mxu0 0
      %549 = vmatpush.bf16.msra.mxu0 0
      %550 = vmatpush.bf16.msra.mxu0 0
      %551 = vmatpush.bf16.msra.mxu0 %v445
      %552 = vmatmul.bf16.gmra.mxu0 %v449
      %v553 = vpop.f32.mrf.mxu0
      %v554 = vadd.f32 %v439, %v553
      %v555 = vpop.f32.mrf.mxu0
      %v556 = vadd.f32 %v439, %v555
      %557 = vmatmul.bf16.gmra.mxu0 %v452
      %v558 = vpop.f32.mrf.mxu0
      %v559 = vadd.f32 %v439, %v558
      %v560 = vpop.f32.mrf.mxu0
      %v561 = vadd.f32 %v439, %v560
      %562 = vmatmul.bf16.gmra.mxu0 %v455
      %v563 = vpop.f32.mrf.mxu0
      %v564 = vadd.f32 %v439, %v563
      %v565 = vpop.f32.mrf.mxu0
      %v566 = vadd.f32 %v439, %v565
      %567 = vmatmul.bf16.gmra.mxu0 %v458
      %v568 = vpop.f32.mrf.mxu0
      %v569 = vadd.f32 %v439, %v568
      %v570 = vpop.f32.mrf.mxu0
      %v571 = vadd.f32 %v439, %v570
      %572 = vmatmul.bf16.gmra.mxu0 %v461
      %v573 = vpop.f32.mrf.mxu0
      %v574 = vadd.f32 %v439, %v573
      %v575 = vpop.f32.mrf.mxu0
      %v576 = vadd.f32 %v439, %v575
      %577 = vmatmul.bf16.gmra.mxu0 %v464
      %v578 = vpop.f32.mrf.mxu0
      %v579 = vadd.f32 %v439, %v578
      %v580 = vpop.f32.mrf.mxu0
      %v581 = vadd.f32 %v439, %v580
      %582 = vmatmul.bf16.gmra.mxu0 %v467
      %v583 = vpop.f32.mrf.mxu0
      %v584 = vadd.f32 %v439, %v583
      %v585 = vpop.f32.mrf.mxu0
      %v586 = vadd.f32 %v439, %v585
      %587 = vmatmul.bf16.gmra.mxu0 %v470
      %v588 = vpop.f32.mrf.mxu0
      %v589 = vadd.f32 %v439, %v588
      %v590 = vpop.f32.mrf.mxu0
      %v591 = vadd.f32 %v439, %v590
      %592 = vmatmul.bf16.gmra.mxu0 %v473
      %v593 = vpop.f32.mrf.mxu0
      %v594 = vadd.f32 %v439, %v593
      %v595 = vpop.f32.mrf.mxu0
      %v596 = vadd.f32 %v439, %v595
      %597 = vmatmul.bf16.gmra.mxu0 %v476
      %v598 = vpop.f32.mrf.mxu0
      %v599 = vadd.f32 %v439, %v598
      %v600 = vpop.f32.mrf.mxu0
      %v601 = vadd.f32 %v439, %v600
      %602 = vmatmul.bf16.gmra.mxu0 %v479
      %v603 = vpop.f32.mrf.mxu0
      %v604 = vadd.f32 %v439, %v603
      %v605 = vpop.f32.mrf.mxu0
      %v606 = vadd.f32 %v439, %v605
      %607 = vmatmul.bf16.gmra.mxu0 %v482
      %v608 = vpop.f32.mrf.mxu0
      %v609 = vadd.f32 %v439, %v608
      %v610 = vpop.f32.mrf.mxu0
      %v611 = vadd.f32 %v439, %v610
      %612 = vmatmul.bf16.gmra.mxu0 %v485
      %v613 = vpop.f32.mrf.mxu0
      %v614 = vadd.f32 %v439, %v613
      %v615 = vpop.f32.mrf.mxu0
      %v616 = vadd.f32 %v439, %v615
      %617 = vmatmul.bf16.gmra.mxu0 %v488
      %v618 = vpop.f32.mrf.mxu0
      %v619 = vadd.f32 %v439, %v618
      %v620 = vpop.f32.mrf.mxu0
      %v621 = vadd.f32 %v439, %v620
      %622 = vmatmul.bf16.gmra.mxu0 %v491
      %v623 = vpop.f32.mrf.mxu0
      %v624 = vadd.f32 %v439, %v623
      %v625 = vpop.f32.mrf.mxu0
      %v626 = vadd.f32 %v439, %v625
      %627 = vmatmul.bf16.gmra.mxu0 %v494
      %v628 = vpop.f32.mrf.mxu0
      %v629 = vadd.f32 %v439, %v628
      %v630 = vpop.f32.mrf.mxu0
      %v631 = vadd.f32 %v439, %v630
      %632 = vmatmul.bf16.gmra.mxu0 %v497
      %v633 = vpop.f32.mrf.mxu0
      %v634 = vadd.f32 %v439, %v633
      %v635 = vpop.f32.mrf.mxu0
      %v636 = vadd.f32 %v439, %v635
      %637 = vmatmul.bf16.gmra.mxu0 %v500
      %v638 = vpop.f32.mrf.mxu0
      %v639 = vadd.f32 %v439, %v638
      %v640 = vpop.f32.mrf.mxu0
      %v641 = vadd.f32 %v439, %v640
      %642 = vmatmul.bf16.gmra.mxu0 %v503
      %v643 = vpop.f32.mrf.mxu0
      %v644 = vadd.f32 %v439, %v643
      %v645 = vpop.f32.mrf.mxu0
      %v646 = vadd.f32 %v439, %v645
      %647 = vmatmul.bf16.gmra.mxu0 %v506
      %v648 = vpop.f32.mrf.mxu0
      %v649 = vadd.f32 %v439, %v648
      %v650 = vpop.f32.mrf.mxu0
      %v651 = vadd.f32 %v439, %v650
      %652 = vmatmul.bf16.gmra.mxu0 %v509
      %v653 = vpop.f32.mrf.mxu0
      %v654 = vadd.f32 %v439, %v653
      %v655 = vpop.f32.mrf.mxu0
      %v656 = vadd.f32 %v439, %v655
      %657 = vmatmul.bf16.gmra.mxu0 %v512
      %v658 = vpop.f32.mrf.mxu0
      %v659 = vadd.f32 %v439, %v658
      %v660 = vpop.f32.mrf.mxu0
      %v661 = vadd.f32 %v439, %v660
      %662 = vmatmul.bf16.gmra.mxu0 %v515
      %v663 = vpop.f32.mrf.mxu0
      %v664 = vadd.f32 %v439, %v663
      %v665 = vpop.f32.mrf.mxu0
      %v666 = vadd.f32 %v439, %v665
      %667 = vmatmul.bf16.gmra.mxu0 %v518
      %v668 = vpop.f32.mrf.mxu0
      %v669 = vadd.f32 %v439, %v668
      %v670 = vpop.f32.mrf.mxu0
      %v671 = vadd.f32 %v439, %v670
      %672 = vmatmul.bf16.gmra.mxu0 %v521
      %v673 = vpop.f32.mrf.mxu0
      %v674 = vadd.f32 %v439, %v673
      %v675 = vpop.f32.mrf.mxu0
      %v676 = vadd.f32 %v439, %v675
      %677 = vmatmul.bf16.gmra.mxu0 %v524
      %v678 = vpop.f32.mrf.mxu0
      %v679 = vadd.f32 %v439, %v678
      %v680 = vpop.f32.mrf.mxu0
      %v681 = vadd.f32 %v439, %v680
      %682 = vmatmul.bf16.gmra.mxu0 %v527
      %v683 = vpop.f32.mrf.mxu0
      %v684 = vadd.f32 %v439, %v683
      %v685 = vpop.f32.mrf.mxu0
      %v686 = vadd.f32 %v439, %v685
      %687 = vmatmul.bf16.gmra.mxu0 %v530
      %v688 = vpop.f32.mrf.mxu0
      %v689 = vadd.f32 %v439, %v688
      %v690 = vpop.f32.mrf.mxu0
      %v691 = vadd.f32 %v439, %v690
      %692 = vmatmul.bf16.gmra.mxu0 %v533
      %v693 = vpop.f32.mrf.mxu0
      %v694 = vadd.f32 %v439, %v693
      %v695 = vpop.f32.mrf.mxu0
      %v696 = vadd.f32 %v439, %v695
      %697 = vmatmul.bf16.gmra.mxu0 %v536
      %v698 = vpop.f32.mrf.mxu0
      %v699 = vadd.f32 %v439, %v698
      %v700 = vpop.f32.mrf.mxu0
      %v701 = vadd.f32 %v439, %v700
      %702 = vmatmul.bf16.gmra.mxu0 %v539
      %v703 = vpop.f32.mrf.mxu0
      %v704 = vadd.f32 %v439, %v703
      %v705 = vpop.f32.mrf.mxu0
      %v706 = vadd.f32 %v439, %v705
      %707 = vmatmul.bf16.gmra.mxu0 %v542
      %v708 = vpop.f32.mrf.mxu0
      %v709 = vadd.f32 %v439, %v708
      %v710 = vpop.f32.mrf.mxu0
      %v711 = vadd.f32 %v439, %v710
      %712 = vdwg.mxu0
      %v713 = vmax.f32 %v554, 0.0
      %v714 = vmax.f32 %v556, 0.0
      %v715 = vmax.f32 %v559, 0.0
      %v716 = vmax.f32 %v561, 0.0
      %v717 = vmax.f32 %v564, 0.0
      %v718 = vmax.f32 %v566, 0.0
      %v719 = vmax.f32 %v569, 0.0
      %v720 = vmax.f32 %v571, 0.0
      %v721 = vmax.f32 %v574, 0.0
      %v722 = vmax.f32 %v576, 0.0
      %v723 = vmax.f32 %v579, 0.0
      %v724 = vmax.f32 %v581, 0.0
      %v725 = vmax.f32 %v584, 0.0
      %v726 = vmax.f32 %v586, 0.0
      %v727 = vmax.f32 %v589, 0.0
      %v728 = vmax.f32 %v591, 0.0
      %v729 = vmax.f32 %v594, 0.0
      %v730 = vmax.f32 %v596, 0.0
      %v731 = vmax.f32 %v599, 0.0
      %v732 = vmax.f32 %v601, 0.0
      %v733 = vmax.f32 %v604, 0.0
      %v734 = vmax.f32 %v606, 0.0
      %v735 = vmax.f32 %v609, 0.0
      %v736 = vmax.f32 %v611, 0.0
      %v737 = vmax.f32 %v614, 0.0
      %v738 = vmax.f32 %v616, 0.0
      %v739 = vmax.f32 %v619, 0.0
      %v740 = vmax.f32 %v621, 0.0
      %v741 = vmax.f32 %v624, 0.0
      %v742 = vmax.f32 %v626, 0.0
      %v743 = vmax.f32 %v629, 0.0
      %v744 = vmax.f32 %v631, 0.0
      %v745 = vmax.f32 %v634, 0.0
      %v746 = vmax.f32 %v636, 0.0
      %v747 = vmax.f32 %v639, 0.0
      %v748 = vmax.f32 %v641, 0.0
      %v749 = vmax.f32 %v644, 0.0
      %v750 = vmax.f32 %v646, 0.0
      %v751 = vmax.f32 %v649, 0.0
      %v752 = vmax.f32 %v651, 0.0
      %v753 = vmax.f32 %v654, 0.0
      %v754 = vmax.f32 %v656, 0.0
      %v755 = vmax.f32 %v659, 0.0
      %v756 = vmax.f32 %v661, 0.0
      %v757 = vmax.f32 %v664, 0.0
      %v758 = vmax.f32 %v666, 0.0
      %v759 = vmax.f32 %v669, 0.0
      %v760 = vmax.f32 %v671, 0.0
      %v761 = vmax.f32 %v674, 0.0
      %v762 = vmax.f32 %v676, 0.0
      %v763 = vmax.f32 %v679, 0.0
      %v764 = vmax.f32 %v681, 0.0
      %v765 = vmax.f32 %v684, 0.0
      %v766 = vmax.f32 %v686, 0.0
      %v767 = vmax.f32 %v689, 0.0
      %v768 = vmax.f32 %v691, 0.0
      %v769 = vmax.f32 %v694, 0.0
      %v770 = vmax.f32 %v696, 0.0
      %v771 = vmax.f32 %v699, 0.0
      %v772 = vmax.f32 %v701, 0.0
      %v773 = vmax.f32 %v704, 0.0
      %v774 = vmax.f32 %v706, 0.0
      %v775 = vmax.f32 %v709, 0.0
      %v776 = vmax.f32 %v711, 0.0
      %v777 = vpack.c.bf16 %v714, %v713
      %v778 = vpack.c.bf16 %v716, %v715
      %v779 = vpack.c.bf16 %v718, %v717
      %v780 = vpack.c.bf16 %v720, %v719
      %v781 = vpack.c.bf16 %v722, %v721
      %v782 = vpack.c.bf16 %v724, %v723
      %v783 = vpack.c.bf16 %v726, %v725
      %v784 = vpack.c.bf16 %v728, %v727
      %v785 = vpack.c.bf16 %v730, %v729
      %v786 = vpack.c.bf16 %v732, %v731
      %v787 = vpack.c.bf16 %v734, %v733
      %v788 = vpack.c.bf16 %v736, %v735
      %v789 = vpack.c.bf16 %v738, %v737
      %v790 = vpack.c.bf16 %v740, %v739
      %v791 = vpack.c.bf16 %v742, %v741
      %v792 = vpack.c.bf16 %v744, %v743
      %v793 = vpack.c.bf16 %v746, %v745
      %v794 = vpack.c.bf16 %v748, %v747
      %v795 = vpack.c.bf16 %v750, %v749
      %v796 = vpack.c.bf16 %v752, %v751
      %v797 = vpack.c.bf16 %v754, %v753
      %v798 = vpack.c.bf16 %v756, %v755
      %v799 = vpack.c.bf16 %v758, %v757
      %v800 = vpack.c.bf16 %v760, %v759
      %v801 = vpack.c.bf16 %v762, %v761
      %v802 = vpack.c.bf16 %v764, %v763
      %v803 = vpack.c.bf16 %v766, %v765
      %v804 = vpack.c.bf16 %v768, %v767
      %v805 = vpack.c.bf16 %v770, %v769
      %v806 = vpack.c.bf16 %v772, %v771
      %v807 = vpack.c.bf16 %v774, %v773
      %v808 = vpack.c.bf16 %v776, %v775
      %v809 = vld [vmem:[%s2] sm:$0xf]
      %v810 = vld [vmem:[%s2 + $0x4] sm:$0xf]
      %v811 = vld [vmem:[%s2 + $0x8] sm:$0xf]
      %v812 = vld [vmem:[%s2 + $0xc] sm:$0xf]
      %v813 = vld [vmem:[%s2 + $0x10] sm:$0xf]
      %v814 = vld [vmem:[%s2 + $0x14] sm:$0xf]
      %v815 = vld [vmem:[%s2 + $0x18] sm:$0xf]
      %v816 = vld [vmem:[%s2 + $0x1c] sm:$0xf]
      %v817 = vld [vmem:[%s2 + $0x20] sm:$0xf]
      %v818 = vld [vmem:[%s2 + $0x24] sm:$0xf]
      %v819 = vld [vmem:[%s2 + $0x28] sm:$0xf]
      %v820 = vld [vmem:[%s2 + $0x2c] sm:$0xf]
      %v821 = vld [vmem:[%s2 + $0x30] sm:$0xf]
      %v822 = vld [vmem:[%s2 + $0x34] sm:$0xf]
      %v823 = vld [vmem:[%s2 + $0x38] sm:$0xf]
      %v824 = vld [vmem:[%s2 + $0x3c] sm:$0xf]
      %s825 = scalar_lea.vmem %s6, 1
      %v826 = vld [vmem:[%s825] sm:$0x1]
      %v828 = vperm.slane %v826, 0
      %v846 = vunpack.c.l.b16 %v809
      %v847 = vunpack.c.l.b16 %v810
      %v848 = vunpack.c.l.b16 %v811
      %v849 = vunpack.c.l.b16 %v812
      %v850 = vunpack.c.l.b16 %v813
      %v851 = vunpack.c.l.b16 %v814
      %v852 = vunpack.c.l.b16 %v815
      %v853 = vunpack.c.l.b16 %v816
      %v854 = vunpack.c.l.b16 %v817
      %v855 = vunpack.c.l.b16 %v818
      %v856 = vunpack.c.l.b16 %v819
      %v857 = vunpack.c.l.b16 %v820
      %v858 = vunpack.c.l.b16 %v821
      %v859 = vunpack.c.l.b16 %v822
      %v860 = vunpack.c.l.b16 %v823
      %v861 = vunpack.c.l.b16 %v824
      %v862 = vpack.c.b16 %v847, %v846
      %v863 = vpack.c.b16 %v849, %v848
      %v864 = vpack.c.b16 %v851, %v850
      %v865 = vpack.c.b16 %v853, %v852
      %v866 = vpack.c.b16 %v855, %v854
      %v867 = vpack.c.b16 %v857, %v856
      %v868 = vpack.c.b16 %v859, %v858
      %v869 = vpack.c.b16 %v861, %v860
      %878 = vmatpush.bf16.msra.mxu0 %v869
      %879 = vmatpush.bf16.msra.mxu0 %v868
      %880 = vmatpush.bf16.msra.mxu0 %v867
      %881 = vmatpush.bf16.msra.mxu0 %v866
      %882 = vmatpush.bf16.msra.mxu0 %v865
      %883 = vmatpush.bf16.msra.mxu0 %v864
      %884 = vmatpush.bf16.msra.mxu0 %v863
      %885 = vmatpush.bf16.msra.mxu0 %v862
      %886 = vmatmul.bf16.gmra.mxu0 %v777
      %v887 = vpop.f32.mrf.mxu0
      %v888 = vadd.f32 %v828, %v887
      %v889 = vpop.f32.mrf.mxu0
      %v890 = vadd.f32 %v828, %v889
      %891 = vmatmul.bf16.gmra.mxu0 %v778
      %v892 = vpop.f32.mrf.mxu0
      %v893 = vadd.f32 %v828, %v892
      %v894 = vpop.f32.mrf.mxu0
      %v895 = vadd.f32 %v828, %v894
      %896 = vmatmul.bf16.gmra.mxu0 %v779
      %v897 = vpop.f32.mrf.mxu0
      %v898 = vadd.f32 %v828, %v897
      %v899 = vpop.f32.mrf.mxu0
      %v900 = vadd.f32 %v828, %v899
      %901 = vmatmul.bf16.gmra.mxu0 %v780
      %v902 = vpop.f32.mrf.mxu0
      %v903 = vadd.f32 %v828, %v902
      %v904 = vpop.f32.mrf.mxu0
      %v905 = vadd.f32 %v828, %v904
      %906 = vmatmul.bf16.gmra.mxu0 %v781
      %v907 = vpop.f32.mrf.mxu0
      %v908 = vadd.f32 %v828, %v907
      %v909 = vpop.f32.mrf.mxu0
      %v910 = vadd.f32 %v828, %v909
      %911 = vmatmul.bf16.gmra.mxu0 %v782
      %v912 = vpop.f32.mrf.mxu0
      %v913 = vadd.f32 %v828, %v912
      %v914 = vpop.f32.mrf.mxu0
      %v915 = vadd.f32 %v828, %v914
      %916 = vmatmul.bf16.gmra.mxu0 %v783
      %v917 = vpop.f32.mrf.mxu0
      %v918 = vadd.f32 %v828, %v917
      %v919 = vpop.f32.mrf.mxu0
      %v920 = vadd.f32 %v828, %v919
      %921 = vmatmul.bf16.gmra.mxu0 %v784
      %v922 = vpop.f32.mrf.mxu0
      %v923 = vadd.f32 %v828, %v922
      %v924 = vpop.f32.mrf.mxu0
      %v925 = vadd.f32 %v828, %v924
      %926 = vmatmul.bf16.gmra.mxu0 %v785
      %v927 = vpop.f32.mrf.mxu0
      %v928 = vadd.f32 %v828, %v927
      %v929 = vpop.f32.mrf.mxu0
      %v930 = vadd.f32 %v828, %v929
      %931 = vmatmul.bf16.gmra.mxu0 %v786
      %v932 = vpop.f32.mrf.mxu0
      %v933 = vadd.f32 %v828, %v932
      %v934 = vpop.f32.mrf.mxu0
      %v935 = vadd.f32 %v828, %v934
      %936 = vmatmul.bf16.gmra.mxu0 %v787
      %v937 = vpop.f32.mrf.mxu0
      %v938 = vadd.f32 %v828, %v937
      %v939 = vpop.f32.mrf.mxu0
      %v940 = vadd.f32 %v828, %v939
      %941 = vmatmul.bf16.gmra.mxu0 %v788
      %v942 = vpop.f32.mrf.mxu0
      %v943 = vadd.f32 %v828, %v942
      %v944 = vpop.f32.mrf.mxu0
      %v945 = vadd.f32 %v828, %v944
      %946 = vmatmul.bf16.gmra.mxu0 %v789
      %v947 = vpop.f32.mrf.mxu0
      %v948 = vadd.f32 %v828, %v947
      %v949 = vpop.f32.mrf.mxu0
      %v950 = vadd.f32 %v828, %v949
      %951 = vmatmul.bf16.gmra.mxu0 %v790
      %v952 = vpop.f32.mrf.mxu0
      %v953 = vadd.f32 %v828, %v952
      %v954 = vpop.f32.mrf.mxu0
      %v955 = vadd.f32 %v828, %v954
      %956 = vmatmul.bf16.gmra.mxu0 %v791
      %v957 = vpop.f32.mrf.mxu0
      %v958 = vadd.f32 %v828, %v957
      %v959 = vpop.f32.mrf.mxu0
      %v960 = vadd.f32 %v828, %v959
      %961 = vmatmul.bf16.gmra.mxu0 %v792
      %v962 = vpop.f32.mrf.mxu0
      %v963 = vadd.f32 %v828, %v962
      %v964 = vpop.f32.mrf.mxu0
      %v965 = vadd.f32 %v828, %v964
      %966 = vmatmul.bf16.gmra.mxu0 %v793
      %v967 = vpop.f32.mrf.mxu0
      %v968 = vadd.f32 %v828, %v967
      %v969 = vpop.f32.mrf.mxu0
      %v970 = vadd.f32 %v828, %v969
      %971 = vmatmul.bf16.gmra.mxu0 %v794
      %v972 = vpop.f32.mrf.mxu0
      %v973 = vadd.f32 %v828, %v972
      %v974 = vpop.f32.mrf.mxu0
      %v975 = vadd.f32 %v828, %v974
      %976 = vmatmul.bf16.gmra.mxu0 %v795
      %v977 = vpop.f32.mrf.mxu0
      %v978 = vadd.f32 %v828, %v977
      %v979 = vpop.f32.mrf.mxu0
      %v980 = vadd.f32 %v828, %v979
      %981 = vmatmul.bf16.gmra.mxu0 %v796
      %v982 = vpop.f32.mrf.mxu0
      %v983 = vadd.f32 %v828, %v982
      %v984 = vpop.f32.mrf.mxu0
      %v985 = vadd.f32 %v828, %v984
      %986 = vmatmul.bf16.gmra.mxu0 %v797
      %v987 = vpop.f32.mrf.mxu0
      %v988 = vadd.f32 %v828, %v987
      %v989 = vpop.f32.mrf.mxu0
      %v990 = vadd.f32 %v828, %v989
      %991 = vmatmul.bf16.gmra.mxu0 %v798
      %v992 = vpop.f32.mrf.mxu0
      %v993 = vadd.f32 %v828, %v992
      %v994 = vpop.f32.mrf.mxu0
      %v995 = vadd.f32 %v828, %v994
      %996 = vmatmul.bf16.gmra.mxu0 %v799
      %v997 = vpop.f32.mrf.mxu0
      %v998 = vadd.f32 %v828, %v997
      %v999 = vpop.f32.mrf.mxu0
      %v1000 = vadd.f32 %v828, %v999
      %1001 = vmatmul.bf16.gmra.mxu0 %v800
      %v1002 = vpop.f32.mrf.mxu0
      %v1003 = vadd.f32 %v828, %v1002
      %v1004 = vpop.f32.mrf.mxu0
      %v1005 = vadd.f32 %v828, %v1004
      %1006 = vmatmul.bf16.gmra.mxu0 %v801
      %v1007 = vpop.f32.mrf.mxu0
      %v1008 = vadd.f32 %v828, %v1007
      %v1009 = vpop.f32.mrf.mxu0
      %v1010 = vadd.f32 %v828, %v1009
      %1011 = vmatmul.bf16.gmra.mxu0 %v802
      %v1012 = vpop.f32.mrf.mxu0
      %v1013 = vadd.f32 %v828, %v1012
      %v1014 = vpop.f32.mrf.mxu0
      %v1015 = vadd.f32 %v828, %v1014
      %1016 = vmatmul.bf16.gmra.mxu0 %v803
      %v1017 = vpop.f32.mrf.mxu0
      %v1018 = vadd.f32 %v828, %v1017
      %v1019 = vpop.f32.mrf.mxu0
      %v1020 = vadd.f32 %v828, %v1019
      %1021 = vmatmul.bf16.gmra.mxu0 %v804
      %v1022 = vpop.f32.mrf.mxu0
      %v1023 = vadd.f32 %v828, %v1022
      %v1024 = vpop.f32.mrf.mxu0
      %v1025 = vadd.f32 %v828, %v1024
      %1026 = vmatmul.bf16.gmra.mxu0 %v805
      %v1027 = vpop.f32.mrf.mxu0
      %v1028 = vadd.f32 %v828, %v1027
      %v1029 = vpop.f32.mrf.mxu0
      %v1030 = vadd.f32 %v828, %v1029
      %1031 = vmatmul.bf16.gmra.mxu0 %v806
      %v1032 = vpop.f32.mrf.mxu0
      %v1033 = vadd.f32 %v828, %v1032
      %v1034 = vpop.f32.mrf.mxu0
      %v1035 = vadd.f32 %v828, %v1034
      %1036 = vmatmul.bf16.gmra.mxu0 %v807
      %v1037 = vpop.f32.mrf.mxu0
      %v1038 = vadd.f32 %v828, %v1037
      %v1039 = vpop.f32.mrf.mxu0
      %v1040 = vadd.f32 %v828, %v1039
      %1041 = vmatmul.bf16.gmra.mxu0 %v808
      %v1042 = vpop.f32.mrf.mxu0
      %v1043 = vadd.f32 %v828, %v1042
      %v1044 = vpop.f32.mrf.mxu0
      %v1045 = vadd.f32 %v828, %v1044
      %1046 = vdwg.mxu0
      %v1047 = vmax.f32 %v888, 0.0
      %v1048 = vmax.f32 %v890, 0.0
      %v1049 = vmax.f32 %v893, 0.0
      %v1050 = vmax.f32 %v895, 0.0
      %v1051 = vmax.f32 %v898, 0.0
      %v1052 = vmax.f32 %v900, 0.0
      %v1053 = vmax.f32 %v903, 0.0
      %v1054 = vmax.f32 %v905, 0.0
      %v1055 = vmax.f32 %v908, 0.0
      %v1056 = vmax.f32 %v910, 0.0
      %v1057 = vmax.f32 %v913, 0.0
      %v1058 = vmax.f32 %v915, 0.0
      %v1059 = vmax.f32 %v918, 0.0
      %v1060 = vmax.f32 %v920, 0.0
      %v1061 = vmax.f32 %v923, 0.0
      %v1062 = vmax.f32 %v925, 0.0
      %v1063 = vmax.f32 %v928, 0.0
      %v1064 = vmax.f32 %v930, 0.0
      %v1065 = vmax.f32 %v933, 0.0
      %v1066 = vmax.f32 %v935, 0.0
      %v1067 = vmax.f32 %v938, 0.0
      %v1068 = vmax.f32 %v940, 0.0
      %v1069 = vmax.f32 %v943, 0.0
      %v1070 = vmax.f32 %v945, 0.0
      %v1071 = vmax.f32 %v948, 0.0
      %v1072 = vmax.f32 %v950, 0.0
      %v1073 = vmax.f32 %v953, 0.0
      %v1074 = vmax.f32 %v955, 0.0
      %v1075 = vmax.f32 %v958, 0.0
      %v1076 = vmax.f32 %v960, 0.0
      %v1077 = vmax.f32 %v963, 0.0
      %v1078 = vmax.f32 %v965, 0.0
      %v1079 = vmax.f32 %v968, 0.0
      %v1080 = vmax.f32 %v970, 0.0
      %v1081 = vmax.f32 %v973, 0.0
      %v1082 = vmax.f32 %v975, 0.0
      %v1083 = vmax.f32 %v978, 0.0
      %v1084 = vmax.f32 %v980, 0.0
      %v1085 = vmax.f32 %v983, 0.0
      %v1086 = vmax.f32 %v985, 0.0
      %v1087 = vmax.f32 %v988, 0.0
      %v1088 = vmax.f32 %v990, 0.0
      %v1089 = vmax.f32 %v993, 0.0
      %v1090 = vmax.f32 %v995, 0.0
      %v1091 = vmax.f32 %v998, 0.0
      %v1092 = vmax.f32 %v1000, 0.0
      %v1093 = vmax.f32 %v1003, 0.0
      %v1094 = vmax.f32 %v1005, 0.0
      %v1095 = vmax.f32 %v1008, 0.0
      %v1096 = vmax.f32 %v1010, 0.0
      %v1097 = vmax.f32 %v1013, 0.0
      %v1098 = vmax.f32 %v1015, 0.0
      %v1099 = vmax.f32 %v1018, 0.0
      %v1100 = vmax.f32 %v1020, 0.0
      %v1101 = vmax.f32 %v1023, 0.0
      %v1102 = vmax.f32 %v1025, 0.0
      %v1103 = vmax.f32 %v1028, 0.0
      %v1104 = vmax.f32 %v1030, 0.0
      %v1105 = vmax.f32 %v1033, 0.0
      %v1106 = vmax.f32 %v1035, 0.0
      %v1107 = vmax.f32 %v1038, 0.0
      %v1108 = vmax.f32 %v1040, 0.0
      %v1109 = vmax.f32 %v1043, 0.0
      %v1110 = vmax.f32 %v1045, 0.0
      %v1111 = vpack.c.bf16 %v1048, %v1047
      %v1112 = vpack.c.bf16 %v1050, %v1049
      %v1113 = vpack.c.bf16 %v1052, %v1051
      %v1114 = vpack.c.bf16 %v1054, %v1053
      %v1115 = vpack.c.bf16 %v1056, %v1055
      %v1116 = vpack.c.bf16 %v1058, %v1057
      %v1117 = vpack.c.bf16 %v1060, %v1059
      %v1118 = vpack.c.bf16 %v1062, %v1061
      %v1119 = vpack.c.bf16 %v1064, %v1063
      %v1120 = vpack.c.bf16 %v1066, %v1065
      %v1121 = vpack.c.bf16 %v1068, %v1067
      %v1122 = vpack.c.bf16 %v1070, %v1069
      %v1123 = vpack.c.bf16 %v1072, %v1071
      %v1124 = vpack.c.bf16 %v1074, %v1073
      %v1125 = vpack.c.bf16 %v1076, %v1075
      %v1126 = vpack.c.bf16 %v1078, %v1077
      %v1127 = vpack.c.bf16 %v1080, %v1079
      %v1128 = vpack.c.bf16 %v1082, %v1081
      %v1129 = vpack.c.bf16 %v1084, %v1083
      %v1130 = vpack.c.bf16 %v1086, %v1085
      %v1131 = vpack.c.bf16 %v1088, %v1087
      %v1132 = vpack.c.bf16 %v1090, %v1089
      %v1133 = vpack.c.bf16 %v1092, %v1091
      %v1134 = vpack.c.bf16 %v1094, %v1093
      %v1135 = vpack.c.bf16 %v1096, %v1095
      %v1136 = vpack.c.bf16 %v1098, %v1097
      %v1137 = vpack.c.bf16 %v1100, %v1099
      %v1138 = vpack.c.bf16 %v1102, %v1101
      %v1139 = vpack.c.bf16 %v1104, %v1103
      %v1140 = vpack.c.bf16 %v1106, %v1105
      %v1141 = vpack.c.bf16 %v1108, %v1107
      %v1142 = vpack.c.bf16 %v1110, %v1109
      %s1143 = scalar_lea.vmem %s2, 64
      %v1144 = vld [vmem:[%s1143] sm:$0xf]
      %v1145 = vld [vmem:[%s1143 + $0x4] sm:$0xf]
      %v1146 = vld [vmem:[%s1143 + $0x8] sm:$0xf]
      %v1147 = vld [vmem:[%s1143 + $0xc] sm:$0xf]
      %v1148 = vld [vmem:[%s1143 + $0x10] sm:$0xf]
      %v1149 = vld [vmem:[%s1143 + $0x14] sm:$0xf]
      %v1150 = vld [vmem:[%s1143 + $0x18] sm:$0xf]
      %v1151 = vld [vmem:[%s1143 + $0x1c] sm:$0xf]
      %v1152 = vld [vmem:[%s1143 + $0x20] sm:$0xf]
      %v1153 = vld [vmem:[%s1143 + $0x24] sm:$0xf]
      %v1154 = vld [vmem:[%s1143 + $0x28] sm:$0xf]
      %v1155 = vld [vmem:[%s1143 + $0x2c] sm:$0xf]
      %v1156 = vld [vmem:[%s1143 + $0x30] sm:$0xf]
      %v1157 = vld [vmem:[%s1143 + $0x34] sm:$0xf]
      %v1158 = vld [vmem:[%s1143 + $0x38] sm:$0xf]
      %v1159 = vld [vmem:[%s1143 + $0x3c] sm:$0xf]
      %s1160 = scalar_lea.vmem %s6, 2
      %v1161 = vld [vmem:[%s1160] sm:$0x1]
      %v1163 = vperm.slane %v1161, 0
      %v1181 = vunpack.c.l.b16 %v1144
      %v1182 = vunpack.c.l.b16 %v1145
      %v1183 = vunpack.c.l.b16 %v1146
      %v1184 = vunpack.c.l.b16 %v1147
      %v1185 = vunpack.c.l.b16 %v1148
      %v1186 = vunpack.c.l.b16 %v1149
      %v1187 = vunpack.c.l.b16 %v1150
      %v1188 = vunpack.c.l.b16 %v1151
      %v1189 = vunpack.c.l.b16 %v1152
      %v1190 = vunpack.c.l.b16 %v1153
      %v1191 = vunpack.c.l.b16 %v1154
      %v1192 = vunpack.c.l.b16 %v1155
      %v1193 = vunpack.c.l.b16 %v1156
      %v1194 = vunpack.c.l.b16 %v1157
      %v1195 = vunpack.c.l.b16 %v1158
      %v1196 = vunpack.c.l.b16 %v1159
      %v1197 = vpack.c.b16 %v1182, %v1181
      %v1198 = vpack.c.b16 %v1184, %v1183
      %v1199 = vpack.c.b16 %v1186, %v1185
      %v1200 = vpack.c.b16 %v1188, %v1187
      %v1201 = vpack.c.b16 %v1190, %v1189
      %v1202 = vpack.c.b16 %v1192, %v1191
      %v1203 = vpack.c.b16 %v1194, %v1193
      %v1204 = vpack.c.b16 %v1196, %v1195
      %1213 = vmatpush.bf16.msra.mxu0 %v1204
      %1214 = vmatpush.bf16.msra.mxu0 %v1203
      %1215 = vmatpush.bf16.msra.mxu0 %v1202
      %1216 = vmatpush.bf16.msra.mxu0 %v1201
      %1217 = vmatpush.bf16.msra.mxu0 %v1200
      %1218 = vmatpush.bf16.msra.mxu0 %v1199
      %1219 = vmatpush.bf16.msra.mxu0 %v1198
      %1220 = vmatpush.bf16.msra.mxu0 %v1197
      %1221 = vmatmul.bf16.gmra.mxu0 %v1111
      %v1222 = vpop.f32.mrf.mxu0
      %v1223 = vadd.f32 %v1163, %v1222
      %v1224 = vpop.f32.mrf.mxu0
      %v1225 = vadd.f32 %v1163, %v1224
      %1226 = vmatmul.bf16.gmra.mxu0 %v1112
      %v1227 = vpop.f32.mrf.mxu0
      %v1228 = vadd.f32 %v1163, %v1227
      %v1229 = vpop.f32.mrf.mxu0
      %v1230 = vadd.f32 %v1163, %v1229
      %1231 = vmatmul.bf16.gmra.mxu0 %v1113
      %v1232 = vpop.f32.mrf.mxu0
      %v1233 = vadd.f32 %v1163, %v1232
      %v1234 = vpop.f32.mrf.mxu0
      %v1235 = vadd.f32 %v1163, %v1234
      %1236 = vmatmul.bf16.gmra.mxu0 %v1114
      %v1237 = vpop.f32.mrf.mxu0
      %v1238 = vadd.f32 %v1163, %v1237
      %v1239 = vpop.f32.mrf.mxu0
      %v1240 = vadd.f32 %v1163, %v1239
      %1241 = vmatmul.bf16.gmra.mxu0 %v1115
      %v1242 = vpop.f32.mrf.mxu0
      %v1243 = vadd.f32 %v1163, %v1242
      %v1244 = vpop.f32.mrf.mxu0
      %v1245 = vadd.f32 %v1163, %v1244
      %1246 = vmatmul.bf16.gmra.mxu0 %v1116
      %v1247 = vpop.f32.mrf.mxu0
      %v1248 = vadd.f32 %v1163, %v1247
      %v1249 = vpop.f32.mrf.mxu0
      %v1250 = vadd.f32 %v1163, %v1249
      %1251 = vmatmul.bf16.gmra.mxu0 %v1117
      %v1252 = vpop.f32.mrf.mxu0
      %v1253 = vadd.f32 %v1163, %v1252
      %v1254 = vpop.f32.mrf.mxu0
      %v1255 = vadd.f32 %v1163, %v1254
      %1256 = vmatmul.bf16.gmra.mxu0 %v1118
      %v1257 = vpop.f32.mrf.mxu0
      %v1258 = vadd.f32 %v1163, %v1257
      %v1259 = vpop.f32.mrf.mxu0
      %v1260 = vadd.f32 %v1163, %v1259
      %1261 = vmatmul.bf16.gmra.mxu0 %v1119
      %v1262 = vpop.f32.mrf.mxu0
      %v1263 = vadd.f32 %v1163, %v1262
      %v1264 = vpop.f32.mrf.mxu0
      %v1265 = vadd.f32 %v1163, %v1264
      %1266 = vmatmul.bf16.gmra.mxu0 %v1120
      %v1267 = vpop.f32.mrf.mxu0
      %v1268 = vadd.f32 %v1163, %v1267
      %v1269 = vpop.f32.mrf.mxu0
      %v1270 = vadd.f32 %v1163, %v1269
      %1271 = vmatmul.bf16.gmra.mxu0 %v1121
      %v1272 = vpop.f32.mrf.mxu0
      %v1273 = vadd.f32 %v1163, %v1272
      %v1274 = vpop.f32.mrf.mxu0
      %v1275 = vadd.f32 %v1163, %v1274
      %1276 = vmatmul.bf16.gmra.mxu0 %v1122
      %v1277 = vpop.f32.mrf.mxu0
      %v1278 = vadd.f32 %v1163, %v1277
      %v1279 = vpop.f32.mrf.mxu0
      %v1280 = vadd.f32 %v1163, %v1279
      %1281 = vmatmul.bf16.gmra.mxu0 %v1123
      %v1282 = vpop.f32.mrf.mxu0
      %v1283 = vadd.f32 %v1163, %v1282
      %v1284 = vpop.f32.mrf.mxu0
      %v1285 = vadd.f32 %v1163, %v1284
      %1286 = vmatmul.bf16.gmra.mxu0 %v1124
      %v1287 = vpop.f32.mrf.mxu0
      %v1288 = vadd.f32 %v1163, %v1287
      %v1289 = vpop.f32.mrf.mxu0
      %v1290 = vadd.f32 %v1163, %v1289
      %1291 = vmatmul.bf16.gmra.mxu0 %v1125
      %v1292 = vpop.f32.mrf.mxu0
      %v1293 = vadd.f32 %v1163, %v1292
      %v1294 = vpop.f32.mrf.mxu0
      %v1295 = vadd.f32 %v1163, %v1294
      %1296 = vmatmul.bf16.gmra.mxu0 %v1126
      %v1297 = vpop.f32.mrf.mxu0
      %v1298 = vadd.f32 %v1163, %v1297
      %v1299 = vpop.f32.mrf.mxu0
      %v1300 = vadd.f32 %v1163, %v1299
      %1301 = vmatmul.bf16.gmra.mxu0 %v1127
      %v1302 = vpop.f32.mrf.mxu0
      %v1303 = vadd.f32 %v1163, %v1302
      %v1304 = vpop.f32.mrf.mxu0
      %v1305 = vadd.f32 %v1163, %v1304
      %1306 = vmatmul.bf16.gmra.mxu0 %v1128
      %v1307 = vpop.f32.mrf.mxu0
      %v1308 = vadd.f32 %v1163, %v1307
      %v1309 = vpop.f32.mrf.mxu0
      %v1310 = vadd.f32 %v1163, %v1309
      %1311 = vmatmul.bf16.gmra.mxu0 %v1129
      %v1312 = vpop.f32.mrf.mxu0
      %v1313 = vadd.f32 %v1163, %v1312
      %v1314 = vpop.f32.mrf.mxu0
      %v1315 = vadd.f32 %v1163, %v1314
      %1316 = vmatmul.bf16.gmra.mxu0 %v1130
      %v1317 = vpop.f32.mrf.mxu0
      %v1318 = vadd.f32 %v1163, %v1317
      %v1319 = vpop.f32.mrf.mxu0
      %v1320 = vadd.f32 %v1163, %v1319
      %1321 = vmatmul.bf16.gmra.mxu0 %v1131
      %v1322 = vpop.f32.mrf.mxu0
      %v1323 = vadd.f32 %v1163, %v1322
      %v1324 = vpop.f32.mrf.mxu0
      %v1325 = vadd.f32 %v1163, %v1324
      %1326 = vmatmul.bf16.gmra.mxu0 %v1132
      %v1327 = vpop.f32.mrf.mxu0
      %v1328 = vadd.f32 %v1163, %v1327
      %v1329 = vpop.f32.mrf.mxu0
      %v1330 = vadd.f32 %v1163, %v1329
      %1331 = vmatmul.bf16.gmra.mxu0 %v1133
      %v1332 = vpop.f32.mrf.mxu0
      %v1333 = vadd.f32 %v1163, %v1332
      %v1334 = vpop.f32.mrf.mxu0
      %v1335 = vadd.f32 %v1163, %v1334
      %1336 = vmatmul.bf16.gmra.mxu0 %v1134
      %v1337 = vpop.f32.mrf.mxu0
      %v1338 = vadd.f32 %v1163, %v1337
      %v1339 = vpop.f32.mrf.mxu0
      %v1340 = vadd.f32 %v1163, %v1339
      %1341 = vmatmul.bf16.gmra.mxu0 %v1135
      %v1342 = vpop.f32.mrf.mxu0
      %v1343 = vadd.f32 %v1163, %v1342
      %v1344 = vpop.f32.mrf.mxu0
      %v1345 = vadd.f32 %v1163, %v1344
      %1346 = vmatmul.bf16.gmra.mxu0 %v1136
      %v1347 = vpop.f32.mrf.mxu0
      %v1348 = vadd.f32 %v1163, %v1347
      %v1349 = vpop.f32.mrf.mxu0
      %v1350 = vadd.f32 %v1163, %v1349
      %1351 = vmatmul.bf16.gmra.mxu0 %v1137
      %v1352 = vpop.f32.mrf.mxu0
      %v1353 = vadd.f32 %v1163, %v1352
      %v1354 = vpop.f32.mrf.mxu0
      %v1355 = vadd.f32 %v1163, %v1354
      %1356 = vmatmul.bf16.gmra.mxu0 %v1138
      %v1357 = vpop.f32.mrf.mxu0
      %v1358 = vadd.f32 %v1163, %v1357
      %v1359 = vpop.f32.mrf.mxu0
      %v1360 = vadd.f32 %v1163, %v1359
      %1361 = vmatmul.bf16.gmra.mxu0 %v1139
      %v1362 = vpop.f32.mrf.mxu0
      %v1363 = vadd.f32 %v1163, %v1362
      %v1364 = vpop.f32.mrf.mxu0
      %v1365 = vadd.f32 %v1163, %v1364
      %1366 = vmatmul.bf16.gmra.mxu0 %v1140
      %v1367 = vpop.f32.mrf.mxu0
      %v1368 = vadd.f32 %v1163, %v1367
      %v1369 = vpop.f32.mrf.mxu0
      %v1370 = vadd.f32 %v1163, %v1369
      %1371 = vmatmul.bf16.gmra.mxu0 %v1141
      %v1372 = vpop.f32.mrf.mxu0
      %v1373 = vadd.f32 %v1163, %v1372
      %v1374 = vpop.f32.mrf.mxu0
      %v1375 = vadd.f32 %v1163, %v1374
      %1376 = vmatmul.bf16.gmra.mxu0 %v1142
      %v1377 = vpop.f32.mrf.mxu0
      %v1378 = vadd.f32 %v1163, %v1377
      %v1379 = vpop.f32.mrf.mxu0
      %v1380 = vadd.f32 %v1163, %v1379
      %1381 = vdwg.mxu0
      %v1382 = vmax.f32 %v1223, 0.0
      %v1383 = vmax.f32 %v1225, 0.0
      %v1384 = vmax.f32 %v1228, 0.0
      %v1385 = vmax.f32 %v1230, 0.0
      %v1386 = vmax.f32 %v1233, 0.0
      %v1387 = vmax.f32 %v1235, 0.0
      %v1388 = vmax.f32 %v1238, 0.0
      %v1389 = vmax.f32 %v1240, 0.0
      %v1390 = vmax.f32 %v1243, 0.0
      %v1391 = vmax.f32 %v1245, 0.0
      %v1392 = vmax.f32 %v1248, 0.0
      %v1393 = vmax.f32 %v1250, 0.0
      %v1394 = vmax.f32 %v1253, 0.0
      %v1395 = vmax.f32 %v1255, 0.0
      %v1396 = vmax.f32 %v1258, 0.0
      %v1397 = vmax.f32 %v1260, 0.0
      %v1398 = vmax.f32 %v1263, 0.0
      %v1399 = vmax.f32 %v1265, 0.0
      %v1400 = vmax.f32 %v1268, 0.0
      %v1401 = vmax.f32 %v1270, 0.0
      %v1402 = vmax.f32 %v1273, 0.0
      %v1403 = vmax.f32 %v1275, 0.0
      %v1404 = vmax.f32 %v1278, 0.0
      %v1405 = vmax.f32 %v1280, 0.0
      %v1406 = vmax.f32 %v1283, 0.0
      %v1407 = vmax.f32 %v1285, 0.0
      %v1408 = vmax.f32 %v1288, 0.0
      %v1409 = vmax.f32 %v1290, 0.0
      %v1410 = vmax.f32 %v1293, 0.0
      %v1411 = vmax.f32 %v1295, 0.0
      %v1412 = vmax.f32 %v1298, 0.0
      %v1413 = vmax.f32 %v1300, 0.0
      %v1414 = vmax.f32 %v1303, 0.0
      %v1415 = vmax.f32 %v1305, 0.0
      %v1416 = vmax.f32 %v1308, 0.0
      %v1417 = vmax.f32 %v1310, 0.0
      %v1418 = vmax.f32 %v1313, 0.0
      %v1419 = vmax.f32 %v1315, 0.0
      %v1420 = vmax.f32 %v1318, 0.0
      %v1421 = vmax.f32 %v1320, 0.0
      %v1422 = vmax.f32 %v1323, 0.0
      %v1423 = vmax.f32 %v1325, 0.0
      %v1424 = vmax.f32 %v1328, 0.0
      %v1425 = vmax.f32 %v1330, 0.0
      %v1426 = vmax.f32 %v1333, 0.0
      %v1427 = vmax.f32 %v1335, 0.0
      %v1428 = vmax.f32 %v1338, 0.0
      %v1429 = vmax.f32 %v1340, 0.0
      %v1430 = vmax.f32 %v1343, 0.0
      %v1431 = vmax.f32 %v1345, 0.0
      %v1432 = vmax.f32 %v1348, 0.0
      %v1433 = vmax.f32 %v1350, 0.0
      %v1434 = vmax.f32 %v1353, 0.0
      %v1435 = vmax.f32 %v1355, 0.0
      %v1436 = vmax.f32 %v1358, 0.0
      %v1437 = vmax.f32 %v1360, 0.0
      %v1438 = vmax.f32 %v1363, 0.0
      %v1439 = vmax.f32 %v1365, 0.0
      %v1440 = vmax.f32 %v1368, 0.0
      %v1441 = vmax.f32 %v1370, 0.0
      %v1442 = vmax.f32 %v1373, 0.0
      %v1443 = vmax.f32 %v1375, 0.0
      %v1444 = vmax.f32 %v1378, 0.0
      %v1445 = vmax.f32 %v1380, 0.0
      %v1446 = vpack.c.bf16 %v1383, %v1382
      %v1447 = vpack.c.bf16 %v1385, %v1384
      %v1448 = vpack.c.bf16 %v1387, %v1386
      %v1449 = vpack.c.bf16 %v1389, %v1388
      %v1450 = vpack.c.bf16 %v1391, %v1390
      %v1451 = vpack.c.bf16 %v1393, %v1392
      %v1452 = vpack.c.bf16 %v1395, %v1394
      %v1453 = vpack.c.bf16 %v1397, %v1396
      %v1454 = vpack.c.bf16 %v1399, %v1398
      %v1455 = vpack.c.bf16 %v1401, %v1400
      %v1456 = vpack.c.bf16 %v1403, %v1402
      %v1457 = vpack.c.bf16 %v1405, %v1404
      %v1458 = vpack.c.bf16 %v1407, %v1406
      %v1459 = vpack.c.bf16 %v1409, %v1408
      %v1460 = vpack.c.bf16 %v1411, %v1410
      %v1461 = vpack.c.bf16 %v1413, %v1412
      %v1462 = vpack.c.bf16 %v1415, %v1414
      %v1463 = vpack.c.bf16 %v1417, %v1416
      %v1464 = vpack.c.bf16 %v1419, %v1418
      %v1465 = vpack.c.bf16 %v1421, %v1420
      %v1466 = vpack.c.bf16 %v1423, %v1422
      %v1467 = vpack.c.bf16 %v1425, %v1424
      %v1468 = vpack.c.bf16 %v1427, %v1426
      %v1469 = vpack.c.bf16 %v1429, %v1428
      %v1470 = vpack.c.bf16 %v1431, %v1430
      %v1471 = vpack.c.bf16 %v1433, %v1432
      %v1472 = vpack.c.bf16 %v1435, %v1434
      %v1473 = vpack.c.bf16 %v1437, %v1436
      %v1474 = vpack.c.bf16 %v1439, %v1438
      %v1475 = vpack.c.bf16 %v1441, %v1440
      %v1476 = vpack.c.bf16 %v1443, %v1442
      %v1477 = vpack.c.bf16 %v1445, %v1444
      %v1478 = vld [vmem:[%s3] sm:$0xff]
      %v1479 = vld [vmem:[%s3 + $0x8] sm:$0xff]
      %v1480 = vld [vmem:[%s3 + $0x10] sm:$0xff]
      %v1481 = vld [vmem:[%s3 + $0x18] sm:$0xff]
      %v1482 = vld [vmem:[%s3 + $0x20] sm:$0xff]
      %v1483 = vld [vmem:[%s3 + $0x28] sm:$0xff]
      %v1484 = vld [vmem:[%s3 + $0x30] sm:$0xff]
      %v1485 = vld [vmem:[%s3 + $0x38] sm:$0xff]
      %v1486 = vld [vmem:[%s3 + $0x40] sm:$0xff]
      %v1487 = vld [vmem:[%s3 + $0x48] sm:$0xff]
      %v1488 = vld [vmem:[%s3 + $0x50] sm:$0xff]
      %v1489 = vld [vmem:[%s3 + $0x58] sm:$0xff]
      %v1490 = vld [vmem:[%s3 + $0x60] sm:$0xff]
      %v1491 = vld [vmem:[%s3 + $0x68] sm:$0xff]
      %v1492 = vld [vmem:[%s3 + $0x70] sm:$0xff]
      %v1493 = vld [vmem:[%s3 + $0x78] sm:$0xff]
      %v1494 = vld [vmem:[%s7] sm:$0x3]
      %v1496 = vperm.slane %v1494, 0
      %v1497 = vperm.slane %v1494, 1
      %v1516 = vunpack.c.l.b16 %v1478
      %v1517 = vunpack.c.h.b16 %v1478
      %v1518 = vunpack.c.l.b16 %v1479
      %v1519 = vunpack.c.h.b16 %v1479
      %v1520 = vunpack.c.l.b16 %v1480
      %v1521 = vunpack.c.h.b16 %v1480
      %v1522 = vunpack.c.l.b16 %v1481
      %v1523 = vunpack.c.h.b16 %v1481
      %v1524 = vunpack.c.l.b16 %v1482
      %v1525 = vunpack.c.h.b16 %v1482
      %v1526 = vunpack.c.l.b16 %v1483
      %v1527 = vunpack.c.h.b16 %v1483
      %v1528 = vunpack.c.l.b16 %v1484
      %v1529 = vunpack.c.h.b16 %v1484
      %v1530 = vunpack.c.l.b16 %v1485
      %v1531 = vunpack.c.h.b16 %v1485
      %v1532 = vunpack.c.l.b16 %v1486
      %v1533 = vunpack.c.h.b16 %v1486
      %v1534 = vunpack.c.l.b16 %v1487
      %v1535 = vunpack.c.h.b16 %v1487
      %v1536 = vunpack.c.l.b16 %v1488
      %v1537 = vunpack.c.h.b16 %v1488
      %v1538 = vunpack.c.l.b16 %v1489
      %v1539 = vunpack.c.h.b16 %v1489
      %v1540 = vunpack.c.l.b16 %v1490
      %v1541 = vunpack.c.h.b16 %v1490
      %v1542 = vunpack.c.l.b16 %v1491
      %v1543 = vunpack.c.h.b16 %v1491
      %v1544 = vunpack.c.l.b16 %v1492
      %v1545 = vunpack.c.h.b16 %v1492
      %v1546 = vunpack.c.l.b16 %v1493
      %v1547 = vunpack.c.h.b16 %v1493
      %v1548 = vpack.c.b16 %v1518, %v1516
      %v1549 = vpack.c.b16 %v1519, %v1517
      %v1550 = vpack.c.b16 %v1522, %v1520
      %v1551 = vpack.c.b16 %v1523, %v1521
      %v1552 = vpack.c.b16 %v1526, %v1524
      %v1553 = vpack.c.b16 %v1527, %v1525
      %v1554 = vpack.c.b16 %v1530, %v1528
      %v1555 = vpack.c.b16 %v1531, %v1529
      %v1556 = vpack.c.b16 %v1534, %v1532
      %v1557 = vpack.c.b16 %v1535, %v1533
      %v1558 = vpack.c.b16 %v1538, %v1536
      %v1559 = vpack.c.b16 %v1539, %v1537
      %v1560 = vpack.c.b16 %v1542, %v1540
      %v1561 = vpack.c.b16 %v1543, %v1541
      %v1562 = vpack.c.b16 %v1546, %v1544
      %v1563 = vpack.c.b16 %v1547, %v1545
      %1580 = vmatpush.bf16.msra.mxu0 %v1562
      %1581 = vmatpush.bf16.msra.mxu0 %v1560
      %1582 = vmatpush.bf16.msra.mxu0 %v1558
      %1583 = vmatpush.bf16.msra.mxu0 %v1556
      %1584 = vmatpush.bf16.msra.mxu0 %v1554
      %1585 = vmatpush.bf16.msra.mxu0 %v1552
      %1586 = vmatpush.bf16.msra.mxu0 %v1550
      %1587 = vmatpush.bf16.msra.mxu0 %v1548
      %1588 = vmatmul.bf16.gmra.mxu0 %v1446
      %v1589 = vpop.f32.mrf.mxu0
      %v1590 = vadd.f32 %v1496, %v1589
      %v1591 = vpop.f32.mrf.mxu0
      %v1592 = vadd.f32 %v1496, %v1591
      %1593 = vmatmul.bf16.gmra.mxu0 %v1447
      %v1594 = vpop.f32.mrf.mxu0
      %v1595 = vadd.f32 %v1496, %v1594
      %v1596 = vpop.f32.mrf.mxu0
      %v1597 = vadd.f32 %v1496, %v1596
      %1598 = vmatmul.bf16.gmra.mxu0 %v1448
      %v1599 = vpop.f32.mrf.mxu0
      %v1600 = vadd.f32 %v1496, %v1599
      %v1601 = vpop.f32.mrf.mxu0
      %v1602 = vadd.f32 %v1496, %v1601
      %1603 = vmatmul.bf16.gmra.mxu0 %v1449
      %v1604 = vpop.f32.mrf.mxu0
      %v1605 = vadd.f32 %v1496, %v1604
      %v1606 = vpop.f32.mrf.mxu0
      %v1607 = vadd.f32 %v1496, %v1606
      %1608 = vmatmul.bf16.gmra.mxu0 %v1450
      %v1609 = vpop.f32.mrf.mxu0
      %v1610 = vadd.f32 %v1496, %v1609
      %v1611 = vpop.f32.mrf.mxu0
      %v1612 = vadd.f32 %v1496, %v1611
      %1613 = vmatmul.bf16.gmra.mxu0 %v1451
      %v1614 = vpop.f32.mrf.mxu0
      %v1615 = vadd.f32 %v1496, %v1614
      %v1616 = vpop.f32.mrf.mxu0
      %v1617 = vadd.f32 %v1496, %v1616
      %1618 = vmatmul.bf16.gmra.mxu0 %v1452
      %v1619 = vpop.f32.mrf.mxu0
      %v1620 = vadd.f32 %v1496, %v1619
      %v1621 = vpop.f32.mrf.mxu0
      %v1622 = vadd.f32 %v1496, %v1621
      %1623 = vmatmul.bf16.gmra.mxu0 %v1453
      %v1624 = vpop.f32.mrf.mxu0
      %v1625 = vadd.f32 %v1496, %v1624
      %v1626 = vpop.f32.mrf.mxu0
      %v1627 = vadd.f32 %v1496, %v1626
      %1628 = vmatmul.bf16.gmra.mxu0 %v1454
      %v1629 = vpop.f32.mrf.mxu0
      %v1630 = vadd.f32 %v1496, %v1629
      %v1631 = vpop.f32.mrf.mxu0
      %v1632 = vadd.f32 %v1496, %v1631
      %1633 = vmatmul.bf16.gmra.mxu0 %v1455
      %v1634 = vpop.f32.mrf.mxu0
      %v1635 = vadd.f32 %v1496, %v1634
      %v1636 = vpop.f32.mrf.mxu0
      %v1637 = vadd.f32 %v1496, %v1636
      %1638 = vmatmul.bf16.gmra.mxu0 %v1456
      %v1639 = vpop.f32.mrf.mxu0
      %v1640 = vadd.f32 %v1496, %v1639
      %v1641 = vpop.f32.mrf.mxu0
      %v1642 = vadd.f32 %v1496, %v1641
      %1643 = vmatmul.bf16.gmra.mxu0 %v1457
      %v1644 = vpop.f32.mrf.mxu0
      %v1645 = vadd.f32 %v1496, %v1644
      %v1646 = vpop.f32.mrf.mxu0
      %v1647 = vadd.f32 %v1496, %v1646
      %1648 = vmatmul.bf16.gmra.mxu0 %v1458
      %v1649 = vpop.f32.mrf.mxu0
      %v1650 = vadd.f32 %v1496, %v1649
      %v1651 = vpop.f32.mrf.mxu0
      %v1652 = vadd.f32 %v1496, %v1651
      %1653 = vmatmul.bf16.gmra.mxu0 %v1459
      %v1654 = vpop.f32.mrf.mxu0
      %v1655 = vadd.f32 %v1496, %v1654
      %v1656 = vpop.f32.mrf.mxu0
      %v1657 = vadd.f32 %v1496, %v1656
      %1658 = vmatmul.bf16.gmra.mxu0 %v1460
      %v1659 = vpop.f32.mrf.mxu0
      %v1660 = vadd.f32 %v1496, %v1659
      %v1661 = vpop.f32.mrf.mxu0
      %v1662 = vadd.f32 %v1496, %v1661
      %1663 = vmatmul.bf16.gmra.mxu0 %v1461
      %v1664 = vpop.f32.mrf.mxu0
      %v1665 = vadd.f32 %v1496, %v1664
      %v1666 = vpop.f32.mrf.mxu0
      %v1667 = vadd.f32 %v1496, %v1666
      %1668 = vmatmul.bf16.gmra.mxu0 %v1462
      %v1669 = vpop.f32.mrf.mxu0
      %v1670 = vadd.f32 %v1496, %v1669
      %v1671 = vpop.f32.mrf.mxu0
      %v1672 = vadd.f32 %v1496, %v1671
      %1673 = vmatmul.bf16.gmra.mxu0 %v1463
      %v1674 = vpop.f32.mrf.mxu0
      %v1675 = vadd.f32 %v1496, %v1674
      %v1676 = vpop.f32.mrf.mxu0
      %v1677 = vadd.f32 %v1496, %v1676
      %1678 = vmatmul.bf16.gmra.mxu0 %v1464
      %v1679 = vpop.f32.mrf.mxu0
      %v1680 = vadd.f32 %v1496, %v1679
      %v1681 = vpop.f32.mrf.mxu0
      %v1682 = vadd.f32 %v1496, %v1681
      %1683 = vmatmul.bf16.gmra.mxu0 %v1465
      %v1684 = vpop.f32.mrf.mxu0
      %v1685 = vadd.f32 %v1496, %v1684
      %v1686 = vpop.f32.mrf.mxu0
      %v1687 = vadd.f32 %v1496, %v1686
      %1688 = vmatmul.bf16.gmra.mxu0 %v1466
      %v1689 = vpop.f32.mrf.mxu0
      %v1690 = vadd.f32 %v1496, %v1689
      %v1691 = vpop.f32.mrf.mxu0
      %v1692 = vadd.f32 %v1496, %v1691
      %1693 = vmatmul.bf16.gmra.mxu0 %v1467
      %v1694 = vpop.f32.mrf.mxu0
      %v1695 = vadd.f32 %v1496, %v1694
      %v1696 = vpop.f32.mrf.mxu0
      %v1697 = vadd.f32 %v1496, %v1696
      %1698 = vmatmul.bf16.gmra.mxu0 %v1468
      %v1699 = vpop.f32.mrf.mxu0
      %v1700 = vadd.f32 %v1496, %v1699
      %v1701 = vpop.f32.mrf.mxu0
      %v1702 = vadd.f32 %v1496, %v1701
      %1703 = vmatmul.bf16.gmra.mxu0 %v1469
      %v1704 = vpop.f32.mrf.mxu0
      %v1705 = vadd.f32 %v1496, %v1704
      %v1706 = vpop.f32.mrf.mxu0
      %v1707 = vadd.f32 %v1496, %v1706
      %1708 = vmatmul.bf16.gmra.mxu0 %v1470
      %v1709 = vpop.f32.mrf.mxu0
      %v1710 = vadd.f32 %v1496, %v1709
      %v1711 = vpop.f32.mrf.mxu0
      %v1712 = vadd.f32 %v1496, %v1711
      %1713 = vmatmul.bf16.gmra.mxu0 %v1471
      %v1714 = vpop.f32.mrf.mxu0
      %v1715 = vadd.f32 %v1496, %v1714
      %v1716 = vpop.f32.mrf.mxu0
      %v1717 = vadd.f32 %v1496, %v1716
      %1718 = vmatmul.bf16.gmra.mxu0 %v1472
      %v1719 = vpop.f32.mrf.mxu0
      %v1720 = vadd.f32 %v1496, %v1719
      %v1721 = vpop.f32.mrf.mxu0
      %v1722 = vadd.f32 %v1496, %v1721
      %1723 = vmatmul.bf16.gmra.mxu0 %v1473
      %v1724 = vpop.f32.mrf.mxu0
      %v1725 = vadd.f32 %v1496, %v1724
      %v1726 = vpop.f32.mrf.mxu0
      %v1727 = vadd.f32 %v1496, %v1726
      %1728 = vmatmul.bf16.gmra.mxu0 %v1474
      %v1729 = vpop.f32.mrf.mxu0
      %v1730 = vadd.f32 %v1496, %v1729
      %v1731 = vpop.f32.mrf.mxu0
      %v1732 = vadd.f32 %v1496, %v1731
      %1733 = vmatmul.bf16.gmra.mxu0 %v1475
      %v1734 = vpop.f32.mrf.mxu0
      %v1735 = vadd.f32 %v1496, %v1734
      %v1736 = vpop.f32.mrf.mxu0
      %v1737 = vadd.f32 %v1496, %v1736
      %1738 = vmatmul.bf16.gmra.mxu0 %v1476
      %v1739 = vpop.f32.mrf.mxu0
      %v1740 = vadd.f32 %v1496, %v1739
      %v1741 = vpop.f32.mrf.mxu0
      %v1742 = vadd.f32 %v1496, %v1741
      %1743 = vmatmul.bf16.gmra.mxu0 %v1477
      %v1744 = vpop.f32.mrf.mxu0
      %v1745 = vadd.f32 %v1496, %v1744
      %v1746 = vpop.f32.mrf.mxu0
      %v1747 = vadd.f32 %v1496, %v1746
      %1748 = vdwg.mxu0
      %1749 = vmatpush.bf16.msra.mxu0 %v1563
      %1750 = vmatpush.bf16.msra.mxu0 %v1561
      %1751 = vmatpush.bf16.msra.mxu0 %v1559
      %1752 = vmatpush.bf16.msra.mxu0 %v1557
      %1753 = vmatpush.bf16.msra.mxu0 %v1555
      %1754 = vmatpush.bf16.msra.mxu0 %v1553
      %1755 = vmatpush.bf16.msra.mxu0 %v1551
      %1756 = vmatpush.bf16.msra.mxu0 %v1549
      %1757 = vmatmul.bf16.gmra.mxu0 %v1446
      %v1758 = vpop.f32.mrf.mxu0
      %v1759 = vadd.f32 %v1497, %v1758
      %v1760 = vpop.f32.mrf.mxu0
      %v1761 = vadd.f32 %v1497, %v1760
      %1762 = vmatmul.bf16.gmra.mxu0 %v1447
      %v1763 = vpop.f32.mrf.mxu0
      %v1764 = vadd.f32 %v1497, %v1763
      %v1765 = vpop.f32.mrf.mxu0
      %v1766 = vadd.f32 %v1497, %v1765
      %1767 = vmatmul.bf16.gmra.mxu0 %v1448
      %v1768 = vpop.f32.mrf.mxu0
      %v1769 = vadd.f32 %v1497, %v1768
      %v1770 = vpop.f32.mrf.mxu0
      %v1771 = vadd.f32 %v1497, %v1770
      %1772 = vmatmul.bf16.gmra.mxu0 %v1449
      %v1773 = vpop.f32.mrf.mxu0
      %v1774 = vadd.f32 %v1497, %v1773
      %v1775 = vpop.f32.mrf.mxu0
      %v1776 = vadd.f32 %v1497, %v1775
      %1777 = vmatmul.bf16.gmra.mxu0 %v1450
      %v1778 = vpop.f32.mrf.mxu0
      %v1779 = vadd.f32 %v1497, %v1778
      %v1780 = vpop.f32.mrf.mxu0
      %v1781 = vadd.f32 %v1497, %v1780
      %1782 = vmatmul.bf16.gmra.mxu0 %v1451
      %v1783 = vpop.f32.mrf.mxu0
      %v1784 = vadd.f32 %v1497, %v1783
      %v1785 = vpop.f32.mrf.mxu0
      %v1786 = vadd.f32 %v1497, %v1785
      %1787 = vmatmul.bf16.gmra.mxu0 %v1452
      %v1788 = vpop.f32.mrf.mxu0
      %v1789 = vadd.f32 %v1497, %v1788
      %v1790 = vpop.f32.mrf.mxu0
      %v1791 = vadd.f32 %v1497, %v1790
      %1792 = vmatmul.bf16.gmra.mxu0 %v1453
      %v1793 = vpop.f32.mrf.mxu0
      %v1794 = vadd.f32 %v1497, %v1793
      %v1795 = vpop.f32.mrf.mxu0
      %v1796 = vadd.f32 %v1497, %v1795
      %1797 = vmatmul.bf16.gmra.mxu0 %v1454
      %v1798 = vpop.f32.mrf.mxu0
      %v1799 = vadd.f32 %v1497, %v1798
      %v1800 = vpop.f32.mrf.mxu0
      %v1801 = vadd.f32 %v1497, %v1800
      %1802 = vmatmul.bf16.gmra.mxu0 %v1455
      %v1803 = vpop.f32.mrf.mxu0
      %v1804 = vadd.f32 %v1497, %v1803
      %v1805 = vpop.f32.mrf.mxu0
      %v1806 = vadd.f32 %v1497, %v1805
      %1807 = vmatmul.bf16.gmra.mxu0 %v1456
      %v1808 = vpop.f32.mrf.mxu0
      %v1809 = vadd.f32 %v1497, %v1808
      %v1810 = vpop.f32.mrf.mxu0
      %v1811 = vadd.f32 %v1497, %v1810
      %1812 = vmatmul.bf16.gmra.mxu0 %v1457
      %v1813 = vpop.f32.mrf.mxu0
      %v1814 = vadd.f32 %v1497, %v1813
      %v1815 = vpop.f32.mrf.mxu0
      %v1816 = vadd.f32 %v1497, %v1815
      %1817 = vmatmul.bf16.gmra.mxu0 %v1458
      %v1818 = vpop.f32.mrf.mxu0
      %v1819 = vadd.f32 %v1497, %v1818
      %v1820 = vpop.f32.mrf.mxu0
      %v1821 = vadd.f32 %v1497, %v1820
      %1822 = vmatmul.bf16.gmra.mxu0 %v1459
      %v1823 = vpop.f32.mrf.mxu0
      %v1824 = vadd.f32 %v1497, %v1823
      %v1825 = vpop.f32.mrf.mxu0
      %v1826 = vadd.f32 %v1497, %v1825
      %1827 = vmatmul.bf16.gmra.mxu0 %v1460
      %v1828 = vpop.f32.mrf.mxu0
      %v1829 = vadd.f32 %v1497, %v1828
      %v1830 = vpop.f32.mrf.mxu0
      %v1831 = vadd.f32 %v1497, %v1830
      %1832 = vmatmul.bf16.gmra.mxu0 %v1461
      %v1833 = vpop.f32.mrf.mxu0
      %v1834 = vadd.f32 %v1497, %v1833
      %v1835 = vpop.f32.mrf.mxu0
      %v1836 = vadd.f32 %v1497, %v1835
      %1837 = vmatmul.bf16.gmra.mxu0 %v1462
      %v1838 = vpop.f32.mrf.mxu0
      %v1839 = vadd.f32 %v1497, %v1838
      %v1840 = vpop.f32.mrf.mxu0
      %v1841 = vadd.f32 %v1497, %v1840
      %1842 = vmatmul.bf16.gmra.mxu0 %v1463
      %v1843 = vpop.f32.mrf.mxu0
      %v1844 = vadd.f32 %v1497, %v1843
      %v1845 = vpop.f32.mrf.mxu0
      %v1846 = vadd.f32 %v1497, %v1845
      %1847 = vmatmul.bf16.gmra.mxu0 %v1464
      %v1848 = vpop.f32.mrf.mxu0
      %v1849 = vadd.f32 %v1497, %v1848
      %v1850 = vpop.f32.mrf.mxu0
      %v1851 = vadd.f32 %v1497, %v1850
      %1852 = vmatmul.bf16.gmra.mxu0 %v1465
      %v1853 = vpop.f32.mrf.mxu0
      %v1854 = vadd.f32 %v1497, %v1853
      %v1855 = vpop.f32.mrf.mxu0
      %v1856 = vadd.f32 %v1497, %v1855
      %1857 = vmatmul.bf16.gmra.mxu0 %v1466
      %v1858 = vpop.f32.mrf.mxu0
      %v1859 = vadd.f32 %v1497, %v1858
      %v1860 = vpop.f32.mrf.mxu0
      %v1861 = vadd.f32 %v1497, %v1860
      %1862 = vmatmul.bf16.gmra.mxu0 %v1467
      %v1863 = vpop.f32.mrf.mxu0
      %v1864 = vadd.f32 %v1497, %v1863
      %v1865 = vpop.f32.mrf.mxu0
      %v1866 = vadd.f32 %v1497, %v1865
      %1867 = vmatmul.bf16.gmra.mxu0 %v1468
      %v1868 = vpop.f32.mrf.mxu0
      %v1869 = vadd.f32 %v1497, %v1868
      %v1870 = vpop.f32.mrf.mxu0
      %v1871 = vadd.f32 %v1497, %v1870
      %1872 = vmatmul.bf16.gmra.mxu0 %v1469
      %v1873 = vpop.f32.mrf.mxu0
      %v1874 = vadd.f32 %v1497, %v1873
      %v1875 = vpop.f32.mrf.mxu0
      %v1876 = vadd.f32 %v1497, %v1875
      %1877 = vmatmul.bf16.gmra.mxu0 %v1470
      %v1878 = vpop.f32.mrf.mxu0
      %v1879 = vadd.f32 %v1497, %v1878
      %v1880 = vpop.f32.mrf.mxu0
      %v1881 = vadd.f32 %v1497, %v1880
      %1882 = vmatmul.bf16.gmra.mxu0 %v1471
      %v1883 = vpop.f32.mrf.mxu0
      %v1884 = vadd.f32 %v1497, %v1883
      %v1885 = vpop.f32.mrf.mxu0
      %v1886 = vadd.f32 %v1497, %v1885
      %1887 = vmatmul.bf16.gmra.mxu0 %v1472
      %v1888 = vpop.f32.mrf.mxu0
      %v1889 = vadd.f32 %v1497, %v1888
      %v1890 = vpop.f32.mrf.mxu0
      %v1891 = vadd.f32 %v1497, %v1890
      %1892 = vmatmul.bf16.gmra.mxu0 %v1473
      %v1893 = vpop.f32.mrf.mxu0
      %v1894 = vadd.f32 %v1497, %v1893
      %v1895 = vpop.f32.mrf.mxu0
      %v1896 = vadd.f32 %v1497, %v1895
      %1897 = vmatmul.bf16.gmra.mxu0 %v1474
      %v1898 = vpop.f32.mrf.mxu0
      %v1899 = vadd.f32 %v1497, %v1898
      %v1900 = vpop.f32.mrf.mxu0
      %v1901 = vadd.f32 %v1497, %v1900
      %1902 = vmatmul.bf16.gmra.mxu0 %v1475
      %v1903 = vpop.f32.mrf.mxu0
      %v1904 = vadd.f32 %v1497, %v1903
      %v1905 = vpop.f32.mrf.mxu0
      %v1906 = vadd.f32 %v1497, %v1905
      %1907 = vmatmul.bf16.gmra.mxu0 %v1476
      %v1908 = vpop.f32.mrf.mxu0
      %v1909 = vadd.f32 %v1497, %v1908
      %v1910 = vpop.f32.mrf.mxu0
      %v1911 = vadd.f32 %v1497, %v1910
      %1912 = vmatmul.bf16.gmra.mxu0 %v1477
      %v1913 = vpop.f32.mrf.mxu0
      %v1914 = vadd.f32 %v1497, %v1913
      %v1915 = vpop.f32.mrf.mxu0
      %v1916 = vadd.f32 %v1497, %v1915
      %1917 = vdwg.mxu0
      %v1918 = vmax.f32 %v1590, 0.0
      %v1919 = vmax.f32 %v1759, 0.0
      %v1920 = vmax.f32 %v1592, 0.0
      %v1921 = vmax.f32 %v1761, 0.0
      %v1922 = vmax.f32 %v1595, 0.0
      %v1923 = vmax.f32 %v1764, 0.0
      %v1924 = vmax.f32 %v1597, 0.0
      %v1925 = vmax.f32 %v1766, 0.0
      %v1926 = vmax.f32 %v1600, 0.0
      %v1927 = vmax.f32 %v1769, 0.0
      %v1928 = vmax.f32 %v1602, 0.0
      %v1929 = vmax.f32 %v1771, 0.0
      %v1930 = vmax.f32 %v1605, 0.0
      %v1931 = vmax.f32 %v1774, 0.0
      %v1932 = vmax.f32 %v1607, 0.0
      %v1933 = vmax.f32 %v1776, 0.0
      %v1934 = vmax.f32 %v1610, 0.0
      %v1935 = vmax.f32 %v1779, 0.0
      %v1936 = vmax.f32 %v1612, 0.0
      %v1937 = vmax.f32 %v1781, 0.0
      %v1938 = vmax.f32 %v1615, 0.0
      %v1939 = vmax.f32 %v1784, 0.0
      %v1940 = vmax.f32 %v1617, 0.0
      %v1941 = vmax.f32 %v1786, 0.0
      %v1942 = vmax.f32 %v1620, 0.0
      %v1943 = vmax.f32 %v1789, 0.0
      %v1944 = vmax.f32 %v1622, 0.0
      %v1945 = vmax.f32 %v1791, 0.0
      %v1946 = vmax.f32 %v1625, 0.0
      %v1947 = vmax.f32 %v1794, 0.0
      %v1948 = vmax.f32 %v1627, 0.0
      %v1949 = vmax.f32 %v1796, 0.0
      %v1950 = vmax.f32 %v1630, 0.0
      %v1951 = vmax.f32 %v1799, 0.0
      %v1952 = vmax.f32 %v1632, 0.0
      %v1953 = vmax.f32 %v1801, 0.0
      %v1954 = vmax.f32 %v1635, 0.0
      %v1955 = vmax.f32 %v1804, 0.0
      %v1956 = vmax.f32 %v1637, 0.0
      %v1957 = vmax.f32 %v1806, 0.0
      %v1958 = vmax.f32 %v1640, 0.0
      %v1959 = vmax.f32 %v1809, 0.0
      %v1960 = vmax.f32 %v1642, 0.0
      %v1961 = vmax.f32 %v1811, 0.0
      %v1962 = vmax.f32 %v1645, 0.0
      %v1963 = vmax.f32 %v1814, 0.0
      %v1964 = vmax.f32 %v1647, 0.0
      %v1965 = vmax.f32 %v1816, 0.0
      %v1966 = vmax.f32 %v1650, 0.0
      %v1967 = vmax.f32 %v1819, 0.0
      %v1968 = vmax.f32 %v1652, 0.0
      %v1969 = vmax.f32 %v1821, 0.0
      %v1970 = vmax.f32 %v1655, 0.0
      %v1971 = vmax.f32 %v1824, 0.0
      %v1972 = vmax.f32 %v1657, 0.0
      %v1973 = vmax.f32 %v1826, 0.0
      %v1974 = vmax.f32 %v1660, 0.0
      %v1975 = vmax.f32 %v1829, 0.0
      %v1976 = vmax.f32 %v1662, 0.0
      %v1977 = vmax.f32 %v1831, 0.0
      %v1978 = vmax.f32 %v1665, 0.0
      %v1979 = vmax.f32 %v1834, 0.0
      %v1980 = vmax.f32 %v1667, 0.0
      %v1981 = vmax.f32 %v1836, 0.0
      %v1982 = vmax.f32 %v1670, 0.0
      %v1983 = vmax.f32 %v1839, 0.0
      %v1984 = vmax.f32 %v1672, 0.0
      %v1985 = vmax.f32 %v1841, 0.0
      %v1986 = vmax.f32 %v1675, 0.0
      %v1987 = vmax.f32 %v1844, 0.0
      %v1988 = vmax.f32 %v1677, 0.0
      %v1989 = vmax.f32 %v1846, 0.0
      %v1990 = vmax.f32 %v1680, 0.0
      %v1991 = vmax.f32 %v1849, 0.0
      %v1992 = vmax.f32 %v1682, 0.0
      %v1993 = vmax.f32 %v1851, 0.0
      %v1994 = vmax.f32 %v1685, 0.0
      %v1995 = vmax.f32 %v1854, 0.0
      %v1996 = vmax.f32 %v1687, 0.0
      %v1997 = vmax.f32 %v1856, 0.0
      %v1998 = vmax.f32 %v1690, 0.0
      %v1999 = vmax.f32 %v1859, 0.0
      %v2000 = vmax.f32 %v1692, 0.0
      %v2001 = vmax.f32 %v1861, 0.0
      %v2002 = vmax.f32 %v1695, 0.0
      %v2003 = vmax.f32 %v1864, 0.0
      %v2004 = vmax.f32 %v1697, 0.0
      %v2005 = vmax.f32 %v1866, 0.0
      %v2006 = vmax.f32 %v1700, 0.0
      %v2007 = vmax.f32 %v1869, 0.0
      %v2008 = vmax.f32 %v1702, 0.0
      %v2009 = vmax.f32 %v1871, 0.0
      %v2010 = vmax.f32 %v1705, 0.0
      %v2011 = vmax.f32 %v1874, 0.0
      %v2012 = vmax.f32 %v1707, 0.0
      %v2013 = vmax.f32 %v1876, 0.0
      %v2014 = vmax.f32 %v1710, 0.0
      %v2015 = vmax.f32 %v1879, 0.0
      %v2016 = vmax.f32 %v1712, 0.0
      %v2017 = vmax.f32 %v1881, 0.0
      %v2018 = vmax.f32 %v1715, 0.0
      %v2019 = vmax.f32 %v1884, 0.0
      %v2020 = vmax.f32 %v1717, 0.0
      %v2021 = vmax.f32 %v1886, 0.0
      %v2022 = vmax.f32 %v1720, 0.0
      %v2023 = vmax.f32 %v1889, 0.0
      %v2024 = vmax.f32 %v1722, 0.0
      %v2025 = vmax.f32 %v1891, 0.0
      %v2026 = vmax.f32 %v1725, 0.0
      %v2027 = vmax.f32 %v1894, 0.0
      %v2028 = vmax.f32 %v1727, 0.0
      %v2029 = vmax.f32 %v1896, 0.0
      %v2030 = vmax.f32 %v1730, 0.0
      %v2031 = vmax.f32 %v1899, 0.0
      %v2032 = vmax.f32 %v1732, 0.0
      %v2033 = vmax.f32 %v1901, 0.0
      %v2034 = vmax.f32 %v1735, 0.0
      %v2035 = vmax.f32 %v1904, 0.0
      %v2036 = vmax.f32 %v1737, 0.0
      %v2037 = vmax.f32 %v1906, 0.0
      %v2038 = vmax.f32 %v1740, 0.0
      %v2039 = vmax.f32 %v1909, 0.0
      %v2040 = vmax.f32 %v1742, 0.0
      %v2041 = vmax.f32 %v1911, 0.0
      %v2042 = vmax.f32 %v1745, 0.0
      %v2043 = vmax.f32 %v1914, 0.0
      %v2044 = vmax.f32 %v1747, 0.0
      %v2045 = vmax.f32 %v1916, 0.0
      %v2046 = vpack.c.bf16 %v1920, %v1918
      %v2047 = vpack.c.bf16 %v1921, %v1919
      %v2048 = vpack.c.bf16 %v1924, %v1922
      %v2049 = vpack.c.bf16 %v1925, %v1923
      %v2050 = vpack.c.bf16 %v1928, %v1926
      %v2051 = vpack.c.bf16 %v1929, %v1927
      %v2052 = vpack.c.bf16 %v1932, %v1930
      %v2053 = vpack.c.bf16 %v1933, %v1931
      %v2054 = vpack.c.bf16 %v1936, %v1934
      %v2055 = vpack.c.bf16 %v1937, %v1935
      %v2056 = vpack.c.bf16 %v1940, %v1938
      %v2057 = vpack.c.bf16 %v1941, %v1939
      %v2058 = vpack.c.bf16 %v1944, %v1942
      %v2059 = vpack.c.bf16 %v1945, %v1943
      %v2060 = vpack.c.bf16 %v1948, %v1946
      %v2061 = vpack.c.bf16 %v1949, %v1947
      %v2062 = vpack.c.bf16 %v1952, %v1950
      %v2063 = vpack.c.bf16 %v1953, %v1951
      %v2064 = vpack.c.bf16 %v1956, %v1954
      %v2065 = vpack.c.bf16 %v1957, %v1955
      %v2066 = vpack.c.bf16 %v1960, %v1958
      %v2067 = vpack.c.bf16 %v1961, %v1959
      %v2068 = vpack.c.bf16 %v1964, %v1962
      %v2069 = vpack.c.bf16 %v1965, %v1963
      %v2070 = vpack.c.bf16 %v1968, %v1966
      %v2071 = vpack.c.bf16 %v1969, %v1967
      %v2072 = vpack.c.bf16 %v1972, %v1970
      %v2073 = vpack.c.bf16 %v1973, %v1971
      %v2074 = vpack.c.bf16 %v1976, %v1974
      %v2075 = vpack.c.bf16 %v1977, %v1975
      %v2076 = vpack.c.bf16 %v1980, %v1978
      %v2077 = vpack.c.bf16 %v1981, %v1979
      %v2078 = vpack.c.bf16 %v1984, %v1982
      %v2079 = vpack.c.bf16 %v1985, %v1983
      %v2080 = vpack.c.bf16 %v1988, %v1986
      %v2081 = vpack.c.bf16 %v1989, %v1987
      %v2082 = vpack.c.bf16 %v1992, %v1990
      %v2083 = vpack.c.bf16 %v1993, %v1991
      %v2084 = vpack.c.bf16 %v1996, %v1994
      %v2085 = vpack.c.bf16 %v1997, %v1995
      %v2086 = vpack.c.bf16 %v2000, %v1998
      %v2087 = vpack.c.bf16 %v2001, %v1999
      %v2088 = vpack.c.bf16 %v2004, %v2002
      %v2089 = vpack.c.bf16 %v2005, %v2003
      %v2090 = vpack.c.bf16 %v2008, %v2006
      %v2091 = vpack.c.bf16 %v2009, %v2007
      %v2092 = vpack.c.bf16 %v2012, %v2010
      %v2093 = vpack.c.bf16 %v2013, %v2011
      %v2094 = vpack.c.bf16 %v2016, %v2014
      %v2095 = vpack.c.bf16 %v2017, %v2015
      %v2096 = vpack.c.bf16 %v2020, %v2018
      %v2097 = vpack.c.bf16 %v2021, %v2019
      %v2098 = vpack.c.bf16 %v2024, %v2022
      %v2099 = vpack.c.bf16 %v2025, %v2023
      %v2100 = vpack.c.bf16 %v2028, %v2026
      %v2101 = vpack.c.bf16 %v2029, %v2027
      %v2102 = vpack.c.bf16 %v2032, %v2030
      %v2103 = vpack.c.bf16 %v2033, %v2031
      %v2104 = vpack.c.bf16 %v2036, %v2034
      %v2105 = vpack.c.bf16 %v2037, %v2035
      %v2106 = vpack.c.bf16 %v2040, %v2038
      %v2107 = vpack.c.bf16 %v2041, %v2039
      %v2108 = vpack.c.bf16 %v2044, %v2042
      %v2109 = vpack.c.bf16 %v2045, %v2043
      %v2110 = vld [vmem:[%s4] sm:$0xf]
      %v2111 = vld [vmem:[%s4 + $0x4] sm:$0xf]
      %v2112 = vld [vmem:[%s4 + $0x8] sm:$0xf]
      %v2113 = vld [vmem:[%s4 + $0xc] sm:$0xf]
      %v2114 = vld [vmem:[%s4 + $0x10] sm:$0xf]
      %v2115 = vld [vmem:[%s4 + $0x14] sm:$0xf]
      %v2116 = vld [vmem:[%s4 + $0x18] sm:$0xf]
      %v2117 = vld [vmem:[%s4 + $0x1c] sm:$0xf]
      %v2118 = vld [vmem:[%s4 + $0x20] sm:$0xf]
      %v2119 = vld [vmem:[%s4 + $0x24] sm:$0xf]
      %v2120 = vld [vmem:[%s4 + $0x28] sm:$0xf]
      %v2121 = vld [vmem:[%s4 + $0x2c] sm:$0xf]
      %v2122 = vld [vmem:[%s4 + $0x30] sm:$0xf]
      %v2123 = vld [vmem:[%s4 + $0x34] sm:$0xf]
      %v2124 = vld [vmem:[%s4 + $0x38] sm:$0xf]
      %v2125 = vld [vmem:[%s4 + $0x3c] sm:$0xf]
      %v2126 = vld [vmem:[%s4 + $0x40] sm:$0xf]
      %v2127 = vld [vmem:[%s4 + $0x44] sm:$0xf]
      %v2128 = vld [vmem:[%s4 + $0x48] sm:$0xf]
      %v2129 = vld [vmem:[%s4 + $0x4c] sm:$0xf]
      %v2130 = vld [vmem:[%s4 + $0x50] sm:$0xf]
      %v2131 = vld [vmem:[%s4 + $0x54] sm:$0xf]
      %v2132 = vld [vmem:[%s4 + $0x58] sm:$0xf]
      %v2133 = vld [vmem:[%s4 + $0x5c] sm:$0xf]
      %v2134 = vld [vmem:[%s4 + $0x60] sm:$0xf]
      %v2135 = vld [vmem:[%s4 + $0x64] sm:$0xf]
      %v2136 = vld [vmem:[%s4 + $0x68] sm:$0xf]
      %v2137 = vld [vmem:[%s4 + $0x6c] sm:$0xf]
      %v2138 = vld [vmem:[%s4 + $0x70] sm:$0xf]
      %v2139 = vld [vmem:[%s4 + $0x74] sm:$0xf]
      %v2140 = vld [vmem:[%s4 + $0x78] sm:$0xf]
      %v2141 = vld [vmem:[%s4 + $0x7c] sm:$0xf]
      %s2142 = scalar_lea.vmem %s6, 3
      %v2143 = vld [vmem:[%s2142] sm:$0x1]
      %v2145 = vperm.slane %v2143, 0
      %v2179 = vunpack.c.l.b16 %v2110
      %v2180 = vunpack.c.l.b16 %v2111
      %v2181 = vunpack.c.l.b16 %v2112
      %v2182 = vunpack.c.l.b16 %v2113
      %v2183 = vunpack.c.l.b16 %v2114
      %v2184 = vunpack.c.l.b16 %v2115
      %v2185 = vunpack.c.l.b16 %v2116
      %v2186 = vunpack.c.l.b16 %v2117
      %v2187 = vunpack.c.l.b16 %v2118
      %v2188 = vunpack.c.l.b16 %v2119
      %v2189 = vunpack.c.l.b16 %v2120
      %v2190 = vunpack.c.l.b16 %v2121
      %v2191 = vunpack.c.l.b16 %v2122
      %v2192 = vunpack.c.l.b16 %v2123
      %v2193 = vunpack.c.l.b16 %v2124
      %v2194 = vunpack.c.l.b16 %v2125
      %v2195 = vunpack.c.l.b16 %v2126
      %v2196 = vunpack.c.l.b16 %v2127
      %v2197 = vunpack.c.l.b16 %v2128
      %v2198 = vunpack.c.l.b16 %v2129
      %v2199 = vunpack.c.l.b16 %v2130
      %v2200 = vunpack.c.l.b16 %v2131
      %v2201 = vunpack.c.l.b16 %v2132
      %v2202 = vunpack.c.l.b16 %v2133
      %v2203 = vunpack.c.l.b16 %v2134
      %v2204 = vunpack.c.l.b16 %v2135
      %v2205 = vunpack.c.l.b16 %v2136
      %v2206 = vunpack.c.l.b16 %v2137
      %v2207 = vunpack.c.l.b16 %v2138
      %v2208 = vunpack.c.l.b16 %v2139
      %v2209 = vunpack.c.l.b16 %v2140
      %v2210 = vunpack.c.l.b16 %v2141
      %v2211 = vpack.c.b16 %v2180, %v2179
      %v2212 = vpack.c.b16 %v2182, %v2181
      %v2213 = vpack.c.b16 %v2184, %v2183
      %v2214 = vpack.c.b16 %v2186, %v2185
      %v2215 = vpack.c.b16 %v2188, %v2187
      %v2216 = vpack.c.b16 %v2190, %v2189
      %v2217 = vpack.c.b16 %v2192, %v2191
      %v2218 = vpack.c.b16 %v2194, %v2193
      %v2219 = vpack.c.b16 %v2196, %v2195
      %v2220 = vpack.c.b16 %v2198, %v2197
      %v2221 = vpack.c.b16 %v2200, %v2199
      %v2222 = vpack.c.b16 %v2202, %v2201
      %v2223 = vpack.c.b16 %v2204, %v2203
      %v2224 = vpack.c.b16 %v2206, %v2205
      %v2225 = vpack.c.b16 %v2208, %v2207
      %v2226 = vpack.c.b16 %v2210, %v2209
      %2243 = vmatpush.bf16.msra.mxu0 %v2218
      %2244 = vmatpush.bf16.msra.mxu0 %v2217
      %2245 = vmatpush.bf16.msra.mxu0 %v2216
      %2246 = vmatpush.bf16.msra.mxu0 %v2215
      %2247 = vmatpush.bf16.msra.mxu0 %v2214
      %2248 = vmatpush.bf16.msra.mxu0 %v2213
      %2249 = vmatpush.bf16.msra.mxu0 %v2212
      %2250 = vmatpush.bf16.msra.mxu0 %v2211
      %2251 = vmatmul.bf16.gmra.mxu0 %v2046
      %v2252 = vpop.f32.mrf.mxu0
      %v2253 = vadd.f32 %v2145, %v2252
      %v2254 = vpop.f32.mrf.mxu0
      %v2255 = vadd.f32 %v2145, %v2254
      %2256 = vmatmul.bf16.gmra.mxu0 %v2048
      %v2257 = vpop.f32.mrf.mxu0
      %v2258 = vadd.f32 %v2145, %v2257
      %v2259 = vpop.f32.mrf.mxu0
      %v2260 = vadd.f32 %v2145, %v2259
      %2261 = vmatmul.bf16.gmra.mxu0 %v2050
      %v2262 = vpop.f32.mrf.mxu0
      %v2263 = vadd.f32 %v2145, %v2262
      %v2264 = vpop.f32.mrf.mxu0
      %v2265 = vadd.f32 %v2145, %v2264
      %2266 = vmatmul.bf16.gmra.mxu0 %v2052
      %v2267 = vpop.f32.mrf.mxu0
      %v2268 = vadd.f32 %v2145, %v2267
      %v2269 = vpop.f32.mrf.mxu0
      %v2270 = vadd.f32 %v2145, %v2269
      %2271 = vmatmul.bf16.gmra.mxu0 %v2054
      %v2272 = vpop.f32.mrf.mxu0
      %v2273 = vadd.f32 %v2145, %v2272
      %v2274 = vpop.f32.mrf.mxu0
      %v2275 = vadd.f32 %v2145, %v2274
      %2276 = vmatmul.bf16.gmra.mxu0 %v2056
      %v2277 = vpop.f32.mrf.mxu0
      %v2278 = vadd.f32 %v2145, %v2277
      %v2279 = vpop.f32.mrf.mxu0
      %v2280 = vadd.f32 %v2145, %v2279
      %2281 = vmatmul.bf16.gmra.mxu0 %v2058
      %v2282 = vpop.f32.mrf.mxu0
      %v2283 = vadd.f32 %v2145, %v2282
      %v2284 = vpop.f32.mrf.mxu0
      %v2285 = vadd.f32 %v2145, %v2284
      %2286 = vmatmul.bf16.gmra.mxu0 %v2060
      %v2287 = vpop.f32.mrf.mxu0
      %v2288 = vadd.f32 %v2145, %v2287
      %v2289 = vpop.f32.mrf.mxu0
      %v2290 = vadd.f32 %v2145, %v2289
      %2291 = vmatmul.bf16.gmra.mxu0 %v2062
      %v2292 = vpop.f32.mrf.mxu0
      %v2293 = vadd.f32 %v2145, %v2292
      %v2294 = vpop.f32.mrf.mxu0
      %v2295 = vadd.f32 %v2145, %v2294
      %2296 = vmatmul.bf16.gmra.mxu0 %v2064
      %v2297 = vpop.f32.mrf.mxu0
      %v2298 = vadd.f32 %v2145, %v2297
      %v2299 = vpop.f32.mrf.mxu0
      %v2300 = vadd.f32 %v2145, %v2299
      %2301 = vmatmul.bf16.gmra.mxu0 %v2066
      %v2302 = vpop.f32.mrf.mxu0
      %v2303 = vadd.f32 %v2145, %v2302
      %v2304 = vpop.f32.mrf.mxu0
      %v2305 = vadd.f32 %v2145, %v2304
      %2306 = vmatmul.bf16.gmra.mxu0 %v2068
      %v2307 = vpop.f32.mrf.mxu0
      %v2308 = vadd.f32 %v2145, %v2307
      %v2309 = vpop.f32.mrf.mxu0
      %v2310 = vadd.f32 %v2145, %v2309
      %2311 = vmatmul.bf16.gmra.mxu0 %v2070
      %v2312 = vpop.f32.mrf.mxu0
      %v2313 = vadd.f32 %v2145, %v2312
      %v2314 = vpop.f32.mrf.mxu0
      %v2315 = vadd.f32 %v2145, %v2314
      %2316 = vmatmul.bf16.gmra.mxu0 %v2072
      %v2317 = vpop.f32.mrf.mxu0
      %v2318 = vadd.f32 %v2145, %v2317
      %v2319 = vpop.f32.mrf.mxu0
      %v2320 = vadd.f32 %v2145, %v2319
      %2321 = vmatmul.bf16.gmra.mxu0 %v2074
      %v2322 = vpop.f32.mrf.mxu0
      %v2323 = vadd.f32 %v2145, %v2322
      %v2324 = vpop.f32.mrf.mxu0
      %v2325 = vadd.f32 %v2145, %v2324
      %2326 = vmatmul.bf16.gmra.mxu0 %v2076
      %v2327 = vpop.f32.mrf.mxu0
      %v2328 = vadd.f32 %v2145, %v2327
      %v2329 = vpop.f32.mrf.mxu0
      %v2330 = vadd.f32 %v2145, %v2329
      %2331 = vmatmul.bf16.gmra.mxu0 %v2078
      %v2332 = vpop.f32.mrf.mxu0
      %v2333 = vadd.f32 %v2145, %v2332
      %v2334 = vpop.f32.mrf.mxu0
      %v2335 = vadd.f32 %v2145, %v2334
      %2336 = vmatmul.bf16.gmra.mxu0 %v2080
      %v2337 = vpop.f32.mrf.mxu0
      %v2338 = vadd.f32 %v2145, %v2337
      %v2339 = vpop.f32.mrf.mxu0
      %v2340 = vadd.f32 %v2145, %v2339
      %2341 = vmatmul.bf16.gmra.mxu0 %v2082
      %v2342 = vpop.f32.mrf.mxu0
      %v2343 = vadd.f32 %v2145, %v2342
      %v2344 = vpop.f32.mrf.mxu0
      %v2345 = vadd.f32 %v2145, %v2344
      %2346 = vmatmul.bf16.gmra.mxu0 %v2084
      %v2347 = vpop.f32.mrf.mxu0
      %v2348 = vadd.f32 %v2145, %v2347
      %v2349 = vpop.f32.mrf.mxu0
      %v2350 = vadd.f32 %v2145, %v2349
      %2351 = vmatmul.bf16.gmra.mxu0 %v2086
      %v2352 = vpop.f32.mrf.mxu0
      %v2353 = vadd.f32 %v2145, %v2352
      %v2354 = vpop.f32.mrf.mxu0
      %v2355 = vadd.f32 %v2145, %v2354
      %2356 = vmatmul.bf16.gmra.mxu0 %v2088
      %v2357 = vpop.f32.mrf.mxu0
      %v2358 = vadd.f32 %v2145, %v2357
      %v2359 = vpop.f32.mrf.mxu0
      %v2360 = vadd.f32 %v2145, %v2359
      %2361 = vmatmul.bf16.gmra.mxu0 %v2090
      %v2362 = vpop.f32.mrf.mxu0
      %v2363 = vadd.f32 %v2145, %v2362
      %v2364 = vpop.f32.mrf.mxu0
      %v2365 = vadd.f32 %v2145, %v2364
      %2366 = vmatmul.bf16.gmra.mxu0 %v2092
      %v2367 = vpop.f32.mrf.mxu0
      %v2368 = vadd.f32 %v2145, %v2367
      %v2369 = vpop.f32.mrf.mxu0
      %v2370 = vadd.f32 %v2145, %v2369
      %2371 = vmatmul.bf16.gmra.mxu0 %v2094
      %v2372 = vpop.f32.mrf.mxu0
      %v2373 = vadd.f32 %v2145, %v2372
      %v2374 = vpop.f32.mrf.mxu0
      %v2375 = vadd.f32 %v2145, %v2374
      %2376 = vmatmul.bf16.gmra.mxu0 %v2096
      %v2377 = vpop.f32.mrf.mxu0
      %v2378 = vadd.f32 %v2145, %v2377
      %v2379 = vpop.f32.mrf.mxu0
      %v2380 = vadd.f32 %v2145, %v2379
      %2381 = vmatmul.bf16.gmra.mxu0 %v2098
      %v2382 = vpop.f32.mrf.mxu0
      %v2383 = vadd.f32 %v2145, %v2382
      %v2384 = vpop.f32.mrf.mxu0
      %v2385 = vadd.f32 %v2145, %v2384
      %2386 = vmatmul.bf16.gmra.mxu0 %v2100
      %v2387 = vpop.f32.mrf.mxu0
      %v2388 = vadd.f32 %v2145, %v2387
      %v2389 = vpop.f32.mrf.mxu0
      %v2390 = vadd.f32 %v2145, %v2389
      %2391 = vmatmul.bf16.gmra.mxu0 %v2102
      %v2392 = vpop.f32.mrf.mxu0
      %v2393 = vadd.f32 %v2145, %v2392
      %v2394 = vpop.f32.mrf.mxu0
      %v2395 = vadd.f32 %v2145, %v2394
      %2396 = vmatmul.bf16.gmra.mxu0 %v2104
      %v2397 = vpop.f32.mrf.mxu0
      %v2398 = vadd.f32 %v2145, %v2397
      %v2399 = vpop.f32.mrf.mxu0
      %v2400 = vadd.f32 %v2145, %v2399
      %2401 = vmatmul.bf16.gmra.mxu0 %v2106
      %v2402 = vpop.f32.mrf.mxu0
      %v2403 = vadd.f32 %v2145, %v2402
      %v2404 = vpop.f32.mrf.mxu0
      %v2405 = vadd.f32 %v2145, %v2404
      %2406 = vmatmul.bf16.gmra.mxu0 %v2108
      %v2407 = vpop.f32.mrf.mxu0
      %v2408 = vadd.f32 %v2145, %v2407
      %v2409 = vpop.f32.mrf.mxu0
      %v2410 = vadd.f32 %v2145, %v2409
      %2411 = vdwg.mxu0
      %2412 = vmatpush.bf16.msra.mxu0 %v2226
      %2413 = vmatpush.bf16.msra.mxu0 %v2225
      %2414 = vmatpush.bf16.msra.mxu0 %v2224
      %2415 = vmatpush.bf16.msra.mxu0 %v2223
      %2416 = vmatpush.bf16.msra.mxu0 %v2222
      %2417 = vmatpush.bf16.msra.mxu0 %v2221
      %2418 = vmatpush.bf16.msra.mxu0 %v2220
      %2419 = vmatpush.bf16.msra.mxu0 %v2219
      %2420 = vmatmul.bf16.gmra.mxu0 %v2047
      %v2421 = vpop.f32.mrf.mxu0
      %v2422 = vadd.f32 %v2253, %v2421
      %v2423 = vpop.f32.mrf.mxu0
      %v2424 = vadd.f32 %v2255, %v2423
      %2425 = vmatmul.bf16.gmra.mxu0 %v2049
      %v2426 = vpop.f32.mrf.mxu0
      %v2427 = vadd.f32 %v2258, %v2426
      %v2428 = vpop.f32.mrf.mxu0
      %v2429 = vadd.f32 %v2260, %v2428
      %2430 = vmatmul.bf16.gmra.mxu0 %v2051
      %v2431 = vpop.f32.mrf.mxu0
      %v2432 = vadd.f32 %v2263, %v2431
      %v2433 = vpop.f32.mrf.mxu0
      %v2434 = vadd.f32 %v2265, %v2433
      %2435 = vmatmul.bf16.gmra.mxu0 %v2053
      %v2436 = vpop.f32.mrf.mxu0
      %v2437 = vadd.f32 %v2268, %v2436
      %v2438 = vpop.f32.mrf.mxu0
      %v2439 = vadd.f32 %v2270, %v2438
      %2440 = vmatmul.bf16.gmra.mxu0 %v2055
      %v2441 = vpop.f32.mrf.mxu0
      %v2442 = vadd.f32 %v2273, %v2441
      %v2443 = vpop.f32.mrf.mxu0
      %v2444 = vadd.f32 %v2275, %v2443
      %2445 = vmatmul.bf16.gmra.mxu0 %v2057
      %v2446 = vpop.f32.mrf.mxu0
      %v2447 = vadd.f32 %v2278, %v2446
      %v2448 = vpop.f32.mrf.mxu0
      %v2449 = vadd.f32 %v2280, %v2448
      %2450 = vmatmul.bf16.gmra.mxu0 %v2059
      %v2451 = vpop.f32.mrf.mxu0
      %v2452 = vadd.f32 %v2283, %v2451
      %v2453 = vpop.f32.mrf.mxu0
      %v2454 = vadd.f32 %v2285, %v2453
      %2455 = vmatmul.bf16.gmra.mxu0 %v2061
      %v2456 = vpop.f32.mrf.mxu0
      %v2457 = vadd.f32 %v2288, %v2456
      %v2458 = vpop.f32.mrf.mxu0
      %v2459 = vadd.f32 %v2290, %v2458
      %2460 = vmatmul.bf16.gmra.mxu0 %v2063
      %v2461 = vpop.f32.mrf.mxu0
      %v2462 = vadd.f32 %v2293, %v2461
      %v2463 = vpop.f32.mrf.mxu0
      %v2464 = vadd.f32 %v2295, %v2463
      %2465 = vmatmul.bf16.gmra.mxu0 %v2065
      %v2466 = vpop.f32.mrf.mxu0
      %v2467 = vadd.f32 %v2298, %v2466
      %v2468 = vpop.f32.mrf.mxu0
      %v2469 = vadd.f32 %v2300, %v2468
      %2470 = vmatmul.bf16.gmra.mxu0 %v2067
      %v2471 = vpop.f32.mrf.mxu0
      %v2472 = vadd.f32 %v2303, %v2471
      %v2473 = vpop.f32.mrf.mxu0
      %v2474 = vadd.f32 %v2305, %v2473
      %2475 = vmatmul.bf16.gmra.mxu0 %v2069
      %v2476 = vpop.f32.mrf.mxu0
      %v2477 = vadd.f32 %v2308, %v2476
      %v2478 = vpop.f32.mrf.mxu0
      %v2479 = vadd.f32 %v2310, %v2478
      %2480 = vmatmul.bf16.gmra.mxu0 %v2071
      %v2481 = vpop.f32.mrf.mxu0
      %v2482 = vadd.f32 %v2313, %v2481
      %v2483 = vpop.f32.mrf.mxu0
      %v2484 = vadd.f32 %v2315, %v2483
      %2485 = vmatmul.bf16.gmra.mxu0 %v2073
      %v2486 = vpop.f32.mrf.mxu0
      %v2487 = vadd.f32 %v2318, %v2486
      %v2488 = vpop.f32.mrf.mxu0
      %v2489 = vadd.f32 %v2320, %v2488
      %2490 = vmatmul.bf16.gmra.mxu0 %v2075
      %v2491 = vpop.f32.mrf.mxu0
      %v2492 = vadd.f32 %v2323, %v2491
      %v2493 = vpop.f32.mrf.mxu0
      %v2494 = vadd.f32 %v2325, %v2493
      %2495 = vmatmul.bf16.gmra.mxu0 %v2077
      %v2496 = vpop.f32.mrf.mxu0
      %v2497 = vadd.f32 %v2328, %v2496
      %v2498 = vpop.f32.mrf.mxu0
      %v2499 = vadd.f32 %v2330, %v2498
      %2500 = vmatmul.bf16.gmra.mxu0 %v2079
      %v2501 = vpop.f32.mrf.mxu0
      %v2502 = vadd.f32 %v2333, %v2501
      %v2503 = vpop.f32.mrf.mxu0
      %v2504 = vadd.f32 %v2335, %v2503
      %2505 = vmatmul.bf16.gmra.mxu0 %v2081
      %v2506 = vpop.f32.mrf.mxu0
      %v2507 = vadd.f32 %v2338, %v2506
      %v2508 = vpop.f32.mrf.mxu0
      %v2509 = vadd.f32 %v2340, %v2508
      %2510 = vmatmul.bf16.gmra.mxu0 %v2083
      %v2511 = vpop.f32.mrf.mxu0
      %v2512 = vadd.f32 %v2343, %v2511
      %v2513 = vpop.f32.mrf.mxu0
      %v2514 = vadd.f32 %v2345, %v2513
      %2515 = vmatmul.bf16.gmra.mxu0 %v2085
      %v2516 = vpop.f32.mrf.mxu0
      %v2517 = vadd.f32 %v2348, %v2516
      %v2518 = vpop.f32.mrf.mxu0
      %v2519 = vadd.f32 %v2350, %v2518
      %2520 = vmatmul.bf16.gmra.mxu0 %v2087
      %v2521 = vpop.f32.mrf.mxu0
      %v2522 = vadd.f32 %v2353, %v2521
      %v2523 = vpop.f32.mrf.mxu0
      %v2524 = vadd.f32 %v2355, %v2523
      %2525 = vmatmul.bf16.gmra.mxu0 %v2089
      %v2526 = vpop.f32.mrf.mxu0
      %v2527 = vadd.f32 %v2358, %v2526
      %v2528 = vpop.f32.mrf.mxu0
      %v2529 = vadd.f32 %v2360, %v2528
      %2530 = vmatmul.bf16.gmra.mxu0 %v2091
      %v2531 = vpop.f32.mrf.mxu0
      %v2532 = vadd.f32 %v2363, %v2531
      %v2533 = vpop.f32.mrf.mxu0
      %v2534 = vadd.f32 %v2365, %v2533
      %2535 = vmatmul.bf16.gmra.mxu0 %v2093
      %v2536 = vpop.f32.mrf.mxu0
      %v2537 = vadd.f32 %v2368, %v2536
      %v2538 = vpop.f32.mrf.mxu0
      %v2539 = vadd.f32 %v2370, %v2538
      %2540 = vmatmul.bf16.gmra.mxu0 %v2095
      %v2541 = vpop.f32.mrf.mxu0
      %v2542 = vadd.f32 %v2373, %v2541
      %v2543 = vpop.f32.mrf.mxu0
      %v2544 = vadd.f32 %v2375, %v2543
      %2545 = vmatmul.bf16.gmra.mxu0 %v2097
      %v2546 = vpop.f32.mrf.mxu0
      %v2547 = vadd.f32 %v2378, %v2546
      %v2548 = vpop.f32.mrf.mxu0
      %v2549 = vadd.f32 %v2380, %v2548
      %2550 = vmatmul.bf16.gmra.mxu0 %v2099
      %v2551 = vpop.f32.mrf.mxu0
      %v2552 = vadd.f32 %v2383, %v2551
      %v2553 = vpop.f32.mrf.mxu0
      %v2554 = vadd.f32 %v2385, %v2553
      %2555 = vmatmul.bf16.gmra.mxu0 %v2101
      %v2556 = vpop.f32.mrf.mxu0
      %v2557 = vadd.f32 %v2388, %v2556
      %v2558 = vpop.f32.mrf.mxu0
      %v2559 = vadd.f32 %v2390, %v2558
      %2560 = vmatmul.bf16.gmra.mxu0 %v2103
      %v2561 = vpop.f32.mrf.mxu0
      %v2562 = vadd.f32 %v2393, %v2561
      %v2563 = vpop.f32.mrf.mxu0
      %v2564 = vadd.f32 %v2395, %v2563
      %2565 = vmatmul.bf16.gmra.mxu0 %v2105
      %v2566 = vpop.f32.mrf.mxu0
      %v2567 = vadd.f32 %v2398, %v2566
      %v2568 = vpop.f32.mrf.mxu0
      %v2569 = vadd.f32 %v2400, %v2568
      %2570 = vmatmul.bf16.gmra.mxu0 %v2107
      %v2571 = vpop.f32.mrf.mxu0
      %v2572 = vadd.f32 %v2403, %v2571
      %v2573 = vpop.f32.mrf.mxu0
      %v2574 = vadd.f32 %v2405, %v2573
      %2575 = vmatmul.bf16.gmra.mxu0 %v2109
      %v2576 = vpop.f32.mrf.mxu0
      %v2577 = vadd.f32 %v2408, %v2576
      %v2578 = vpop.f32.mrf.mxu0
      %v2579 = vadd.f32 %v2410, %v2578
      %2580 = vdwg.mxu0
      %v2581 = vmax.f32 %v2422, 0.0
      %v2582 = vmax.f32 %v2424, 0.0
      %v2583 = vmax.f32 %v2427, 0.0
      %v2584 = vmax.f32 %v2429, 0.0
      %v2585 = vmax.f32 %v2432, 0.0
      %v2586 = vmax.f32 %v2434, 0.0
      %v2587 = vmax.f32 %v2437, 0.0
      %v2588 = vmax.f32 %v2439, 0.0
      %v2589 = vmax.f32 %v2442, 0.0
      %v2590 = vmax.f32 %v2444, 0.0
      %v2591 = vmax.f32 %v2447, 0.0
      %v2592 = vmax.f32 %v2449, 0.0
      %v2593 = vmax.f32 %v2452, 0.0
      %v2594 = vmax.f32 %v2454, 0.0
      %v2595 = vmax.f32 %v2457, 0.0
      %v2596 = vmax.f32 %v2459, 0.0
      %v2597 = vmax.f32 %v2462, 0.0
      %v2598 = vmax.f32 %v2464, 0.0
      %v2599 = vmax.f32 %v2467, 0.0
      %v2600 = vmax.f32 %v2469, 0.0
      %v2601 = vmax.f32 %v2472, 0.0
      %v2602 = vmax.f32 %v2474, 0.0
      %v2603 = vmax.f32 %v2477, 0.0
      %v2604 = vmax.f32 %v2479, 0.0
      %v2605 = vmax.f32 %v2482, 0.0
      %v2606 = vmax.f32 %v2484, 0.0
      %v2607 = vmax.f32 %v2487, 0.0
      %v2608 = vmax.f32 %v2489, 0.0
      %v2609 = vmax.f32 %v2492, 0.0
      %v2610 = vmax.f32 %v2494, 0.0
      %v2611 = vmax.f32 %v2497, 0.0
      %v2612 = vmax.f32 %v2499, 0.0
      %v2613 = vmax.f32 %v2502, 0.0
      %v2614 = vmax.f32 %v2504, 0.0
      %v2615 = vmax.f32 %v2507, 0.0
      %v2616 = vmax.f32 %v2509, 0.0
      %v2617 = vmax.f32 %v2512, 0.0
      %v2618 = vmax.f32 %v2514, 0.0
      %v2619 = vmax.f32 %v2517, 0.0
      %v2620 = vmax.f32 %v2519, 0.0
      %v2621 = vmax.f32 %v2522, 0.0
      %v2622 = vmax.f32 %v2524, 0.0
      %v2623 = vmax.f32 %v2527, 0.0
      %v2624 = vmax.f32 %v2529, 0.0
      %v2625 = vmax.f32 %v2532, 0.0
      %v2626 = vmax.f32 %v2534, 0.0
      %v2627 = vmax.f32 %v2537, 0.0
      %v2628 = vmax.f32 %v2539, 0.0
      %v2629 = vmax.f32 %v2542, 0.0
      %v2630 = vmax.f32 %v2544, 0.0
      %v2631 = vmax.f32 %v2547, 0.0
      %v2632 = vmax.f32 %v2549, 0.0
      %v2633 = vmax.f32 %v2552, 0.0
      %v2634 = vmax.f32 %v2554, 0.0
      %v2635 = vmax.f32 %v2557, 0.0
      %v2636 = vmax.f32 %v2559, 0.0
      %v2637 = vmax.f32 %v2562, 0.0
      %v2638 = vmax.f32 %v2564, 0.0
      %v2639 = vmax.f32 %v2567, 0.0
      %v2640 = vmax.f32 %v2569, 0.0
      %v2641 = vmax.f32 %v2572, 0.0
      %v2642 = vmax.f32 %v2574, 0.0
      %v2643 = vmax.f32 %v2577, 0.0
      %v2644 = vmax.f32 %v2579, 0.0
      %v2645 = vpack.c.bf16 %v2582, %v2581
      %v2646 = vpack.c.bf16 %v2584, %v2583
      %v2647 = vpack.c.bf16 %v2586, %v2585
      %v2648 = vpack.c.bf16 %v2588, %v2587
      %v2649 = vpack.c.bf16 %v2590, %v2589
      %v2650 = vpack.c.bf16 %v2592, %v2591
      %v2651 = vpack.c.bf16 %v2594, %v2593
      %v2652 = vpack.c.bf16 %v2596, %v2595
      %v2653 = vpack.c.bf16 %v2598, %v2597
      %v2654 = vpack.c.bf16 %v2600, %v2599
      %v2655 = vpack.c.bf16 %v2602, %v2601
      %v2656 = vpack.c.bf16 %v2604, %v2603
      %v2657 = vpack.c.bf16 %v2606, %v2605
      %v2658 = vpack.c.bf16 %v2608, %v2607
      %v2659 = vpack.c.bf16 %v2610, %v2609
      %v2660 = vpack.c.bf16 %v2612, %v2611
      %v2661 = vpack.c.bf16 %v2614, %v2613
      %v2662 = vpack.c.bf16 %v2616, %v2615
      %v2663 = vpack.c.bf16 %v2618, %v2617
      %v2664 = vpack.c.bf16 %v2620, %v2619
      %v2665 = vpack.c.bf16 %v2622, %v2621
      %v2666 = vpack.c.bf16 %v2624, %v2623
      %v2667 = vpack.c.bf16 %v2626, %v2625
      %v2668 = vpack.c.bf16 %v2628, %v2627
      %v2669 = vpack.c.bf16 %v2630, %v2629
      %v2670 = vpack.c.bf16 %v2632, %v2631
      %v2671 = vpack.c.bf16 %v2634, %v2633
      %v2672 = vpack.c.bf16 %v2636, %v2635
      %v2673 = vpack.c.bf16 %v2638, %v2637
      %v2674 = vpack.c.bf16 %v2640, %v2639
      %v2675 = vpack.c.bf16 %v2642, %v2641
      %v2676 = vpack.c.bf16 %v2644, %v2643
      %s2677 = scalar_lea.vmem %s2, 128
      %v2678 = vld [vmem:[%s2677] sm:$0xf]
      %v2679 = vld [vmem:[%s2677 + $0x4] sm:$0xf]
      %v2680 = vld [vmem:[%s2677 + $0x8] sm:$0xf]
      %v2681 = vld [vmem:[%s2677 + $0xc] sm:$0xf]
      %v2682 = vld [vmem:[%s2677 + $0x10] sm:$0xf]
      %v2683 = vld [vmem:[%s2677 + $0x14] sm:$0xf]
      %v2684 = vld [vmem:[%s2677 + $0x18] sm:$0xf]
      %v2685 = vld [vmem:[%s2677 + $0x1c] sm:$0xf]
      %v2686 = vld [vmem:[%s2677 + $0x20] sm:$0xf]
      %v2687 = vld [vmem:[%s2677 + $0x24] sm:$0xf]
      %v2688 = vld [vmem:[%s2677 + $0x28] sm:$0xf]
      %v2689 = vld [vmem:[%s2677 + $0x2c] sm:$0xf]
      %v2690 = vld [vmem:[%s2677 + $0x30] sm:$0xf]
      %v2691 = vld [vmem:[%s2677 + $0x34] sm:$0xf]
      %v2692 = vld [vmem:[%s2677 + $0x38] sm:$0xf]
      %v2693 = vld [vmem:[%s2677 + $0x3c] sm:$0xf]
      %s2694 = scalar_lea.vmem %s6, 4
      %v2695 = vld [vmem:[%s2694] sm:$0x1]
      %v2697 = vperm.slane %v2695, 0
      %v2715 = vunpack.c.l.b16 %v2678
      %v2716 = vunpack.c.l.b16 %v2679
      %v2717 = vunpack.c.l.b16 %v2680
      %v2718 = vunpack.c.l.b16 %v2681
      %v2719 = vunpack.c.l.b16 %v2682
      %v2720 = vunpack.c.l.b16 %v2683
      %v2721 = vunpack.c.l.b16 %v2684
      %v2722 = vunpack.c.l.b16 %v2685
      %v2723 = vunpack.c.l.b16 %v2686
      %v2724 = vunpack.c.l.b16 %v2687
      %v2725 = vunpack.c.l.b16 %v2688
      %v2726 = vunpack.c.l.b16 %v2689
      %v2727 = vunpack.c.l.b16 %v2690
      %v2728 = vunpack.c.l.b16 %v2691
      %v2729 = vunpack.c.l.b16 %v2692
      %v2730 = vunpack.c.l.b16 %v2693
      %v2731 = vpack.c.b16 %v2716, %v2715
      %v2732 = vpack.c.b16 %v2718, %v2717
      %v2733 = vpack.c.b16 %v2720, %v2719
      %v2734 = vpack.c.b16 %v2722, %v2721
      %v2735 = vpack.c.b16 %v2724, %v2723
      %v2736 = vpack.c.b16 %v2726, %v2725
      %v2737 = vpack.c.b16 %v2728, %v2727
      %v2738 = vpack.c.b16 %v2730, %v2729
      %2747 = vmatpush.bf16.msra.mxu0 %v2738
      %2748 = vmatpush.bf16.msra.mxu0 %v2737
      %2749 = vmatpush.bf16.msra.mxu0 %v2736
      %2750 = vmatpush.bf16.msra.mxu0 %v2735
      %2751 = vmatpush.bf16.msra.mxu0 %v2734
      %2752 = vmatpush.bf16.msra.mxu0 %v2733
      %2753 = vmatpush.bf16.msra.mxu0 %v2732
      %2754 = vmatpush.bf16.msra.mxu0 %v2731
      %2755 = vmatmul.bf16.gmra.mxu0 %v2645
      %v2756 = vpop.f32.mrf.mxu0
      %v2757 = vadd.f32 %v2697, %v2756
      %v2758 = vpop.f32.mrf.mxu0
      %v2759 = vadd.f32 %v2697, %v2758
      %2760 = vmatmul.bf16.gmra.mxu0 %v2646
      %v2761 = vpop.f32.mrf.mxu0
      %v2762 = vadd.f32 %v2697, %v2761
      %v2763 = vpop.f32.mrf.mxu0
      %v2764 = vadd.f32 %v2697, %v2763
      %2765 = vmatmul.bf16.gmra.mxu0 %v2647
      %v2766 = vpop.f32.mrf.mxu0
      %v2767 = vadd.f32 %v2697, %v2766
      %v2768 = vpop.f32.mrf.mxu0
      %v2769 = vadd.f32 %v2697, %v2768
      %2770 = vmatmul.bf16.gmra.mxu0 %v2648
      %v2771 = vpop.f32.mrf.mxu0
      %v2772 = vadd.f32 %v2697, %v2771
      %v2773 = vpop.f32.mrf.mxu0
      %v2774 = vadd.f32 %v2697, %v2773
      %2775 = vmatmul.bf16.gmra.mxu0 %v2649
      %v2776 = vpop.f32.mrf.mxu0
      %v2777 = vadd.f32 %v2697, %v2776
      %v2778 = vpop.f32.mrf.mxu0
      %v2779 = vadd.f32 %v2697, %v2778
      %2780 = vmatmul.bf16.gmra.mxu0 %v2650
      %v2781 = vpop.f32.mrf.mxu0
      %v2782 = vadd.f32 %v2697, %v2781
      %v2783 = vpop.f32.mrf.mxu0
      %v2784 = vadd.f32 %v2697, %v2783
      %2785 = vmatmul.bf16.gmra.mxu0 %v2651
      %v2786 = vpop.f32.mrf.mxu0
      %v2787 = vadd.f32 %v2697, %v2786
      %v2788 = vpop.f32.mrf.mxu0
      %v2789 = vadd.f32 %v2697, %v2788
      %2790 = vmatmul.bf16.gmra.mxu0 %v2652
      %v2791 = vpop.f32.mrf.mxu0
      %v2792 = vadd.f32 %v2697, %v2791
      %v2793 = vpop.f32.mrf.mxu0
      %v2794 = vadd.f32 %v2697, %v2793
      %2795 = vmatmul.bf16.gmra.mxu0 %v2653
      %v2796 = vpop.f32.mrf.mxu0
      %v2797 = vadd.f32 %v2697, %v2796
      %v2798 = vpop.f32.mrf.mxu0
      %v2799 = vadd.f32 %v2697, %v2798
      %2800 = vmatmul.bf16.gmra.mxu0 %v2654
      %v2801 = vpop.f32.mrf.mxu0
      %v2802 = vadd.f32 %v2697, %v2801
      %v2803 = vpop.f32.mrf.mxu0
      %v2804 = vadd.f32 %v2697, %v2803
      %2805 = vmatmul.bf16.gmra.mxu0 %v2655
      %v2806 = vpop.f32.mrf.mxu0
      %v2807 = vadd.f32 %v2697, %v2806
      %v2808 = vpop.f32.mrf.mxu0
      %v2809 = vadd.f32 %v2697, %v2808
      %2810 = vmatmul.bf16.gmra.mxu0 %v2656
      %v2811 = vpop.f32.mrf.mxu0
      %v2812 = vadd.f32 %v2697, %v2811
      %v2813 = vpop.f32.mrf.mxu0
      %v2814 = vadd.f32 %v2697, %v2813
      %2815 = vmatmul.bf16.gmra.mxu0 %v2657
      %v2816 = vpop.f32.mrf.mxu0
      %v2817 = vadd.f32 %v2697, %v2816
      %v2818 = vpop.f32.mrf.mxu0
      %v2819 = vadd.f32 %v2697, %v2818
      %2820 = vmatmul.bf16.gmra.mxu0 %v2658
      %v2821 = vpop.f32.mrf.mxu0
      %v2822 = vadd.f32 %v2697, %v2821
      %v2823 = vpop.f32.mrf.mxu0
      %v2824 = vadd.f32 %v2697, %v2823
      %2825 = vmatmul.bf16.gmra.mxu0 %v2659
      %v2826 = vpop.f32.mrf.mxu0
      %v2827 = vadd.f32 %v2697, %v2826
      %v2828 = vpop.f32.mrf.mxu0
      %v2829 = vadd.f32 %v2697, %v2828
      %2830 = vmatmul.bf16.gmra.mxu0 %v2660
      %v2831 = vpop.f32.mrf.mxu0
      %v2832 = vadd.f32 %v2697, %v2831
      %v2833 = vpop.f32.mrf.mxu0
      %v2834 = vadd.f32 %v2697, %v2833
      %2835 = vmatmul.bf16.gmra.mxu0 %v2661
      %v2836 = vpop.f32.mrf.mxu0
      %v2837 = vadd.f32 %v2697, %v2836
      %v2838 = vpop.f32.mrf.mxu0
      %v2839 = vadd.f32 %v2697, %v2838
      %2840 = vmatmul.bf16.gmra.mxu0 %v2662
      %v2841 = vpop.f32.mrf.mxu0
      %v2842 = vadd.f32 %v2697, %v2841
      %v2843 = vpop.f32.mrf.mxu0
      %v2844 = vadd.f32 %v2697, %v2843
      %2845 = vmatmul.bf16.gmra.mxu0 %v2663
      %v2846 = vpop.f32.mrf.mxu0
      %v2847 = vadd.f32 %v2697, %v2846
      %v2848 = vpop.f32.mrf.mxu0
      %v2849 = vadd.f32 %v2697, %v2848
      %2850 = vmatmul.bf16.gmra.mxu0 %v2664
      %v2851 = vpop.f32.mrf.mxu0
      %v2852 = vadd.f32 %v2697, %v2851
      %v2853 = vpop.f32.mrf.mxu0
      %v2854 = vadd.f32 %v2697, %v2853
      %2855 = vmatmul.bf16.gmra.mxu0 %v2665
      %v2856 = vpop.f32.mrf.mxu0
      %v2857 = vadd.f32 %v2697, %v2856
      %v2858 = vpop.f32.mrf.mxu0
      %v2859 = vadd.f32 %v2697, %v2858
      %2860 = vmatmul.bf16.gmra.mxu0 %v2666
      %v2861 = vpop.f32.mrf.mxu0
      %v2862 = vadd.f32 %v2697, %v2861
      %v2863 = vpop.f32.mrf.mxu0
      %v2864 = vadd.f32 %v2697, %v2863
      %2865 = vmatmul.bf16.gmra.mxu0 %v2667
      %v2866 = vpop.f32.mrf.mxu0
      %v2867 = vadd.f32 %v2697, %v2866
      %v2868 = vpop.f32.mrf.mxu0
      %v2869 = vadd.f32 %v2697, %v2868
      %2870 = vmatmul.bf16.gmra.mxu0 %v2668
      %v2871 = vpop.f32.mrf.mxu0
      %v2872 = vadd.f32 %v2697, %v2871
      %v2873 = vpop.f32.mrf.mxu0
      %v2874 = vadd.f32 %v2697, %v2873
      %2875 = vmatmul.bf16.gmra.mxu0 %v2669
      %v2876 = vpop.f32.mrf.mxu0
      %v2877 = vadd.f32 %v2697, %v2876
      %v2878 = vpop.f32.mrf.mxu0
      %v2879 = vadd.f32 %v2697, %v2878
      %2880 = vmatmul.bf16.gmra.mxu0 %v2670
      %v2881 = vpop.f32.mrf.mxu0
      %v2882 = vadd.f32 %v2697, %v2881
      %v2883 = vpop.f32.mrf.mxu0
      %v2884 = vadd.f32 %v2697, %v2883
      %2885 = vmatmul.bf16.gmra.mxu0 %v2671
      %v2886 = vpop.f32.mrf.mxu0
      %v2887 = vadd.f32 %v2697, %v2886
      %v2888 = vpop.f32.mrf.mxu0
      %v2889 = vadd.f32 %v2697, %v2888
      %2890 = vmatmul.bf16.gmra.mxu0 %v2672
      %v2891 = vpop.f32.mrf.mxu0
      %v2892 = vadd.f32 %v2697, %v2891
      %v2893 = vpop.f32.mrf.mxu0
      %v2894 = vadd.f32 %v2697, %v2893
      %2895 = vmatmul.bf16.gmra.mxu0 %v2673
      %v2896 = vpop.f32.mrf.mxu0
      %v2897 = vadd.f32 %v2697, %v2896
      %v2898 = vpop.f32.mrf.mxu0
      %v2899 = vadd.f32 %v2697, %v2898
      %2900 = vmatmul.bf16.gmra.mxu0 %v2674
      %v2901 = vpop.f32.mrf.mxu0
      %v2902 = vadd.f32 %v2697, %v2901
      %v2903 = vpop.f32.mrf.mxu0
      %v2904 = vadd.f32 %v2697, %v2903
      %2905 = vmatmul.bf16.gmra.mxu0 %v2675
      %v2906 = vpop.f32.mrf.mxu0
      %v2907 = vadd.f32 %v2697, %v2906
      %v2908 = vpop.f32.mrf.mxu0
      %v2909 = vadd.f32 %v2697, %v2908
      %2910 = vmatmul.bf16.gmra.mxu0 %v2676
      %v2911 = vpop.f32.mrf.mxu0
      %v2912 = vadd.f32 %v2697, %v2911
      %v2913 = vpop.f32.mrf.mxu0
      %v2914 = vadd.f32 %v2697, %v2913
      %2915 = vdwg.mxu0
      %v2916 = vmax.f32 %v2757, 0.0
      %v2917 = vmax.f32 %v2759, 0.0
      %v2918 = vmax.f32 %v2762, 0.0
      %v2919 = vmax.f32 %v2764, 0.0
      %v2920 = vmax.f32 %v2767, 0.0
      %v2921 = vmax.f32 %v2769, 0.0
      %v2922 = vmax.f32 %v2772, 0.0
      %v2923 = vmax.f32 %v2774, 0.0
      %v2924 = vmax.f32 %v2777, 0.0
      %v2925 = vmax.f32 %v2779, 0.0
      %v2926 = vmax.f32 %v2782, 0.0
      %v2927 = vmax.f32 %v2784, 0.0
      %v2928 = vmax.f32 %v2787, 0.0
      %v2929 = vmax.f32 %v2789, 0.0
      %v2930 = vmax.f32 %v2792, 0.0
      %v2931 = vmax.f32 %v2794, 0.0
      %v2932 = vmax.f32 %v2797, 0.0
      %v2933 = vmax.f32 %v2799, 0.0
      %v2934 = vmax.f32 %v2802, 0.0
      %v2935 = vmax.f32 %v2804, 0.0
      %v2936 = vmax.f32 %v2807, 0.0
      %v2937 = vmax.f32 %v2809, 0.0
      %v2938 = vmax.f32 %v2812, 0.0
      %v2939 = vmax.f32 %v2814, 0.0
      %v2940 = vmax.f32 %v2817, 0.0
      %v2941 = vmax.f32 %v2819, 0.0
      %v2942 = vmax.f32 %v2822, 0.0
      %v2943 = vmax.f32 %v2824, 0.0
      %v2944 = vmax.f32 %v2827, 0.0
      %v2945 = vmax.f32 %v2829, 0.0
      %v2946 = vmax.f32 %v2832, 0.0
      %v2947 = vmax.f32 %v2834, 0.0
      %v2948 = vmax.f32 %v2837, 0.0
      %v2949 = vmax.f32 %v2839, 0.0
      %v2950 = vmax.f32 %v2842, 0.0
      %v2951 = vmax.f32 %v2844, 0.0
      %v2952 = vmax.f32 %v2847, 0.0
      %v2953 = vmax.f32 %v2849, 0.0
      %v2954 = vmax.f32 %v2852, 0.0
      %v2955 = vmax.f32 %v2854, 0.0
      %v2956 = vmax.f32 %v2857, 0.0
      %v2957 = vmax.f32 %v2859, 0.0
      %v2958 = vmax.f32 %v2862, 0.0
      %v2959 = vmax.f32 %v2864, 0.0
      %v2960 = vmax.f32 %v2867, 0.0
      %v2961 = vmax.f32 %v2869, 0.0
      %v2962 = vmax.f32 %v2872, 0.0
      %v2963 = vmax.f32 %v2874, 0.0
      %v2964 = vmax.f32 %v2877, 0.0
      %v2965 = vmax.f32 %v2879, 0.0
      %v2966 = vmax.f32 %v2882, 0.0
      %v2967 = vmax.f32 %v2884, 0.0
      %v2968 = vmax.f32 %v2887, 0.0
      %v2969 = vmax.f32 %v2889, 0.0
      %v2970 = vmax.f32 %v2892, 0.0
      %v2971 = vmax.f32 %v2894, 0.0
      %v2972 = vmax.f32 %v2897, 0.0
      %v2973 = vmax.f32 %v2899, 0.0
      %v2974 = vmax.f32 %v2902, 0.0
      %v2975 = vmax.f32 %v2904, 0.0
      %v2976 = vmax.f32 %v2907, 0.0
      %v2977 = vmax.f32 %v2909, 0.0
      %v2978 = vmax.f32 %v2912, 0.0
      %v2979 = vmax.f32 %v2914, 0.0
      %v2980 = vpack.c.bf16 %v2917, %v2916
      %v2981 = vpack.c.bf16 %v2919, %v2918
      %v2982 = vpack.c.bf16 %v2921, %v2920
      %v2983 = vpack.c.bf16 %v2923, %v2922
      %v2984 = vpack.c.bf16 %v2925, %v2924
      %v2985 = vpack.c.bf16 %v2927, %v2926
      %v2986 = vpack.c.bf16 %v2929, %v2928
      %v2987 = vpack.c.bf16 %v2931, %v2930
      %v2988 = vpack.c.bf16 %v2933, %v2932
      %v2989 = vpack.c.bf16 %v2935, %v2934
      %v2990 = vpack.c.bf16 %v2937, %v2936
      %v2991 = vpack.c.bf16 %v2939, %v2938
      %v2992 = vpack.c.bf16 %v2941, %v2940
      %v2993 = vpack.c.bf16 %v2943, %v2942
      %v2994 = vpack.c.bf16 %v2945, %v2944
      %v2995 = vpack.c.bf16 %v2947, %v2946
      %v2996 = vpack.c.bf16 %v2949, %v2948
      %v2997 = vpack.c.bf16 %v2951, %v2950
      %v2998 = vpack.c.bf16 %v2953, %v2952
      %v2999 = vpack.c.bf16 %v2955, %v2954
      %v3000 = vpack.c.bf16 %v2957, %v2956
      %v3001 = vpack.c.bf16 %v2959, %v2958
      %v3002 = vpack.c.bf16 %v2961, %v2960
      %v3003 = vpack.c.bf16 %v2963, %v2962
      %v3004 = vpack.c.bf16 %v2965, %v2964
      %v3005 = vpack.c.bf16 %v2967, %v2966
      %v3006 = vpack.c.bf16 %v2969, %v2968
      %v3007 = vpack.c.bf16 %v2971, %v2970
      %v3008 = vpack.c.bf16 %v2973, %v2972
      %v3009 = vpack.c.bf16 %v2975, %v2974
      %v3010 = vpack.c.bf16 %v2977, %v2976
      %v3011 = vpack.c.bf16 %v2979, %v2978
      %s3012 = scalar_lea.vmem %s2, 192
      %v3013 = vld [vmem:[%s3012] sm:$0xf]
      %v3014 = vld [vmem:[%s3012 + $0x4] sm:$0xf]
      %v3015 = vld [vmem:[%s3012 + $0x8] sm:$0xf]
      %v3016 = vld [vmem:[%s3012 + $0xc] sm:$0xf]
      %v3017 = vld [vmem:[%s3012 + $0x10] sm:$0xf]
      %v3018 = vld [vmem:[%s3012 + $0x14] sm:$0xf]
      %v3019 = vld [vmem:[%s3012 + $0x18] sm:$0xf]
      %v3020 = vld [vmem:[%s3012 + $0x1c] sm:$0xf]
      %v3021 = vld [vmem:[%s3012 + $0x20] sm:$0xf]
      %v3022 = vld [vmem:[%s3012 + $0x24] sm:$0xf]
      %v3023 = vld [vmem:[%s3012 + $0x28] sm:$0xf]
      %v3024 = vld [vmem:[%s3012 + $0x2c] sm:$0xf]
      %v3025 = vld [vmem:[%s3012 + $0x30] sm:$0xf]
      %v3026 = vld [vmem:[%s3012 + $0x34] sm:$0xf]
      %v3027 = vld [vmem:[%s3012 + $0x38] sm:$0xf]
      %v3028 = vld [vmem:[%s3012 + $0x3c] sm:$0xf]
      %s3029 = scalar_lea.vmem %s6, 5
      %v3030 = vld [vmem:[%s3029] sm:$0x1]
      %v3032 = vperm.slane %v3030, 0
      %v3050 = vunpack.c.l.b16 %v3013
      %v3051 = vunpack.c.l.b16 %v3014
      %v3052 = vunpack.c.l.b16 %v3015
      %v3053 = vunpack.c.l.b16 %v3016
      %v3054 = vunpack.c.l.b16 %v3017
      %v3055 = vunpack.c.l.b16 %v3018
      %v3056 = vunpack.c.l.b16 %v3019
      %v3057 = vunpack.c.l.b16 %v3020
      %v3058 = vunpack.c.l.b16 %v3021
      %v3059 = vunpack.c.l.b16 %v3022
      %v3060 = vunpack.c.l.b16 %v3023
      %v3061 = vunpack.c.l.b16 %v3024
      %v3062 = vunpack.c.l.b16 %v3025
      %v3063 = vunpack.c.l.b16 %v3026
      %v3064 = vunpack.c.l.b16 %v3027
      %v3065 = vunpack.c.l.b16 %v3028
      %v3066 = vpack.c.b16 %v3051, %v3050
      %v3067 = vpack.c.b16 %v3053, %v3052
      %v3068 = vpack.c.b16 %v3055, %v3054
      %v3069 = vpack.c.b16 %v3057, %v3056
      %v3070 = vpack.c.b16 %v3059, %v3058
      %v3071 = vpack.c.b16 %v3061, %v3060
      %v3072 = vpack.c.b16 %v3063, %v3062
      %v3073 = vpack.c.b16 %v3065, %v3064
      %3082 = vmatpush.bf16.msra.mxu0 %v3073
      %3083 = vmatpush.bf16.msra.mxu0 %v3072
      %3084 = vmatpush.bf16.msra.mxu0 %v3071
      %3085 = vmatpush.bf16.msra.mxu0 %v3070
      %3086 = vmatpush.bf16.msra.mxu0 %v3069
      %3087 = vmatpush.bf16.msra.mxu0 %v3068
      %3088 = vmatpush.bf16.msra.mxu0 %v3067
      %3089 = vmatpush.bf16.msra.mxu0 %v3066
      %3090 = vmatmul.bf16.gmra.mxu0 %v2980
      %v3091 = vpop.f32.mrf.mxu0
      %v3092 = vadd.f32 %v3032, %v3091
      %v3093 = vpop.f32.mrf.mxu0
      %v3094 = vadd.f32 %v3032, %v3093
      %3095 = vmatmul.bf16.gmra.mxu0 %v2981
      %v3096 = vpop.f32.mrf.mxu0
      %v3097 = vadd.f32 %v3032, %v3096
      %v3098 = vpop.f32.mrf.mxu0
      %v3099 = vadd.f32 %v3032, %v3098
      %3100 = vmatmul.bf16.gmra.mxu0 %v2982
      %v3101 = vpop.f32.mrf.mxu0
      %v3102 = vadd.f32 %v3032, %v3101
      %v3103 = vpop.f32.mrf.mxu0
      %v3104 = vadd.f32 %v3032, %v3103
      %3105 = vmatmul.bf16.gmra.mxu0 %v2983
      %v3106 = vpop.f32.mrf.mxu0
      %v3107 = vadd.f32 %v3032, %v3106
      %v3108 = vpop.f32.mrf.mxu0
      %v3109 = vadd.f32 %v3032, %v3108
      %3110 = vmatmul.bf16.gmra.mxu0 %v2984
      %v3111 = vpop.f32.mrf.mxu0
      %v3112 = vadd.f32 %v3032, %v3111
      %v3113 = vpop.f32.mrf.mxu0
      %v3114 = vadd.f32 %v3032, %v3113
      %3115 = vmatmul.bf16.gmra.mxu0 %v2985
      %v3116 = vpop.f32.mrf.mxu0
      %v3117 = vadd.f32 %v3032, %v3116
      %v3118 = vpop.f32.mrf.mxu0
      %v3119 = vadd.f32 %v3032, %v3118
      %3120 = vmatmul.bf16.gmra.mxu0 %v2986
      %v3121 = vpop.f32.mrf.mxu0
      %v3122 = vadd.f32 %v3032, %v3121
      %v3123 = vpop.f32.mrf.mxu0
      %v3124 = vadd.f32 %v3032, %v3123
      %3125 = vmatmul.bf16.gmra.mxu0 %v2987
      %v3126 = vpop.f32.mrf.mxu0
      %v3127 = vadd.f32 %v3032, %v3126
      %v3128 = vpop.f32.mrf.mxu0
      %v3129 = vadd.f32 %v3032, %v3128
      %3130 = vmatmul.bf16.gmra.mxu0 %v2988
      %v3131 = vpop.f32.mrf.mxu0
      %v3132 = vadd.f32 %v3032, %v3131
      %v3133 = vpop.f32.mrf.mxu0
      %v3134 = vadd.f32 %v3032, %v3133
      %3135 = vmatmul.bf16.gmra.mxu0 %v2989
      %v3136 = vpop.f32.mrf.mxu0
      %v3137 = vadd.f32 %v3032, %v3136
      %v3138 = vpop.f32.mrf.mxu0
      %v3139 = vadd.f32 %v3032, %v3138
      %3140 = vmatmul.bf16.gmra.mxu0 %v2990
      %v3141 = vpop.f32.mrf.mxu0
      %v3142 = vadd.f32 %v3032, %v3141
      %v3143 = vpop.f32.mrf.mxu0
      %v3144 = vadd.f32 %v3032, %v3143
      %3145 = vmatmul.bf16.gmra.mxu0 %v2991
      %v3146 = vpop.f32.mrf.mxu0
      %v3147 = vadd.f32 %v3032, %v3146
      %v3148 = vpop.f32.mrf.mxu0
      %v3149 = vadd.f32 %v3032, %v3148
      %3150 = vmatmul.bf16.gmra.mxu0 %v2992
      %v3151 = vpop.f32.mrf.mxu0
      %v3152 = vadd.f32 %v3032, %v3151
      %v3153 = vpop.f32.mrf.mxu0
      %v3154 = vadd.f32 %v3032, %v3153
      %3155 = vmatmul.bf16.gmra.mxu0 %v2993
      %v3156 = vpop.f32.mrf.mxu0
      %v3157 = vadd.f32 %v3032, %v3156
      %v3158 = vpop.f32.mrf.mxu0
      %v3159 = vadd.f32 %v3032, %v3158
      %3160 = vmatmul.bf16.gmra.mxu0 %v2994
      %v3161 = vpop.f32.mrf.mxu0
      %v3162 = vadd.f32 %v3032, %v3161
      %v3163 = vpop.f32.mrf.mxu0
      %v3164 = vadd.f32 %v3032, %v3163
      %3165 = vmatmul.bf16.gmra.mxu0 %v2995
      %v3166 = vpop.f32.mrf.mxu0
      %v3167 = vadd.f32 %v3032, %v3166
      %v3168 = vpop.f32.mrf.mxu0
      %v3169 = vadd.f32 %v3032, %v3168
      %3170 = vmatmul.bf16.gmra.mxu0 %v2996
      %v3171 = vpop.f32.mrf.mxu0
      %v3172 = vadd.f32 %v3032, %v3171
      %v3173 = vpop.f32.mrf.mxu0
      %v3174 = vadd.f32 %v3032, %v3173
      %3175 = vmatmul.bf16.gmra.mxu0 %v2997
      %v3176 = vpop.f32.mrf.mxu0
      %v3177 = vadd.f32 %v3032, %v3176
      %v3178 = vpop.f32.mrf.mxu0
      %v3179 = vadd.f32 %v3032, %v3178
      %3180 = vmatmul.bf16.gmra.mxu0 %v2998
      %v3181 = vpop.f32.mrf.mxu0
      %v3182 = vadd.f32 %v3032, %v3181
      %v3183 = vpop.f32.mrf.mxu0
      %v3184 = vadd.f32 %v3032, %v3183
      %3185 = vmatmul.bf16.gmra.mxu0 %v2999
      %v3186 = vpop.f32.mrf.mxu0
      %v3187 = vadd.f32 %v3032, %v3186
      %v3188 = vpop.f32.mrf.mxu0
      %v3189 = vadd.f32 %v3032, %v3188
      %3190 = vmatmul.bf16.gmra.mxu0 %v3000
      %v3191 = vpop.f32.mrf.mxu0
      %v3192 = vadd.f32 %v3032, %v3191
      %v3193 = vpop.f32.mrf.mxu0
      %v3194 = vadd.f32 %v3032, %v3193
      %3195 = vmatmul.bf16.gmra.mxu0 %v3001
      %v3196 = vpop.f32.mrf.mxu0
      %v3197 = vadd.f32 %v3032, %v3196
      %v3198 = vpop.f32.mrf.mxu0
      %v3199 = vadd.f32 %v3032, %v3198
      %3200 = vmatmul.bf16.gmra.mxu0 %v3002
      %v3201 = vpop.f32.mrf.mxu0
      %v3202 = vadd.f32 %v3032, %v3201
      %v3203 = vpop.f32.mrf.mxu0
      %v3204 = vadd.f32 %v3032, %v3203
      %3205 = vmatmul.bf16.gmra.mxu0 %v3003
      %v3206 = vpop.f32.mrf.mxu0
      %v3207 = vadd.f32 %v3032, %v3206
      %v3208 = vpop.f32.mrf.mxu0
      %v3209 = vadd.f32 %v3032, %v3208
      %3210 = vmatmul.bf16.gmra.mxu0 %v3004
      %v3211 = vpop.f32.mrf.mxu0
      %v3212 = vadd.f32 %v3032, %v3211
      %v3213 = vpop.f32.mrf.mxu0
      %v3214 = vadd.f32 %v3032, %v3213
      %3215 = vmatmul.bf16.gmra.mxu0 %v3005
      %v3216 = vpop.f32.mrf.mxu0
      %v3217 = vadd.f32 %v3032, %v3216
      %v3218 = vpop.f32.mrf.mxu0
      %v3219 = vadd.f32 %v3032, %v3218
      %3220 = vmatmul.bf16.gmra.mxu0 %v3006
      %v3221 = vpop.f32.mrf.mxu0
      %v3222 = vadd.f32 %v3032, %v3221
      %v3223 = vpop.f32.mrf.mxu0
      %v3224 = vadd.f32 %v3032, %v3223
      %3225 = vmatmul.bf16.gmra.mxu0 %v3007
      %v3226 = vpop.f32.mrf.mxu0
      %v3227 = vadd.f32 %v3032, %v3226
      %v3228 = vpop.f32.mrf.mxu0
      %v3229 = vadd.f32 %v3032, %v3228
      %3230 = vmatmul.bf16.gmra.mxu0 %v3008
      %v3231 = vpop.f32.mrf.mxu0
      %v3232 = vadd.f32 %v3032, %v3231
      %v3233 = vpop.f32.mrf.mxu0
      %v3234 = vadd.f32 %v3032, %v3233
      %3235 = vmatmul.bf16.gmra.mxu0 %v3009
      %v3236 = vpop.f32.mrf.mxu0
      %v3237 = vadd.f32 %v3032, %v3236
      %v3238 = vpop.f32.mrf.mxu0
      %v3239 = vadd.f32 %v3032, %v3238
      %3240 = vmatmul.bf16.gmra.mxu0 %v3010
      %v3241 = vpop.f32.mrf.mxu0
      %v3242 = vadd.f32 %v3032, %v3241
      %v3243 = vpop.f32.mrf.mxu0
      %v3244 = vadd.f32 %v3032, %v3243
      %3245 = vmatmul.bf16.gmra.mxu0 %v3011
      %v3246 = vpop.f32.mrf.mxu0
      %v3247 = vadd.f32 %v3032, %v3246
      %v3248 = vpop.f32.mrf.mxu0
      %v3249 = vadd.f32 %v3032, %v3248
      %3250 = vdwg.mxu0
      %v3251 = vmax.f32 %v3092, 0.0
      %v3252 = vmax.f32 %v3094, 0.0
      %v3253 = vmax.f32 %v3097, 0.0
      %v3254 = vmax.f32 %v3099, 0.0
      %v3255 = vmax.f32 %v3102, 0.0
      %v3256 = vmax.f32 %v3104, 0.0
      %v3257 = vmax.f32 %v3107, 0.0
      %v3258 = vmax.f32 %v3109, 0.0
      %v3259 = vmax.f32 %v3112, 0.0
      %v3260 = vmax.f32 %v3114, 0.0
      %v3261 = vmax.f32 %v3117, 0.0
      %v3262 = vmax.f32 %v3119, 0.0
      %v3263 = vmax.f32 %v3122, 0.0
      %v3264 = vmax.f32 %v3124, 0.0
      %v3265 = vmax.f32 %v3127, 0.0
      %v3266 = vmax.f32 %v3129, 0.0
      %v3267 = vmax.f32 %v3132, 0.0
      %v3268 = vmax.f32 %v3134, 0.0
      %v3269 = vmax.f32 %v3137, 0.0
      %v3270 = vmax.f32 %v3139, 0.0
      %v3271 = vmax.f32 %v3142, 0.0
      %v3272 = vmax.f32 %v3144, 0.0
      %v3273 = vmax.f32 %v3147, 0.0
      %v3274 = vmax.f32 %v3149, 0.0
      %v3275 = vmax.f32 %v3152, 0.0
      %v3276 = vmax.f32 %v3154, 0.0
      %v3277 = vmax.f32 %v3157, 0.0
      %v3278 = vmax.f32 %v3159, 0.0
      %v3279 = vmax.f32 %v3162, 0.0
      %v3280 = vmax.f32 %v3164, 0.0
      %v3281 = vmax.f32 %v3167, 0.0
      %v3282 = vmax.f32 %v3169, 0.0
      %v3283 = vmax.f32 %v3172, 0.0
      %v3284 = vmax.f32 %v3174, 0.0
      %v3285 = vmax.f32 %v3177, 0.0
      %v3286 = vmax.f32 %v3179, 0.0
      %v3287 = vmax.f32 %v3182, 0.0
      %v3288 = vmax.f32 %v3184, 0.0
      %v3289 = vmax.f32 %v3187, 0.0
      %v3290 = vmax.f32 %v3189, 0.0
      %v3291 = vmax.f32 %v3192, 0.0
      %v3292 = vmax.f32 %v3194, 0.0
      %v3293 = vmax.f32 %v3197, 0.0
      %v3294 = vmax.f32 %v3199, 0.0
      %v3295 = vmax.f32 %v3202, 0.0
      %v3296 = vmax.f32 %v3204, 0.0
      %v3297 = vmax.f32 %v3207, 0.0
      %v3298 = vmax.f32 %v3209, 0.0
      %v3299 = vmax.f32 %v3212, 0.0
      %v3300 = vmax.f32 %v3214, 0.0
      %v3301 = vmax.f32 %v3217, 0.0
      %v3302 = vmax.f32 %v3219, 0.0
      %v3303 = vmax.f32 %v3222, 0.0
      %v3304 = vmax.f32 %v3224, 0.0
      %v3305 = vmax.f32 %v3227, 0.0
      %v3306 = vmax.f32 %v3229, 0.0
      %v3307 = vmax.f32 %v3232, 0.0
      %v3308 = vmax.f32 %v3234, 0.0
      %v3309 = vmax.f32 %v3237, 0.0
      %v3310 = vmax.f32 %v3239, 0.0
      %v3311 = vmax.f32 %v3242, 0.0
      %v3312 = vmax.f32 %v3244, 0.0
      %v3313 = vmax.f32 %v3247, 0.0
      %v3314 = vmax.f32 %v3249, 0.0
      %v3315 = vld [vmem:[%s5] sm:$0x1]
      %v3317 = vperm.slane %v3315, 0
      %v3319 = vmul.f32 %v3251, %v3317
      %v3320 = vmul.f32 %v3252, %v3317
      %v3321 = vmul.f32 %v3253, %v3317
      %v3322 = vmul.f32 %v3254, %v3317
      %v3323 = vmul.f32 %v3255, %v3317
      %v3324 = vmul.f32 %v3256, %v3317
      %v3325 = vmul.f32 %v3257, %v3317
      %v3326 = vmul.f32 %v3258, %v3317
      %v3327 = vmul.f32 %v3259, %v3317
      %v3328 = vmul.f32 %v3260, %v3317
      %v3329 = vmul.f32 %v3261, %v3317
      %v3330 = vmul.f32 %v3262, %v3317
      %v3331 = vmul.f32 %v3263, %v3317
      %v3332 = vmul.f32 %v3264, %v3317
      %v3333 = vmul.f32 %v3265, %v3317
      %v3334 = vmul.f32 %v3266, %v3317
      %v3335 = vmul.f32 %v3267, %v3317
      %v3336 = vmul.f32 %v3268, %v3317
      %v3337 = vmul.f32 %v3269, %v3317
      %v3338 = vmul.f32 %v3270, %v3317
      %v3339 = vmul.f32 %v3271, %v3317
      %v3340 = vmul.f32 %v3272, %v3317
      %v3341 = vmul.f32 %v3273, %v3317
      %v3342 = vmul.f32 %v3274, %v3317
      %v3343 = vmul.f32 %v3275, %v3317
      %v3344 = vmul.f32 %v3276, %v3317
      %v3345 = vmul.f32 %v3277, %v3317
      %v3346 = vmul.f32 %v3278, %v3317
      %v3347 = vmul.f32 %v3279, %v3317
      %v3348 = vmul.f32 %v3280, %v3317
      %v3349 = vmul.f32 %v3281, %v3317
      %v3350 = vmul.f32 %v3282, %v3317
      %v3351 = vmul.f32 %v3283, %v3317
      %v3352 = vmul.f32 %v3284, %v3317
      %v3353 = vmul.f32 %v3285, %v3317
      %v3354 = vmul.f32 %v3286, %v3317
      %v3355 = vmul.f32 %v3287, %v3317
      %v3356 = vmul.f32 %v3288, %v3317
      %v3357 = vmul.f32 %v3289, %v3317
      %v3358 = vmul.f32 %v3290, %v3317
      %v3359 = vmul.f32 %v3291, %v3317
      %v3360 = vmul.f32 %v3292, %v3317
      %v3361 = vmul.f32 %v3293, %v3317
      %v3362 = vmul.f32 %v3294, %v3317
      %v3363 = vmul.f32 %v3295, %v3317
      %v3364 = vmul.f32 %v3296, %v3317
      %v3365 = vmul.f32 %v3297, %v3317
      %v3366 = vmul.f32 %v3298, %v3317
      %v3367 = vmul.f32 %v3299, %v3317
      %v3368 = vmul.f32 %v3300, %v3317
      %v3369 = vmul.f32 %v3301, %v3317
      %v3370 = vmul.f32 %v3302, %v3317
      %v3371 = vmul.f32 %v3303, %v3317
      %v3372 = vmul.f32 %v3304, %v3317
      %v3373 = vmul.f32 %v3305, %v3317
      %v3374 = vmul.f32 %v3306, %v3317
      %v3375 = vmul.f32 %v3307, %v3317
      %v3376 = vmul.f32 %v3308, %v3317
      %v3377 = vmul.f32 %v3309, %v3317
      %v3378 = vmul.f32 %v3310, %v3317
      %v3379 = vmul.f32 %v3311, %v3317
      %v3380 = vmul.f32 %v3312, %v3317
      %v3381 = vmul.f32 %v3313, %v3317
      %v3382 = vmul.f32 %v3314, %v3317
      %3383 = vadd.xlane.f32.xlu0 %v3319
      %v3384 = vpop.xlane.xlu0 %3383
      %3385 = vadd.xlane.f32.xlu0 %v3320
      %v3386 = vpop.xlane.xlu0 %3385
      %3387 = vadd.xlane.f32.xlu0 %v3321
      %v3388 = vpop.xlane.xlu0 %3387
      %3389 = vadd.xlane.f32.xlu0 %v3322
      %v3390 = vpop.xlane.xlu0 %3389
      %3391 = vadd.xlane.f32.xlu0 %v3323
      %v3392 = vpop.xlane.xlu0 %3391
      %3393 = vadd.xlane.f32.xlu0 %v3324
      %v3394 = vpop.xlane.xlu0 %3393
      %3395 = vadd.xlane.f32.xlu0 %v3325
      %v3396 = vpop.xlane.xlu0 %3395
      %3397 = vadd.xlane.f32.xlu0 %v3326
      %v3398 = vpop.xlane.xlu0 %3397
      %3399 = vadd.xlane.f32.xlu0 %v3327
      %v3400 = vpop.xlane.xlu0 %3399
      %3401 = vadd.xlane.f32.xlu0 %v3328
      %v3402 = vpop.xlane.xlu0 %3401
      %3403 = vadd.xlane.f32.xlu0 %v3329
      %v3404 = vpop.xlane.xlu0 %3403
      %3405 = vadd.xlane.f32.xlu0 %v3330
      %v3406 = vpop.xlane.xlu0 %3405
      %3407 = vadd.xlane.f32.xlu0 %v3331
      %v3408 = vpop.xlane.xlu0 %3407
      %3409 = vadd.xlane.f32.xlu0 %v3332
      %v3410 = vpop.xlane.xlu0 %3409
      %3411 = vadd.xlane.f32.xlu0 %v3333
      %v3412 = vpop.xlane.xlu0 %3411
      %3413 = vadd.xlane.f32.xlu0 %v3334
      %v3414 = vpop.xlane.xlu0 %3413
      %3415 = vadd.xlane.f32.xlu0 %v3335
      %v3416 = vpop.xlane.xlu0 %3415
      %3417 = vadd.xlane.f32.xlu0 %v3336
      %v3418 = vpop.xlane.xlu0 %3417
      %3419 = vadd.xlane.f32.xlu0 %v3337
      %v3420 = vpop.xlane.xlu0 %3419
      %3421 = vadd.xlane.f32.xlu0 %v3338
      %v3422 = vpop.xlane.xlu0 %3421
      %3423 = vadd.xlane.f32.xlu0 %v3339
      %v3424 = vpop.xlane.xlu0 %3423
      %3425 = vadd.xlane.f32.xlu0 %v3340
      %v3426 = vpop.xlane.xlu0 %3425
      %3427 = vadd.xlane.f32.xlu0 %v3341
      %v3428 = vpop.xlane.xlu0 %3427
      %3429 = vadd.xlane.f32.xlu0 %v3342
      %v3430 = vpop.xlane.xlu0 %3429
      %3431 = vadd.xlane.f32.xlu0 %v3343
      %v3432 = vpop.xlane.xlu0 %3431
      %3433 = vadd.xlane.f32.xlu0 %v3344
      %v3434 = vpop.xlane.xlu0 %3433
      %3435 = vadd.xlane.f32.xlu0 %v3345
      %v3436 = vpop.xlane.xlu0 %3435
      %3437 = vadd.xlane.f32.xlu0 %v3346
      %v3438 = vpop.xlane.xlu0 %3437
      %3439 = vadd.xlane.f32.xlu0 %v3347
      %v3440 = vpop.xlane.xlu0 %3439
      %3441 = vadd.xlane.f32.xlu0 %v3348
      %v3442 = vpop.xlane.xlu0 %3441
      %3443 = vadd.xlane.f32.xlu0 %v3349
      %v3444 = vpop.xlane.xlu0 %3443
      %3445 = vadd.xlane.f32.xlu0 %v3350
      %v3446 = vpop.xlane.xlu0 %3445
      %3447 = vadd.xlane.f32.xlu0 %v3351
      %v3448 = vpop.xlane.xlu0 %3447
      %3449 = vadd.xlane.f32.xlu0 %v3352
      %v3450 = vpop.xlane.xlu0 %3449
      %3451 = vadd.xlane.f32.xlu0 %v3353
      %v3452 = vpop.xlane.xlu0 %3451
      %3453 = vadd.xlane.f32.xlu0 %v3354
      %v3454 = vpop.xlane.xlu0 %3453
      %3455 = vadd.xlane.f32.xlu0 %v3355
      %v3456 = vpop.xlane.xlu0 %3455
      %3457 = vadd.xlane.f32.xlu0 %v3356
      %v3458 = vpop.xlane.xlu0 %3457
      %3459 = vadd.xlane.f32.xlu0 %v3357
      %v3460 = vpop.xlane.xlu0 %3459
      %3461 = vadd.xlane.f32.xlu0 %v3358
      %v3462 = vpop.xlane.xlu0 %3461
      %3463 = vadd.xlane.f32.xlu0 %v3359
      %v3464 = vpop.xlane.xlu0 %3463
      %3465 = vadd.xlane.f32.xlu0 %v3360
      %v3466 = vpop.xlane.xlu0 %3465
      %3467 = vadd.xlane.f32.xlu0 %v3361
      %v3468 = vpop.xlane.xlu0 %3467
      %3469 = vadd.xlane.f32.xlu0 %v3362
      %v3470 = vpop.xlane.xlu0 %3469
      %3471 = vadd.xlane.f32.xlu0 %v3363
      %v3472 = vpop.xlane.xlu0 %3471
      %3473 = vadd.xlane.f32.xlu0 %v3364
      %v3474 = vpop.xlane.xlu0 %3473
      %3475 = vadd.xlane.f32.xlu0 %v3365
      %v3476 = vpop.xlane.xlu0 %3475
      %3477 = vadd.xlane.f32.xlu0 %v3366
      %v3478 = vpop.xlane.xlu0 %3477
      %3479 = vadd.xlane.f32.xlu0 %v3367
      %v3480 = vpop.xlane.xlu0 %3479
      %3481 = vadd.xlane.f32.xlu0 %v3368
      %v3482 = vpop.xlane.xlu0 %3481
      %3483 = vadd.xlane.f32.xlu0 %v3369
      %v3484 = vpop.xlane.xlu0 %3483
      %3485 = vadd.xlane.f32.xlu0 %v3370
      %v3486 = vpop.xlane.xlu0 %3485
      %3487 = vadd.xlane.f32.xlu0 %v3371
      %v3488 = vpop.xlane.xlu0 %3487
      %3489 = vadd.xlane.f32.xlu0 %v3372
      %v3490 = vpop.xlane.xlu0 %3489
      %3491 = vadd.xlane.f32.xlu0 %v3373
      %v3492 = vpop.xlane.xlu0 %3491
      %3493 = vadd.xlane.f32.xlu0 %v3374
      %v3494 = vpop.xlane.xlu0 %3493
      %3495 = vadd.xlane.f32.xlu0 %v3375
      %v3496 = vpop.xlane.xlu0 %3495
      %3497 = vadd.xlane.f32.xlu0 %v3376
      %v3498 = vpop.xlane.xlu0 %3497
      %3499 = vadd.xlane.f32.xlu0 %v3377
      %v3500 = vpop.xlane.xlu0 %3499
      %3501 = vadd.xlane.f32.xlu0 %v3378
      %v3502 = vpop.xlane.xlu0 %3501
      %3503 = vadd.xlane.f32.xlu0 %v3379
      %v3504 = vpop.xlane.xlu0 %3503
      %3505 = vadd.xlane.f32.xlu0 %v3380
      %v3506 = vpop.xlane.xlu0 %3505
      %3507 = vadd.xlane.f32.xlu0 %v3381
      %v3508 = vpop.xlane.xlu0 %3507
      %3509 = vadd.xlane.f32.xlu0 %v3382
      %v3510 = vpop.xlane.xlu0 %3509
      %v3511 = vld [vmem:[#allocation2] sm:$0x1]
      %v3513 = vperm.slane %v3511, 0
      %v3515 = vadd.f32 %v3384, %v3513
      %v3516 = vadd.f32 %v3386, %v3513
      %v3517 = vadd.f32 %v3388, %v3513
      %v3518 = vadd.f32 %v3390, %v3513
      %v3519 = vadd.f32 %v3392, %v3513
      %v3520 = vadd.f32 %v3394, %v3513
      %v3521 = vadd.f32 %v3396, %v3513
      %v3522 = vadd.f32 %v3398, %v3513
      %v3523 = vadd.f32 %v3400, %v3513
      %v3524 = vadd.f32 %v3402, %v3513
      %v3525 = vadd.f32 %v3404, %v3513
      %v3526 = vadd.f32 %v3406, %v3513
      %v3527 = vadd.f32 %v3408, %v3513
      %v3528 = vadd.f32 %v3410, %v3513
      %v3529 = vadd.f32 %v3412, %v3513
      %v3530 = vadd.f32 %v3414, %v3513
      %v3531 = vadd.f32 %v3416, %v3513
      %v3532 = vadd.f32 %v3418, %v3513
      %v3533 = vadd.f32 %v3420, %v3513
      %v3534 = vadd.f32 %v3422, %v3513
      %v3535 = vadd.f32 %v3424, %v3513
      %v3536 = vadd.f32 %v3426, %v3513
      %v3537 = vadd.f32 %v3428, %v3513
      %v3538 = vadd.f32 %v3430, %v3513
      %v3539 = vadd.f32 %v3432, %v3513
      %v3540 = vadd.f32 %v3434, %v3513
      %v3541 = vadd.f32 %v3436, %v3513
      %v3542 = vadd.f32 %v3438, %v3513
      %v3543 = vadd.f32 %v3440, %v3513
      %v3544 = vadd.f32 %v3442, %v3513
      %v3545 = vadd.f32 %v3444, %v3513
      %v3546 = vadd.f32 %v3446, %v3513
      %v3547 = vadd.f32 %v3448, %v3513
      %v3548 = vadd.f32 %v3450, %v3513
      %v3549 = vadd.f32 %v3452, %v3513
      %v3550 = vadd.f32 %v3454, %v3513
      %v3551 = vadd.f32 %v3456, %v3513
      %v3552 = vadd.f32 %v3458, %v3513
      %v3553 = vadd.f32 %v3460, %v3513
      %v3554 = vadd.f32 %v3462, %v3513
      %v3555 = vadd.f32 %v3464, %v3513
      %v3556 = vadd.f32 %v3466, %v3513
      %v3557 = vadd.f32 %v3468, %v3513
      %v3558 = vadd.f32 %v3470, %v3513
      %v3559 = vadd.f32 %v3472, %v3513
      %v3560 = vadd.f32 %v3474, %v3513
      %v3561 = vadd.f32 %v3476, %v3513
      %v3562 = vadd.f32 %v3478, %v3513
      %v3563 = vadd.f32 %v3480, %v3513
      %v3564 = vadd.f32 %v3482, %v3513
      %v3565 = vadd.f32 %v3484, %v3513
      %v3566 = vadd.f32 %v3486, %v3513
      %v3567 = vadd.f32 %v3488, %v3513
      %v3568 = vadd.f32 %v3490, %v3513
      %v3569 = vadd.f32 %v3492, %v3513
      %v3570 = vadd.f32 %v3494, %v3513
      %v3571 = vadd.f32 %v3496, %v3513
      %v3572 = vadd.f32 %v3498, %v3513
      %v3573 = vadd.f32 %v3500, %v3513
      %v3574 = vadd.f32 %v3502, %v3513
      %v3575 = vadd.f32 %v3504, %v3513
      %v3576 = vadd.f32 %v3506, %v3513
      %v3577 = vadd.f32 %v3508, %v3513
      %v3578 = vadd.f32 %v3510, %v3513
      %vm3579 = vcmask 7168
      %3580 = vst.msk [vmem:[%s336] sm:$0xff] %vm3579, %v3515
      %3581 = vst.msk [vmem:[%s336 + $0x8] sm:$0xff] %vm3579, %v3516
      %3582 = vst.msk [vmem:[%s336 + $0x10] sm:$0xff] %vm3579, %v3517
      %3583 = vst.msk [vmem:[%s336 + $0x18] sm:$0xff] %vm3579, %v3518
      %3584 = vst.msk [vmem:[%s336 + $0x20] sm:$0xff] %vm3579, %v3519
      %3585 = vst.msk [vmem:[%s336 + $0x28] sm:$0xff] %vm3579, %v3520
      %3586 = vst.msk [vmem:[%s336 + $0x30] sm:$0xff] %vm3579, %v3521
      %3587 = vst.msk [vmem:[%s336 + $0x38] sm:$0xff] %vm3579, %v3522
      %3588 = vst.msk [vmem:[%s336 + $0x40] sm:$0xff] %vm3579, %v3523
      %3589 = vst.msk [vmem:[%s336 + $0x48] sm:$0xff] %vm3579, %v3524
      %3590 = vst.msk [vmem:[%s336 + $0x50] sm:$0xff] %vm3579, %v3525
      %3591 = vst.msk [vmem:[%s336 + $0x58] sm:$0xff] %vm3579, %v3526
      %3592 = vst.msk [vmem:[%s336 + $0x60] sm:$0xff] %vm3579, %v3527
      %3593 = vst.msk [vmem:[%s336 + $0x68] sm:$0xff] %vm3579, %v3528
      %3594 = vst.msk [vmem:[%s336 + $0x70] sm:$0xff] %vm3579, %v3529
      %3595 = vst.msk [vmem:[%s336 + $0x78] sm:$0xff] %vm3579, %v3530
      %3596 = vst.msk [vmem:[%s336 + $0x80] sm:$0xff] %vm3579, %v3531
      %3597 = vst.msk [vmem:[%s336 + $0x88] sm:$0xff] %vm3579, %v3532
      %3598 = vst.msk [vmem:[%s336 + $0x90] sm:$0xff] %vm3579, %v3533
      %3599 = vst.msk [vmem:[%s336 + $0x98] sm:$0xff] %vm3579, %v3534
      %3600 = vst.msk [vmem:[%s336 + $0xa0] sm:$0xff] %vm3579, %v3535
      %3601 = vst.msk [vmem:[%s336 + $0xa8] sm:$0xff] %vm3579, %v3536
      %3602 = vst.msk [vmem:[%s336 + $0xb0] sm:$0xff] %vm3579, %v3537
      %3603 = vst.msk [vmem:[%s336 + $0xb8] sm:$0xff] %vm3579, %v3538
      %3604 = vst.msk [vmem:[%s336 + $0xc0] sm:$0xff] %vm3579, %v3539
      %3605 = vst.msk [vmem:[%s336 + $0xc8] sm:$0xff] %vm3579, %v3540
      %3606 = vst.msk [vmem:[%s336 + $0xd0] sm:$0xff] %vm3579, %v3541
      %3607 = vst.msk [vmem:[%s336 + $0xd8] sm:$0xff] %vm3579, %v3542
      %3608 = vst.msk [vmem:[%s336 + $0xe0] sm:$0xff] %vm3579, %v3543
      %3609 = vst.msk [vmem:[%s336 + $0xe8] sm:$0xff] %vm3579, %v3544
      %3610 = vst.msk [vmem:[%s336 + $0xf0] sm:$0xff] %vm3579, %v3545
      %3611 = vst.msk [vmem:[%s336 + $0xf8] sm:$0xff] %vm3579, %v3546
      %3612 = vst.msk [vmem:[%s336 + $0x100] sm:$0xff] %vm3579, %v3547
      %3613 = vst.msk [vmem:[%s336 + $0x108] sm:$0xff] %vm3579, %v3548
      %3614 = vst.msk [vmem:[%s336 + $0x110] sm:$0xff] %vm3579, %v3549
      %3615 = vst.msk [vmem:[%s336 + $0x118] sm:$0xff] %vm3579, %v3550
      %3616 = vst.msk [vmem:[%s336 + $0x120] sm:$0xff] %vm3579, %v3551
      %3617 = vst.msk [vmem:[%s336 + $0x128] sm:$0xff] %vm3579, %v3552
      %3618 = vst.msk [vmem:[%s336 + $0x130] sm:$0xff] %vm3579, %v3553
      %3619 = vst.msk [vmem:[%s336 + $0x138] sm:$0xff] %vm3579, %v3554
      %3620 = vst.msk [vmem:[%s336 + $0x140] sm:$0xff] %vm3579, %v3555
      %3621 = vst.msk [vmem:[%s336 + $0x148] sm:$0xff] %vm3579, %v3556
      %3622 = vst.msk [vmem:[%s336 + $0x150] sm:$0xff] %vm3579, %v3557
      %3623 = vst.msk [vmem:[%s336 + $0x158] sm:$0xff] %vm3579, %v3558
      %3624 = vst.msk [vmem:[%s336 + $0x160] sm:$0xff] %vm3579, %v3559
      %3625 = vst.msk [vmem:[%s336 + $0x168] sm:$0xff] %vm3579, %v3560
      %3626 = vst.msk [vmem:[%s336 + $0x170] sm:$0xff] %vm3579, %v3561
      %3627 = vst.msk [vmem:[%s336 + $0x178] sm:$0xff] %vm3579, %v3562
      %3628 = vst.msk [vmem:[%s336 + $0x180] sm:$0xff] %vm3579, %v3563
      %3629 = vst.msk [vmem:[%s336 + $0x188] sm:$0xff] %vm3579, %v3564
      %3630 = vst.msk [vmem:[%s336 + $0x190] sm:$0xff] %vm3579, %v3565
      %3631 = vst.msk [vmem:[%s336 + $0x198] sm:$0xff] %vm3579, %v3566
      %3632 = vst.msk [vmem:[%s336 + $0x1a0] sm:$0xff] %vm3579, %v3567
      %3633 = vst.msk [vmem:[%s336 + $0x1a8] sm:$0xff] %vm3579, %v3568
      %3634 = vst.msk [vmem:[%s336 + $0x1b0] sm:$0xff] %vm3579, %v3569
      %3635 = vst.msk [vmem:[%s336 + $0x1b8] sm:$0xff] %vm3579, %v3570
      %3636 = vst.msk [vmem:[%s336 + $0x1c0] sm:$0xff] %vm3579, %v3571
      %3637 = vst.msk [vmem:[%s336 + $0x1c8] sm:$0xff] %vm3579, %v3572
      %3638 = vst.msk [vmem:[%s336 + $0x1d0] sm:$0xff] %vm3579, %v3573
      %3639 = vst.msk [vmem:[%s336 + $0x1d8] sm:$0xff] %vm3579, %v3574
      %3640 = vst.msk [vmem:[%s336 + $0x1e0] sm:$0xff] %vm3579, %v3575
      %3641 = vst.msk [vmem:[%s336 + $0x1e8] sm:$0xff] %vm3579, %v3576
      %3642 = vst.msk [vmem:[%s336 + $0x1f0] sm:$0xff] %vm3579, %v3577
      %3643 = vst.msk [vmem:[%s336 + $0x1f8] sm:$0xff] %vm3579, %v3578
      %s3644 = smul.u32 64, %s22
      %p3645 = scmp.lt.s32.totalorder %s3644, 127
      %s3646 = scalar_select %p3645, %s3644, 127
      %s3647 = smul.addr %s3646, 8
      %s3648 = scalar_lea.vmem %s9, %s3647
      // Predicated region
      $region57: #{mlp_forward.1} parent=55 // pred_check
        %p3649 = pneg %p234
      $region58: #{mlp_forward.1} parent=55 // pred_check_branch
        %3651 = sbr.rel (%p3649) target = $region60
      $region59: #{mlp_forward.1} parent=55 // pred_region
        %s3652 = smul.u32 64, %s22
      $region60: #{mlp_forward.1} parent=55 // pred_fallthru
        _
    $region56: #{mlp_forward.1} parent=5 // pred_fallthru
      _
    %p3653 = scmp.le.s32.totalorder 2, %s17
    // Predicated region
    $region61: #{mlp_forward.1} parent=5 // pred_check
      %p3654 = pneg %p3653
    $region62: #{mlp_forward.1} parent=5 // pred_check_branch
      %3656 = sbr.rel (%p3654) target = $region64
    $region63: #{mlp_forward.1} parent=5 // pred_region
      %s3657 = ssub.s32 %s17, 2
      // Predicated region
      $region65: #{mlp_forward.1} parent=63 // pred_check
        %p3658 = pneg %p240
      $region66: #{mlp_forward.1} parent=63 // pred_check_branch
        %3660 = sbr.rel (%p3658) target = $region68
      $region67: #{mlp_forward.1} parent=63 // pred_region
        %s3661 = smul.u32 64, %s23
        %p3662 = scmp.lt.s32.totalorder %s3661, 127
        %s3663 = scalar_select %p3662, %s3661, 127
        %s3664 = smul.addr %s3663, 8
        %s3665 = scalar_lea.vmem %s9, %s3664
      $region68: #{mlp_forward.1} parent=63 // pred_fallthru
        _
    $region64: #{mlp_forward.1} parent=5 // pred_fallthru
      _
  $region6: #{mlp_forward.1} parent=0 // loop_footer
    %s21 = sadd.s32 1, %s17
  $region7: #{mlp_forward.1} parent=0 // loop_footer_branch
    %16 = sbr.rel target = $region3
  $region8: #{mlp_forward.1} parent=0 // loop_exit
    _

</llo_original>
